<compile_context>
chip_gen: v5e
topology: v5e:2x2
jax: 0.10.0
libtpu: 0.0.40
codegen_flags: <defaults>
</compile_context>

<pallas_src>
import jax
import jax.numpy as jnp
from jax.experimental import pallas as pl
from jax.experimental.pallas import tpu as pltpu

EPS = 1e-5  # nn.InstanceNorm2d default


def _res_block_kernel(x_ref, w_ref, p_ref, o_ref, pad_ref, col_ref):
    # x_ref : (1, H, W, C) f32         input block
    # w_ref : (2, 9*C, C)  mxu dtype   packed flattened conv weights
    # p_ref : (4, C)       f32         packed [gamma1, beta1, gamma2, beta2]
    # o_ref : (1, H, W, C) f32         output block
    # pad_ref: (H+2, W+2, C) f32       persistent reflect-pad scratch
    # col_ref: (H*W, 9*C)  mxu dtype   persistent im2col scratch
    H, W, C = x_ref.shape[1], x_ref.shape[2], x_ref.shape[3]
    HW = H * W

    def reflect_pad_into_scratch(t):
        # t: (H, W, C) f32 -> fills the whole pad_ref buffer.
        pad_ref[1:H + 1, 1:W + 1, :] = t
        # top / bottom halo rows (reflect: padded row 0 = row 1, row H+1 = row H-2)
        pad_ref[0:1, 1:W + 1, :] = t[1:2]
        pad_ref[H + 1:H + 2, 1:W + 1, :] = t[H - 2:H - 1]
        # left / right halo columns, taken from the already-padded buffer so the
        # corners come out right (padded col 0 = padded col 2, col W+1 = col W-1)
        left = pad_ref[:, 2:3, :]
        right = pad_ref[:, W - 1:W, :]
        pad_ref[:, 0:1, :] = left
        pad_ref[:, W + 1:W + 2, :] = right

    def conv3x3(t, w_idx):
        # t: (H, W, C) f32 -> (H*W, C) f32
        reflect_pad_into_scratch(t)
        # im2col: 9 taps laid out along the K axis; one big K=9*C matmul.
        for dy in range(3):
            for dx in range(3):
                tap = pad_ref[dy:dy + H, dx:dx + W, :]            # (H, W, C)
                k = (dy * 3 + dx) * C
                col_ref[:, k:k + C] = tap.reshape(HW, C).astype(col_ref.dtype)
        return jnp.dot(col_ref[...], w_ref[w_idx],
                       preferred_element_type=jnp.float32)        # (H*W, C) f32

    def instance_norm(t, gamma, beta):
        # folded: y = t*scale + shift (2 VPU ops per element); stats in f32.
        mean = jnp.mean(t, axis=0, keepdims=True)                 # (1, C)
        var = jnp.maximum(
            jnp.mean(t * t, axis=0, keepdims=True) - mean * mean, 0.0)
        scale = gamma * jax.lax.rsqrt(var + EPS)                  # (1, C)
        shift = beta - mean * scale                               # (1, C)
        return t * scale + shift

    # ConvBlock 1: conv -> IN -> ReLU   (conv bias dropped: cancelled by IN)
    y = conv3x3(x_ref[0], 0)
    y = instance_norm(y, p_ref[0:1, :], p_ref[1:2, :])
    y = jnp.maximum(y, 0.0).reshape(H, W, C)

    # ConvBlock 2: conv -> IN (no ReLU)
    z = conv3x3(y, 1)
    z = instance_norm(z, p_ref[2:3, :], p_ref[3:4, :])
    z = z.reshape(H, W, C)

    # residual add + ReLU; re-read x from the ref (short live range).
    o_ref[0] = jnp.maximum(x_ref[0] + z, 0.0)


def res_block_pallas(x_nchw, params, *, mxu_dtype=jnp.bfloat16):
    """x_nchw: (N, C, H, W) float32; params: dict of ResBlock parameters.

    Conv biases params['b1']/['b2'] are accepted but NOT used: a per-channel
    constant added before InstanceNorm is exactly cancelled by the mean
    subtraction, so dropping them preserves the forward semantics.
    """
    x = jnp.transpose(x_nchw, (0, 2, 3, 1)).astype(jnp.float32)   # NHWC
    N, H, W, C = x.shape

    def flatten_w(w_oihw):
        # (Cout, Cin, 3, 3) -> (3, 3, Cin, Cout) -> (9*Cin, Cout)
        # row index = (dy*3 + dx)*Cin + cin, matching the im2col layout.
        return jnp.transpose(w_oihw, (2, 3, 1, 0)).reshape(9 * C, C)

    w_packed = jnp.stack(
        [flatten_w(params["w1"]), flatten_w(params["w2"])]).astype(mxu_dtype)
    in_params = jnp.stack(
        [params["g1"], params["be1"], params["g2"], params["be2"]]
    ).astype(jnp.float32)                                          # (4, C)

    x_spec = pl.BlockSpec((1, H, W, C), lambda n: (n, 0, 0, 0))
    w_spec = pl.BlockSpec((2, 9 * C, C), lambda n: (0, 0, 0))
    p_spec = pl.BlockSpec((4, C), lambda n: (0, 0))

    # Explicit VMEM budget: double-buffered in/out blocks + params + scratch.
    mxu_bytes = jnp.dtype(mxu_dtype).itemsize
    x_block_b = H * W * C * 4
    est = (4 * x_block_b                        # 2x in block + 2x out block
           + 2 * 2 * 9 * C * C * mxu_bytes      # 2x packed weights
           + 2 * 4 * C * 4                      # 2x packed IN params
           + (H + 2) * (W + 2) * C * 4          # pad scratch
           + H * W * 9 * C * mxu_bytes)         # im2col scratch
    vmem_limit = int(min(100 * 2**20, max(32 * 2**20, 3 * est)))

    out = pl.pallas_call(
        _res_block_kernel,
        out_shape=jax.ShapeDtypeStruct((N, H, W, C), jnp.float32),
        grid=(N,),
        in_specs=[x_spec, w_spec, p_spec],
        out_specs=x_spec,
        scratch_shapes=[
            pltpu.VMEM((H + 2, W + 2, C), jnp.float32),   # reflect-pad buffer
            pltpu.VMEM((H * W, 9 * C), mxu_dtype),        # im2col buffer
        ],
        compiler_params=pltpu.CompilerParams(
            dimension_semantics=("parallel",),
            vmem_limit_bytes=vmem_limit),
    )(x, w_packed, in_params)

    return jnp.transpose(out, (0, 3, 1, 2))   # back to NCHW


# ---------------- pure-JAX reference for verification ----------------
def _ref_conv_block(x_nhwc, w_oihw, b, gamma, beta, use_relu):
    # reflect pad spatial dims, then VALID 3x3 conv (keeps the conv bias,
    # exactly like PyTorch; it cancels inside InstanceNorm).
    xp = jnp.pad(x_nhwc, ((0, 0), (1, 1), (1, 1), (0, 0)), mode="reflect")
    w_hwio = jnp.transpose(w_oihw, (2, 3, 1, 0))
    y = jax.lax.conv_general_dilated(
        xp, w_hwio, window_strides=(1, 1), padding="VALID",
        dimension_numbers=("NHWC", "HWIO", "NHWC"))
    y = y + b.reshape(1, 1, 1, -1)
    mean = jnp.mean(y, axis=(1, 2), keepdims=True)
    var = jnp.mean((y - mean) ** 2, axis=(1, 2), keepdims=True)
    y = (y - mean) * jax.lax.rsqrt(var + EPS)
    y = y * gamma.reshape(1, 1, 1, -1) + beta.reshape(1, 1, 1, -1)
    if use_relu:
        y = jnp.maximum(y, 0.0)
    return y


def res_block_ref(x_nchw, params):
    x = jnp.transpose(x_nchw, (0, 2, 3, 1)).astype(jnp.float32)
    y = _ref_conv_block(x, params["w1"], params["b1"], params["g1"], params["be1"], True)
    z = _ref_conv_block(y, params["w2"], params["b2"], params["g2"], params["be2"], False)
    out = jnp.maximum(x + z, 0.0)
    return jnp.transpose(out, (0, 3, 1, 2))


if __name__ == "__main__":
    N, C, H, W = 2, 4, 16, 16
    key = jax.random.PRNGKey(0)
    keys = jax.random.split(key, 9)

    x = jax.random.normal(keys[0], (N, C, H, W), jnp.float32)
    params = {
        "w1": 0.2 * jax.random.normal(keys[1], (C, C, 3, 3), jnp.float32),
        "b1": 0.1 * jax.random.normal(keys[2], (C,), jnp.float32),
        "g1": 1.0 + 0.1 * jax.random.normal(keys[3], (C,), jnp.float32),
        "be1": 0.1 * jax.random.normal(keys[4], (C,), jnp.float32),
        "w2": 0.2 * jax.random.normal(keys[5], (C, C, 3, 3), jnp.float32),
        "b2": 0.1 * jax.random.normal(keys[6], (C,), jnp.float32),
        "g2": 1.0 + 0.1 * jax.random.normal(keys[7], (C,), jnp.float32),
        "be2": 0.1 * jax.random.normal(keys[8], (C,), jnp.float32),
    }

    ref = jax.block_until_ready(res_block_ref(x, params))

    # f32-MXU variant: tight correctness check of the kernel structure.
    out_f32 = jax.block_until_ready(
        res_block_pallas(x, params, mxu_dtype=jnp.float32))
    assert out_f32.shape == (N, C, H, W) and out_f32.dtype == jnp.float32
    assert jnp.allclose(out_f32, ref, atol=2e-4, rtol=2e-4), (
        float(jnp.max(jnp.abs(out_f32 - ref))))

    # Default (bf16 MXU operands): looser tolerance, as expected for bf16 inputs
    # with f32 accumulation.
    out_bf16 = jax.block_until_ready(res_block_pallas(x, params))
    assert out_bf16.shape == (N, C, H, W) and out_bf16.dtype == jnp.float32
    err = jnp.abs(out_bf16 - ref)
    assert float(jnp.max(err)) < 1e-1 and float(jnp.mean(err)) < 2e-2, (
        float(jnp.max(err)), float(jnp.mean(err)))

    print("KERNEL_OK")
</pallas_src>

<mosaic_0001>
module attributes {stable_mosaic.version = 11 : i64} {
  func.func @_res_block_kernel(%arg0: i32, %arg1: memref<1x16x16x4xf32, #tpu.memory_space<vmem>>, %arg2: memref<2x36x4xf32, #tpu.memory_space<vmem>>, %arg3: memref<4x4xf32, #tpu.memory_space<vmem>>, %arg4: memref<1x16x16x4xf32, #tpu.memory_space<vmem>>, %arg5: memref<18x18x4xf32, #tpu.memory_space<vmem>>, %arg6: memref<256x36xf32, #tpu.memory_space<vmem>>) attributes {dimension_semantics = [#tpu.dimension_semantics<parallel>], iteration_bounds = array<i64: 2>, scalar_prefetch = 0 : i64, scratch_operands = 2 : i64, tpu.core_type = #tpu.core_type<tc>, window_params = [{transform_indices = @transform_0, window_bounds = array<i64: 1, 16, 16, 4>}, {pipeline_mode = #tpu.pipeline_mode<synchronous>, transform_indices = @transform_1, window_bounds = array<i64: 2, 36, 4>}, {pipeline_mode = #tpu.pipeline_mode<synchronous>, transform_indices = @transform_2, window_bounds = array<i64: 4, 4>}, {transform_indices = @transform_3, window_bounds = array<i64: 1, 16, 16, 4>}]} {
    %c0 = arith.constant 0 : index
    %c0_0 = arith.constant 0 : index
    %c0_1 = arith.constant 0 : index
    %c0_2 = arith.constant 0 : index
    %0 = vector.load %arg1[%c0, %c0_0, %c0_1, %c0_2] : memref<1x16x16x4xf32, #tpu.memory_space<vmem>>, vector<1x16x16x4xf32>
    %1 = vector.shape_cast %0 : vector<1x16x16x4xf32> to vector<16x16x4xf32>
    %c1 = arith.constant 1 : index
    %c1_3 = arith.constant 1 : index
    %c0_4 = arith.constant 0 : index
    %2 = vector.load %arg5[%c1, %c1_3, %c0_4] : memref<18x18x4xf32, #tpu.memory_space<vmem>>, vector<16x16x4xf32>
    tpu.vector_store %arg5[%c1, %c1_3, %c0_4], %1 {strides = array<i32>} : memref<18x18x4xf32, #tpu.memory_space<vmem>>, vector<16x16x4xf32>,
    %3 = vector.extract_strided_slice %1 {offsets = [1, 0, 0], sizes = [1, 16, 4], strides = [1, 1, 1]} : vector<16x16x4xf32> to vector<1x16x4xf32>
    %c0_5 = arith.constant 0 : index
    %c1_6 = arith.constant 1 : index
    %c0_7 = arith.constant 0 : index
    %4 = vector.load %arg5[%c0_5, %c1_6, %c0_7] : memref<18x18x4xf32, #tpu.memory_space<vmem>>, vector<1x16x4xf32>
    tpu.vector_store %arg5[%c0_5, %c1_6, %c0_7], %3 {strides = array<i32>} : memref<18x18x4xf32, #tpu.memory_space<vmem>>, vector<1x16x4xf32>,
    %5 = vector.extract_strided_slice %1 {offsets = [14, 0, 0], sizes = [1, 16, 4], strides = [1, 1, 1]} : vector<16x16x4xf32> to vector<1x16x4xf32>
    %c17 = arith.constant 17 : index
    %c1_8 = arith.constant 1 : index
    %c0_9 = arith.constant 0 : index
    %6 = vector.load %arg5[%c17, %c1_8, %c0_9] : memref<18x18x4xf32, #tpu.memory_space<vmem>>, vector<1x16x4xf32>
    tpu.vector_store %arg5[%c17, %c1_8, %c0_9], %5 {strides = array<i32>} : memref<18x18x4xf32, #tpu.memory_space<vmem>>, vector<1x16x4xf32>,
    %c0_10 = arith.constant 0 : index
    %c2 = arith.constant 2 : index
    %c0_11 = arith.constant 0 : index
    %7 = vector.load %arg5[%c0_10, %c2, %c0_11] : memref<18x18x4xf32, #tpu.memory_space<vmem>>, vector<18x1x4xf32>
    %c0_12 = arith.constant 0 : index
    %c15 = arith.constant 15 : index
    %c0_13 = arith.constant 0 : index
    %8 = vector.load %arg5[%c0_12, %c15, %c0_13] : memref<18x18x4xf32, #tpu.memory_space<vmem>>, vector<18x1x4xf32>
    %c0_14 = arith.constant 0 : index
    %c0_15 = arith.constant 0 : index
    %c0_16 = arith.constant 0 : index
    %9 = vector.load %arg5[%c0_14, %c0_15, %c0_16] : memref<18x18x4xf32, #tpu.memory_space<vmem>>, vector<18x1x4xf32>
    tpu.vector_store %arg5[%c0_14, %c0_15, %c0_16], %7 {strides = array<i32>} : memref<18x18x4xf32, #tpu.memory_space<vmem>>, vector<18x1x4xf32>,
    %c0_17 = arith.constant 0 : index
    %c17_18 = arith.constant 17 : index
    %c0_19 = arith.constant 0 : index
    %10 = vector.load %arg5[%c0_17, %c17_18, %c0_19] : memref<18x18x4xf32, #tpu.memory_space<vmem>>, vector<18x1x4xf32>
    tpu.vector_store %arg5[%c0_17, %c17_18, %c0_19], %8 {strides = array<i32>} : memref<18x18x4xf32, #tpu.memory_space<vmem>>, vector<18x1x4xf32>,
    %c0_20 = arith.constant 0 : index
    %c0_21 = arith.constant 0 : index
    %c0_22 = arith.constant 0 : index
    %11 = vector.load %arg5[%c0_20, %c0_21, %c0_22] : memref<18x18x4xf32, #tpu.memory_space<vmem>>, vector<16x16x4xf32>
    %12 = vector.shape_cast %11 : vector<16x16x4xf32> to vector<256x4xf32>
    %c0_23 = arith.constant 0 : index
    %c0_24 = arith.constant 0 : index
    %13 = vector.load %arg6[%c0_23, %c0_24] : memref<256x36xf32, #tpu.memory_space<vmem>>, vector<256x4xf32>
    tpu.vector_store %arg6[%c0_23, %c0_24], %12 {strides = array<i32>} : memref<256x36xf32, #tpu.memory_space<vmem>>, vector<256x4xf32>,
    %c0_25 = arith.constant 0 : index
    %c1_26 = arith.constant 1 : index
    %c0_27 = arith.constant 0 : index
    %14 = vector.load %arg5[%c0_25, %c1_26, %c0_27] : memref<18x18x4xf32, #tpu.memory_space<vmem>>, vector<16x16x4xf32>
    %15 = vector.shape_cast %14 : vector<16x16x4xf32> to vector<256x4xf32>
    %c0_28 = arith.constant 0 : index
    %c4 = arith.constant 4 : index
    %16 = vector.load %arg6[%c0_28, %c4] : memref<256x36xf32, #tpu.memory_space<vmem>>, vector<256x4xf32>
    tpu.vector_store %arg6[%c0_28, %c4], %15 {strides = array<i32>} : memref<256x36xf32, #tpu.memory_space<vmem>>, vector<256x4xf32>,
    %c0_29 = arith.constant 0 : index
    %c2_30 = arith.constant 2 : index
    %c0_31 = arith.constant 0 : index
    %17 = vector.load %arg5[%c0_29, %c2_30, %c0_31] : memref<18x18x4xf32, #tpu.memory_space<vmem>>, vector<16x16x4xf32>
    %18 = vector.shape_cast %17 : vector<16x16x4xf32> to vector<256x4xf32>
    %c0_32 = arith.constant 0 : index
    %c8 = arith.constant 8 : index
    %19 = vector.load %arg6[%c0_32, %c8] : memref<256x36xf32, #tpu.memory_space<vmem>>, vector<256x4xf32>
    tpu.vector_store %arg6[%c0_32, %c8], %18 {strides = array<i32>} : memref<256x36xf32, #tpu.memory_space<vmem>>, vector<256x4xf32>,
    %c1_33 = arith.constant 1 : index
    %c0_34 = arith.constant 0 : index
    %c0_35 = arith.constant 0 : index
    %20 = vector.load %arg5[%c1_33, %c0_34, %c0_35] : memref<18x18x4xf32, #tpu.memory_space<vmem>>, vector<16x16x4xf32>
    %21 = vector.shape_cast %20 : vector<16x16x4xf32> to vector<256x4xf32>
    %c0_36 = arith.constant 0 : index
    %c12 = arith.constant 12 : index
    %22 = vector.load %arg6[%c0_36, %c12] : memref<256x36xf32, #tpu.memory_space<vmem>>, vector<256x4xf32>
    tpu.vector_store %arg6[%c0_36, %c12], %21 {strides = array<i32>} : memref<256x36xf32, #tpu.memory_space<vmem>>, vector<256x4xf32>,
    %c1_37 = arith.constant 1 : index
    %c1_38 = arith.constant 1 : index
    %c0_39 = arith.constant 0 : index
    %23 = vector.load %arg5[%c1_37, %c1_38, %c0_39] : memref<18x18x4xf32, #tpu.memory_space<vmem>>, vector<16x16x4xf32>
    %24 = vector.shape_cast %23 : vector<16x16x4xf32> to vector<256x4xf32>
    %c0_40 = arith.constant 0 : index
    %c16 = arith.constant 16 : index
    %25 = vector.load %arg6[%c0_40, %c16] : memref<256x36xf32, #tpu.memory_space<vmem>>, vector<256x4xf32>
    tpu.vector_store %arg6[%c0_40, %c16], %24 {strides = array<i32>} : memref<256x36xf32, #tpu.memory_space<vmem>>, vector<256x4xf32>,
    %c1_41 = arith.constant 1 : index
    %c2_42 = arith.constant 2 : index
    %c0_43 = arith.constant 0 : index
    %26 = vector.load %arg5[%c1_41, %c2_42, %c0_43] : memref<18x18x4xf32, #tpu.memory_space<vmem>>, vector<16x16x4xf32>
    %27 = vector.shape_cast %26 : vector<16x16x4xf32> to vector<256x4xf32>
    %c0_44 = arith.constant 0 : index
    %c20 = arith.constant 20 : index
    %28 = vector.load %arg6[%c0_44, %c20] : memref<256x36xf32, #tpu.memory_space<vmem>>, vector<256x4xf32>
    tpu.vector_store %arg6[%c0_44, %c20], %27 {strides = array<i32>} : memref<256x36xf32, #tpu.memory_space<vmem>>, vector<256x4xf32>,
    %c2_45 = arith.constant 2 : index
    %c0_46 = arith.constant 0 : index
    %c0_47 = arith.constant 0 : index
    %29 = vector.load %arg5[%c2_45, %c0_46, %c0_47] : memref<18x18x4xf32, #tpu.memory_space<vmem>>, vector<16x16x4xf32>
    %30 = vector.shape_cast %29 : vector<16x16x4xf32> to vector<256x4xf32>
    %c0_48 = arith.constant 0 : index
    %c24 = arith.constant 24 : index
    %31 = vector.load %arg6[%c0_48, %c24] : memref<256x36xf32, #tpu.memory_space<vmem>>, vector<256x4xf32>
    tpu.vector_store %arg6[%c0_48, %c24], %30 {strides = array<i32>} : memref<256x36xf32, #tpu.memory_space<vmem>>, vector<256x4xf32>,
    %c2_49 = arith.constant 2 : index
    %c1_50 = arith.constant 1 : index
    %c0_51 = arith.constant 0 : index
    %32 = vector.load %arg5[%c2_49, %c1_50, %c0_51] : memref<18x18x4xf32, #tpu.memory_space<vmem>>, vector<16x16x4xf32>
    %33 = vector.shape_cast %32 : vector<16x16x4xf32> to vector<256x4xf32>
    %c0_52 = arith.constant 0 : index
    %c28 = arith.constant 28 : index
    %34 = vector.load %arg6[%c0_52, %c28] : memref<256x36xf32, #tpu.memory_space<vmem>>, vector<256x4xf32>
    tpu.vector_store %arg6[%c0_52, %c28], %33 {strides = array<i32>} : memref<256x36xf32, #tpu.memory_space<vmem>>, vector<256x4xf32>,
    %c2_53 = arith.constant 2 : index
    %c2_54 = arith.constant 2 : index
    %c0_55 = arith.constant 0 : index
    %35 = vector.load %arg5[%c2_53, %c2_54, %c0_55] : memref<18x18x4xf32, #tpu.memory_space<vmem>>, vector<16x16x4xf32>
    %36 = vector.shape_cast %35 : vector<16x16x4xf32> to vector<256x4xf32>
    %c0_56 = arith.constant 0 : index
    %c32 = arith.constant 32 : index
    %37 = vector.load %arg6[%c0_56, %c32] : memref<256x36xf32, #tpu.memory_space<vmem>>, vector<256x4xf32>
    tpu.vector_store %arg6[%c0_56, %c32], %36 {strides = array<i32>} : memref<256x36xf32, #tpu.memory_space<vmem>>, vector<256x4xf32>,
    %c0_57 = arith.constant 0 : index
    %c0_58 = arith.constant 0 : index
    %38 = vector.load %arg6[%c0_57, %c0_58] : memref<256x36xf32, #tpu.memory_space<vmem>>, vector<256x36xf32>
    %c0_59 = arith.constant 0 : index
    %c0_60 = arith.constant 0 : index
    %c0_61 = arith.constant 0 : index
    %39 = vector.load %arg2[%c0_59, %c0_60, %c0_61] : memref<2x36x4xf32, #tpu.memory_space<vmem>>, vector<1x36x4xf32>
    %40 = vector.shape_cast %39 : vector<1x36x4xf32> to vector<36x4xf32>
    %cst = arith.constant dense<0.000000e+00> : vector<256x4xf32>
    %41 = tpu.matmul %38, %40, %cst {dimension_numbers = #tpu.dot_dimension_numbers<[1], [0], [0], [1], [0, 0, 1, 1], [], []>} : vector<256x36xf32>, vector<36x4xf32>, vector<256x4xf32> -> vector<256x4xf32>
    %c0_62 = arith.constant 0 : index
    %c0_63 = arith.constant 0 : index
    %42 = vector.load %arg3[%c0_62, %c0_63] : memref<4x4xf32, #tpu.memory_space<vmem>>, vector<1x4xf32>
    %c1_64 = arith.constant 1 : index
    %c0_65 = arith.constant 0 : index
    %43 = vector.load %arg3[%c1_64, %c0_65] : memref<4x4xf32, #tpu.memory_space<vmem>>, vector<1x4xf32>
    %cst_66 = arith.constant dense<0.000000e+00> : vector<4xf32>
    %44 = vector.multi_reduction <add>, %41, %cst_66 [0] : vector<256x4xf32> to vector<4xf32>
    %45 = vector.shape_cast %44 : vector<4xf32> to vector<1x4xf32>
    %cst_67 = arith.constant 2.560000e+02 : f32
    %46 = vector.broadcast %cst_67 : f32 to vector<1x4xf32>
    %47 = arith.divf %45, %46 : vector<1x4xf32>
    %48 = arith.mulf %41, %41 : vector<256x4xf32>
    %cst_68 = arith.constant dense<0.000000e+00> : vector<4xf32>
    %49 = vector.multi_reduction <add>, %48, %cst_68 [0] : vector<256x4xf32> to vector<4xf32>
    %50 = vector.shape_cast %49 : vector<4xf32> to vector<1x4xf32>
    %cst_69 = arith.constant 2.560000e+02 : f32
    %51 = vector.broadcast %cst_69 : f32 to vector<1x4xf32>
    %52 = arith.divf %50, %51 : vector<1x4xf32>
    %53 = arith.mulf %47, %47 : vector<1x4xf32>
    %54 = arith.subf %52, %53 : vector<1x4xf32>
    %cst_70 = arith.constant 0.000000e+00 : f32
    %55 = vector.broadcast %cst_70 : f32 to vector<1x4xf32>
    %56 = arith.maximumf %54, %55 : vector<1x4xf32>
    %cst_71 = arith.constant 9.99999974E-6 : f32
    %57 = vector.broadcast %cst_71 : f32 to vector<1x4xf32>
    %58 = arith.addf %56, %57 : vector<1x4xf32>
    %59 = math.rsqrt %58 : vector<1x4xf32>
    %60 = arith.mulf %42, %59 : vector<1x4xf32>
    %61 = arith.mulf %47, %60 : vector<1x4xf32>
    %62 = arith.subf %43, %61 : vector<1x4xf32>
    %63 = vector.broadcast %60 : vector<1x4xf32> to vector<256x4xf32>
    %64 = arith.mulf %41, %63 : vector<256x4xf32>
    %65 = vector.broadcast %62 : vector<1x4xf32> to vector<256x4xf32>
    %66 = arith.addf %64, %65 : vector<256x4xf32>
    %cst_72 = arith.constant 0.000000e+00 : f32
    %67 = vector.broadcast %cst_72 : f32 to vector<256x4xf32>
    %68 = arith.maximumf %66, %67 : vector<256x4xf32>
    %69 = vector.shape_cast %68 : vector<256x4xf32> to vector<16x16x4xf32>
    %c1_73 = arith.constant 1 : index
    %c1_74 = arith.constant 1 : index
    %c0_75 = arith.constant 0 : index
    %70 = vector.load %arg5[%c1_73, %c1_74, %c0_75] : memref<18x18x4xf32, #tpu.memory_space<vmem>>, vector<16x16x4xf32>
    tpu.vector_store %arg5[%c1_73, %c1_74, %c0_75], %69 {strides = array<i32>} : memref<18x18x4xf32, #tpu.memory_space<vmem>>, vector<16x16x4xf32>,
    %71 = vector.extract_strided_slice %69 {offsets = [1, 0, 0], sizes = [1, 16, 4], strides = [1, 1, 1]} : vector<16x16x4xf32> to vector<1x16x4xf32>
    %c0_76 = arith.constant 0 : index
    %c1_77 = arith.constant 1 : index
    %c0_78 = arith.constant 0 : index
    %72 = vector.load %arg5[%c0_76, %c1_77, %c0_78] : memref<18x18x4xf32, #tpu.memory_space<vmem>>, vector<1x16x4xf32>
    tpu.vector_store %arg5[%c0_76, %c1_77, %c0_78], %71 {strides = array<i32>} : memref<18x18x4xf32, #tpu.memory_space<vmem>>, vector<1x16x4xf32>,
    %73 = vector.extract_strided_slice %69 {offsets = [14, 0, 0], sizes = [1, 16, 4], strides = [1, 1, 1]} : vector<16x16x4xf32> to vector<1x16x4xf32>
    %c17_79 = arith.constant 17 : index
    %c1_80 = arith.constant 1 : index
    %c0_81 = arith.constant 0 : index
    %74 = vector.load %arg5[%c17_79, %c1_80, %c0_81] : memref<18x18x4xf32, #tpu.memory_space<vmem>>, vector<1x16x4xf32>
    tpu.vector_store %arg5[%c17_79, %c1_80, %c0_81], %73 {strides = array<i32>} : memref<18x18x4xf32, #tpu.memory_space<vmem>>, vector<1x16x4xf32>,
    %c0_82 = arith.constant 0 : index
    %c2_83 = arith.constant 2 : index
    %c0_84 = arith.constant 0 : index
    %75 = vector.load %arg5[%c0_82, %c2_83, %c0_84] : memref<18x18x4xf32, #tpu.memory_space<vmem>>, vector<18x1x4xf32>
    %c0_85 = arith.constant 0 : index
    %c15_86 = arith.constant 15 : index
    %c0_87 = arith.constant 0 : index
    %76 = vector.load %arg5[%c0_85, %c15_86, %c0_87] : memref<18x18x4xf32, #tpu.memory_space<vmem>>, vector<18x1x4xf32>
    %c0_88 = arith.constant 0 : index
    %c0_89 = arith.constant 0 : index
    %c0_90 = arith.constant 0 : index
    %77 = vector.load %arg5[%c0_88, %c0_89, %c0_90] : memref<18x18x4xf32, #tpu.memory_space<vmem>>, vector<18x1x4xf32>
    tpu.vector_store %arg5[%c0_88, %c0_89, %c0_90], %75 {strides = array<i32>} : memref<18x18x4xf32, #tpu.memory_space<vmem>>, vector<18x1x4xf32>,
    %c0_91 = arith.constant 0 : index
    %c17_92 = arith.constant 17 : index
    %c0_93 = arith.constant 0 : index
    %78 = vector.load %arg5[%c0_91, %c17_92, %c0_93] : memref<18x18x4xf32, #tpu.memory_space<vmem>>, vector<18x1x4xf32>
    tpu.vector_store %arg5[%c0_91, %c17_92, %c0_93], %76 {strides = array<i32>} : memref<18x18x4xf32, #tpu.memory_space<vmem>>, vector<18x1x4xf32>,
    %c0_94 = arith.constant 0 : index
    %c0_95 = arith.constant 0 : index
    %c0_96 = arith.constant 0 : index
    %79 = vector.load %arg5[%c0_94, %c0_95, %c0_96] : memref<18x18x4xf32, #tpu.memory_space<vmem>>, vector<16x16x4xf32>
    %80 = vector.shape_cast %79 : vector<16x16x4xf32> to vector<256x4xf32>
    %c0_97 = arith.constant 0 : index
    %c0_98 = arith.constant 0 : index
    %81 = vector.load %arg6[%c0_97, %c0_98] : memref<256x36xf32, #tpu.memory_space<vmem>>, vector<256x4xf32>
    tpu.vector_store %arg6[%c0_97, %c0_98], %80 {strides = array<i32>} : memref<256x36xf32, #tpu.memory_space<vmem>>, vector<256x4xf32>,
    %c0_99 = arith.constant 0 : index
    %c1_100 = arith.constant 1 : index
    %c0_101 = arith.constant 0 : index
    %82 = vector.load %arg5[%c0_99, %c1_100, %c0_101] : memref<18x18x4xf32, #tpu.memory_space<vmem>>, vector<16x16x4xf32>
    %83 = vector.shape_cast %82 : vector<16x16x4xf32> to vector<256x4xf32>
    %c0_102 = arith.constant 0 : index
    %c4_103 = arith.constant 4 : index
    %84 = vector.load %arg6[%c0_102, %c4_103] : memref<256x36xf32, #tpu.memory_space<vmem>>, vector<256x4xf32>
    tpu.vector_store %arg6[%c0_102, %c4_103], %83 {strides = array<i32>} : memref<256x36xf32, #tpu.memory_space<vmem>>, vector<256x4xf32>,
    %c0_104 = arith.constant 0 : index
    %c2_105 = arith.constant 2 : index
    %c0_106 = arith.constant 0 : index
    %85 = vector.load %arg5[%c0_104, %c2_105, %c0_106] : memref<18x18x4xf32, #tpu.memory_space<vmem>>, vector<16x16x4xf32>
    %86 = vector.shape_cast %85 : vector<16x16x4xf32> to vector<256x4xf32>
    %c0_107 = arith.constant 0 : index
    %c8_108 = arith.constant 8 : index
    %87 = vector.load %arg6[%c0_107, %c8_108] : memref<256x36xf32, #tpu.memory_space<vmem>>, vector<256x4xf32>
    tpu.vector_store %arg6[%c0_107, %c8_108], %86 {strides = array<i32>} : memref<256x36xf32, #tpu.memory_space<vmem>>, vector<256x4xf32>,
    %c1_109 = arith.constant 1 : index
    %c0_110 = arith.constant 0 : index
    %c0_111 = arith.constant 0 : index
    %88 = vector.load %arg5[%c1_109, %c0_110, %c0_111] : memref<18x18x4xf32, #tpu.memory_space<vmem>>, vector<16x16x4xf32>
    %89 = vector.shape_cast %88 : vector<16x16x4xf32> to vector<256x4xf32>
    %c0_112 = arith.constant 0 : index
    %c12_113 = arith.constant 12 : index
    %90 = vector.load %arg6[%c0_112, %c12_113] : memref<256x36xf32, #tpu.memory_space<vmem>>, vector<256x4xf32>
    tpu.vector_store %arg6[%c0_112, %c12_113], %89 {strides = array<i32>} : memref<256x36xf32, #tpu.memory_space<vmem>>, vector<256x4xf32>,
    %c1_114 = arith.constant 1 : index
    %c1_115 = arith.constant 1 : index
    %c0_116 = arith.constant 0 : index
    %91 = vector.load %arg5[%c1_114, %c1_115, %c0_116] : memref<18x18x4xf32, #tpu.memory_space<vmem>>, vector<16x16x4xf32>
    %92 = vector.shape_cast %91 : vector<16x16x4xf32> to vector<256x4xf32>
    %c0_117 = arith.constant 0 : index
    %c16_118 = arith.constant 16 : index
    %93 = vector.load %arg6[%c0_117, %c16_118] : memref<256x36xf32, #tpu.memory_space<vmem>>, vector<256x4xf32>
    tpu.vector_store %arg6[%c0_117, %c16_118], %92 {strides = array<i32>} : memref<256x36xf32, #tpu.memory_space<vmem>>, vector<256x4xf32>,
    %c1_119 = arith.constant 1 : index
    %c2_120 = arith.constant 2 : index
    %c0_121 = arith.constant 0 : index
    %94 = vector.load %arg5[%c1_119, %c2_120, %c0_121] : memref<18x18x4xf32, #tpu.memory_space<vmem>>, vector<16x16x4xf32>
    %95 = vector.shape_cast %94 : vector<16x16x4xf32> to vector<256x4xf32>
    %c0_122 = arith.constant 0 : index
    %c20_123 = arith.constant 20 : index
    %96 = vector.load %arg6[%c0_122, %c20_123] : memref<256x36xf32, #tpu.memory_space<vmem>>, vector<256x4xf32>
    tpu.vector_store %arg6[%c0_122, %c20_123], %95 {strides = array<i32>} : memref<256x36xf32, #tpu.memory_space<vmem>>, vector<256x4xf32>,
    %c2_124 = arith.constant 2 : index
    %c0_125 = arith.constant 0 : index
    %c0_126 = arith.constant 0 : index
    %97 = vector.load %arg5[%c2_124, %c0_125, %c0_126] : memref<18x18x4xf32, #tpu.memory_space<vmem>>, vector<16x16x4xf32>
    %98 = vector.shape_cast %97 : vector<16x16x4xf32> to vector<256x4xf32>
    %c0_127 = arith.constant 0 : index
    %c24_128 = arith.constant 24 : index
    %99 = vector.load %arg6[%c0_127, %c24_128] : memref<256x36xf32, #tpu.memory_space<vmem>>, vector<256x4xf32>
    tpu.vector_store %arg6[%c0_127, %c24_128], %98 {strides = array<i32>} : memref<256x36xf32, #tpu.memory_space<vmem>>, vector<256x4xf32>,
    %c2_129 = arith.constant 2 : index
    %c1_130 = arith.constant 1 : index
    %c0_131 = arith.constant 0 : index
    %100 = vector.load %arg5[%c2_129, %c1_130, %c0_131] : memref<18x18x4xf32, #tpu.memory_space<vmem>>, vector<16x16x4xf32>
    %101 = vector.shape_cast %100 : vector<16x16x4xf32> to vector<256x4xf32>
    %c0_132 = arith.constant 0 : index
    %c28_133 = arith.constant 28 : index
    %102 = vector.load %arg6[%c0_132, %c28_133] : memref<256x36xf32, #tpu.memory_space<vmem>>, vector<256x4xf32>
    tpu.vector_store %arg6[%c0_132, %c28_133], %101 {strides = array<i32>} : memref<256x36xf32, #tpu.memory_space<vmem>>, vector<256x4xf32>,
    %c2_134 = arith.constant 2 : index
    %c2_135 = arith.constant 2 : index
    %c0_136 = arith.constant 0 : index
    %103 = vector.load %arg5[%c2_134, %c2_135, %c0_136] : memref<18x18x4xf32, #tpu.memory_space<vmem>>, vector<16x16x4xf32>
    %104 = vector.shape_cast %103 : vector<16x16x4xf32> to vector<256x4xf32>
    %c0_137 = arith.constant 0 : index
    %c32_138 = arith.constant 32 : index
    %105 = vector.load %arg6[%c0_137, %c32_138] : memref<256x36xf32, #tpu.memory_space<vmem>>, vector<256x4xf32>
    tpu.vector_store %arg6[%c0_137, %c32_138], %104 {strides = array<i32>} : memref<256x36xf32, #tpu.memory_space<vmem>>, vector<256x4xf32>,
    %c0_139 = arith.constant 0 : index
    %c0_140 = arith.constant 0 : index
    %106 = vector.load %arg6[%c0_139, %c0_140] : memref<256x36xf32, #tpu.memory_space<vmem>>, vector<256x36xf32>
    %c1_141 = arith.constant 1 : index
    %c0_142 = arith.constant 0 : index
    %c0_143 = arith.constant 0 : index
    %107 = vector.load %arg2[%c1_141, %c0_142, %c0_143] : memref<2x36x4xf32, #tpu.memory_space<vmem>>, vector<1x36x4xf32>
    %108 = vector.shape_cast %107 : vector<1x36x4xf32> to vector<36x4xf32>
    %cst_144 = arith.constant dense<0.000000e+00> : vector<256x4xf32>
    %109 = tpu.matmul %106, %108, %cst_144 {dimension_numbers = #tpu.dot_dimension_numbers<[1], [0], [0], [1], [0, 0, 1, 1], [], []>} : vector<256x36xf32>, vector<36x4xf32>, vector<256x4xf32> -> vector<256x4xf32>
    %c2_145 = arith.constant 2 : index
    %c0_146 = arith.constant 0 : index
    %110 = vector.load %arg3[%c2_145, %c0_146] : memref<4x4xf32, #tpu.memory_space<vmem>>, vector<1x4xf32>
    %c3 = arith.constant 3 : index
    %c0_147 = arith.constant 0 : index
    %111 = vector.load %arg3[%c3, %c0_147] : memref<4x4xf32, #tpu.memory_space<vmem>>, vector<1x4xf32>
    %cst_148 = arith.constant dense<0.000000e+00> : vector<4xf32>
    %112 = vector.multi_reduction <add>, %109, %cst_148 [0] : vector<256x4xf32> to vector<4xf32>
    %113 = vector.shape_cast %112 : vector<4xf32> to vector<1x4xf32>
    %cst_149 = arith.constant 2.560000e+02 : f32
    %114 = vector.broadcast %cst_149 : f32 to vector<1x4xf32>
    %115 = arith.divf %113, %114 : vector<1x4xf32>
    %116 = arith.mulf %109, %109 : vector<256x4xf32>
    %cst_150 = arith.constant dense<0.000000e+00> : vector<4xf32>
    %117 = vector.multi_reduction <add>, %116, %cst_150 [0] : vector<256x4xf32> to vector<4xf32>
    %118 = vector.shape_cast %117 : vector<4xf32> to vector<1x4xf32>
    %cst_151 = arith.constant 2.560000e+02 : f32
    %119 = vector.broadcast %cst_151 : f32 to vector<1x4xf32>
    %120 = arith.divf %118, %119 : vector<1x4xf32>
    %121 = arith.mulf %115, %115 : vector<1x4xf32>
    %122 = arith.subf %120, %121 : vector<1x4xf32>
    %cst_152 = arith.constant 0.000000e+00 : f32
    %123 = vector.broadcast %cst_152 : f32 to vector<1x4xf32>
    %124 = arith.maximumf %122, %123 : vector<1x4xf32>
    %cst_153 = arith.constant 9.99999974E-6 : f32
    %125 = vector.broadcast %cst_153 : f32 to vector<1x4xf32>
    %126 = arith.addf %124, %125 : vector<1x4xf32>
    %127 = math.rsqrt %126 : vector<1x4xf32>
    %128 = arith.mulf %110, %127 : vector<1x4xf32>
    %129 = arith.mulf %115, %128 : vector<1x4xf32>
    %130 = arith.subf %111, %129 : vector<1x4xf32>
    %131 = vector.broadcast %128 : vector<1x4xf32> to vector<256x4xf32>
    %132 = arith.mulf %109, %131 : vector<256x4xf32>
    %133 = vector.broadcast %130 : vector<1x4xf32> to vector<256x4xf32>
    %134 = arith.addf %132, %133 : vector<256x4xf32>
    %135 = vector.shape_cast %134 : vector<256x4xf32> to vector<16x16x4xf32>
    %c0_154 = arith.constant 0 : index
    %c0_155 = arith.constant 0 : index
    %c0_156 = arith.constant 0 : index
    %c0_157 = arith.constant 0 : index
    %136 = vector.load %arg1[%c0_154, %c0_155, %c0_156, %c0_157] : memref<1x16x16x4xf32, #tpu.memory_space<vmem>>, vector<1x16x16x4xf32>
    %137 = vector.shape_cast %136 : vector<1x16x16x4xf32> to vector<16x16x4xf32>
    %138 = arith.addf %137, %135 : vector<16x16x4xf32>
    %cst_158 = arith.constant 0.000000e+00 : f32
    %139 = vector.broadcast %cst_158 : f32 to vector<16x16x4xf32>
    %140 = arith.maximumf %138, %139 : vector<16x16x4xf32>
    %c0_159 = arith.constant 0 : index
    %c0_160 = arith.constant 0 : index
    %c0_161 = arith.constant 0 : index
    %c0_162 = arith.constant 0 : index
    %141 = vector.load %arg4[%c0_159, %c0_160, %c0_161, %c0_162] : memref<1x16x16x4xf32, #tpu.memory_space<vmem>>, vector<1x16x16x4xf32>
    %142 = vector.shape_cast %141 : vector<1x16x16x4xf32> to vector<16x16x4xf32>
    %143 = vector.shape_cast %140 : vector<16x16x4xf32> to vector<1x16x16x4xf32>
    tpu.vector_store %arg4[%c0_159, %c0_160, %c0_161, %c0_162], %143 {strides = array<i32>} : memref<1x16x16x4xf32, #tpu.memory_space<vmem>>, vector<1x16x16x4xf32>,
    return
  }
  func.func @transform_0(%arg0: i32) -> (i32, i32, i32, i32) {
    %c0_i32 = arith.constant 0 : i32
    %c0_i32_0 = arith.constant 0 : i32
    %c0_i32_1 = arith.constant 0 : i32
    %c0_i32_2 = arith.constant 0 : i32
    return %arg0, %c0_i32, %c0_i32_0, %c0_i32_1 : i32, i32, i32, i32
  }
  func.func @transform_1(%arg0: i32) -> (i32, i32, i32) {
    %c0_i32 = arith.constant 0 : i32
    %c0_i32_0 = arith.constant 0 : i32
    %c0_i32_1 = arith.constant 0 : i32
    %c0_i32_2 = arith.constant 0 : i32
    return %c0_i32, %c0_i32_0, %c0_i32_1 : i32, i32, i32
  }
  func.func @transform_2(%arg0: i32) -> (i32, i32) {
    %c0_i32 = arith.constant 0 : i32
    %c0_i32_0 = arith.constant 0 : i32
    %c0_i32_1 = arith.constant 0 : i32
    return %c0_i32, %c0_i32_0 : i32, i32
  }
  func.func @transform_3(%arg0: i32) -> (i32, i32, i32, i32) {
    %c0_i32 = arith.constant 0 : i32
    %c0_i32_0 = arith.constant 0 : i32
    %c0_i32_1 = arith.constant 0 : i32
    %c0_i32_2 = arith.constant 0 : i32
    return %arg0, %c0_i32, %c0_i32_0, %c0_i32_1 : i32, i32, i32, i32
  }
}

</mosaic_0001>

<llo_original>
// kernel: tpu_custom_call.1
$region0: #{tpu_custom_call.1}
  #allocation0 [shape = 'u32[]', space=smem, size = 0x4, offset = 0x4, fixed_abs, tag = 'smem constant byte address 0x4 - core index']
  #allocation1 [shape = 'u32[72,128]{1,0:T(1,128)}', space=vmem, size = 0x9000, scoped, tag = 'internal scratch']
  #allocation2 [shape = 'f32[18,18,4]{2,1,0:T(8,128)}', space=vmem, size = 0x36000, scoped, tag = 'scratch operand']
  #allocation3 [shape = 'f32[256,36]{1,0:T(8,128)}', space=vmem, size = 0x20000, scoped, tag = 'scratch operand']
  %s0 = inlined_call_operand.vmem [shape: f32[2,16,16,4], index: 0, kind: input, shape index: {}]
  %s1 = inlined_call_operand.vmem [shape: f32[2,36,4], index: 1, kind: input, shape index: {}]
  %s2 = inlined_call_operand.vmem [shape: f32[4,4], index: 2, kind: input, shape index: {}]
  %s3 = inlined_call_operand.vmem [shape: f32[2,16,16,4], index: 3, kind: output, shape index: {}]
  %s4 = sld [smem:[#allocation0]]
  $region45: #{tpu_custom_call.1} parent=0
    _
  %s6 = ssub.s32 1, %s4
  %s7 = scalar_select 0, %s6, %s4
  loop: start=0, step=1, limit=4
  $region2: #{tpu_custom_call.1} parent=0 // loop_pre_header
    _
  $region3: #{tpu_custom_call.1} parent=0 // loop_header
    %s9 = sphi 0, %s13
    %p10 = scmp.ge.s32.totalorder %s9, 4
    %s19 = sphi 0, %s21
    %s22 = sphi 0, %s19
    %s23 = sphi 0, %s22
    %s39 = sphi 0, %s23
    %s43 = sphi 0, %s43
    %s45 = sphi 0, %s43
    %s46 = sphi 0, %s45
    %s60 = sphi 0, %s46
    %s64 = sphi 0, %s64
    %s66 = sphi 0, %s64
    %s67 = sphi 0, %s66
    %s81 = sphi 0, %s67
    %s87 = sphi 0, %s89
    %s90 = sphi 0, %s87
    %s91 = sphi 0, %s90
    %s107 = sphi 0, %s91
  $region4: #{tpu_custom_call.1} parent=0 // loop_header_branch
    %12 = sbr.rel (%p10) target = $region8
  $region5: #{tpu_custom_call.1} parent=0 // loop_body
    %s14 = ssub.s32 %s9, 1
    %s15 = ssub.s32 %s9, 2
    %s16 = sadd.s32 %s9, 1
    %s17 = ssub.s32 %s9, %s16
    %p18 = scmp.eq.s32.totalorder %s17, 0
    %s20 = sadd.s32 %s19, 1
    %s21 = scalar_select %p18, %s19, %s20
    %p24 = pneg %p18
    %p25 = scmp.eq.s32.totalorder %s9, 1
    %p26 = por %p24, %p25
    %p27 = scmp.ne.s32.totalorder %s19, %s22
    %p28 = scmp.eq.s32.totalorder %s9, 0
    %p29 = por %p27, %p28
    %p30 = scmp.ne.s32.totalorder %s19, %s22
    %p31 = scmp.eq.s32.totalorder %s14, 1
    %p32 = por %p30, %p31
    %p33 = scmp.ne.s32.totalorder %s22, %s23
    %p34 = scmp.eq.s32.totalorder %s14, 0
    %p35 = por %p33, %p34
    %p36 = scmp.ne.s32.totalorder %s22, %s23
    %p37 = scmp.eq.s32.totalorder %s15, 1
    %p38 = por %p36, %p37
    %p40 = scmp.ne.s32.totalorder %s23, %s39
    %p41 = scmp.eq.s32.totalorder %s15, 0
    %p42 = por %p40, %p41
    %s44 = sadd.s32 %s43, 1
    %p47 = scmp.eq.s32.totalorder %s9, 1
    %p48 = scmp.ne.s32.totalorder %s43, %s45
    %p49 = scmp.eq.s32.totalorder %s9, 0
    %p50 = por %p48, %p49
    %p51 = scmp.ne.s32.totalorder %s43, %s45
    %p52 = scmp.eq.s32.totalorder %s14, 1
    %p53 = por %p51, %p52
    %p54 = scmp.ne.s32.totalorder %s45, %s46
    %p55 = scmp.eq.s32.totalorder %s14, 0
    %p56 = por %p54, %p55
    %p57 = scmp.ne.s32.totalorder %s45, %s46
    %p58 = scmp.eq.s32.totalorder %s15, 1
    %p59 = por %p57, %p58
    %p61 = scmp.ne.s32.totalorder %s46, %s60
    %p62 = scmp.eq.s32.totalorder %s15, 0
    %p63 = por %p61, %p62
    %s65 = sadd.s32 %s64, 1
    %p68 = scmp.eq.s32.totalorder %s9, 1
    %p69 = scmp.ne.s32.totalorder %s64, %s66
    %p70 = scmp.eq.s32.totalorder %s9, 0
    %p71 = por %p69, %p70
    %p72 = scmp.ne.s32.totalorder %s64, %s66
    %p73 = scmp.eq.s32.totalorder %s14, 1
    %p74 = por %p72, %p73
    %p75 = scmp.ne.s32.totalorder %s66, %s67
    %p76 = scmp.eq.s32.totalorder %s14, 0
    %p77 = por %p75, %p76
    %p78 = scmp.ne.s32.totalorder %s66, %s67
    %p79 = scmp.eq.s32.totalorder %s15, 1
    %p80 = por %p78, %p79
    %p82 = scmp.ne.s32.totalorder %s67, %s81
    %p83 = scmp.eq.s32.totalorder %s15, 0
    %p84 = por %p82, %p83
    %s85 = ssub.s32 %s9, %s16
    %p86 = scmp.eq.s32.totalorder %s85, 0
    %s88 = sadd.s32 %s87, 1
    %s89 = scalar_select %p86, %s87, %s88
    %p92 = pneg %p86
    %p93 = scmp.eq.s32.totalorder %s9, 1
    %p94 = por %p92, %p93
    %p95 = scmp.ne.s32.totalorder %s87, %s90
    %p96 = scmp.eq.s32.totalorder %s9, 0
    %p97 = por %p95, %p96
    %p98 = scmp.ne.s32.totalorder %s87, %s90
    %p99 = scmp.eq.s32.totalorder %s14, 1
    %p100 = por %p98, %p99
    %p101 = scmp.ne.s32.totalorder %s90, %s91
    %p102 = scmp.eq.s32.totalorder %s14, 0
    %p103 = por %p101, %p102
    %p104 = scmp.ne.s32.totalorder %s90, %s91
    %p105 = scmp.eq.s32.totalorder %s15, 1
    %p106 = por %p104, %p105
    %p108 = scmp.ne.s32.totalorder %s91, %s107
    %p109 = scmp.eq.s32.totalorder %s15, 0
    %p110 = por %p108, %p109
    %p111 = scmp.le.s32.totalorder 1, %s9
    %p112 = scmp.lt.s32.totalorder %s9, 3
    %p113 = pnand %p111, %p112
    %p114 = pneg %p113
    // Predicated region
    $region9: #{tpu_custom_call.1} parent=5 // pred_check
      _
    $region10: #{tpu_custom_call.1} parent=5 // pred_check_branch
      %116 = sbr.rel (%p113) target = $region12
    $region11: #{tpu_custom_call.1} parent=5 // pred_region
      %s117 = ssub.s32 %s9, 1
      // Predicated region
      $region13: #{tpu_custom_call.1} parent=11 // pred_check
        %p118 = pneg %p56
      $region14: #{tpu_custom_call.1} parent=11 // pred_check_branch
        %120 = sbr.rel (%p118) target = $region16
      $region15: #{tpu_custom_call.1} parent=11 // pred_region
        _
      $region16: #{tpu_custom_call.1} parent=11 // pred_fallthru
        _
      // Predicated region
      $region17: #{tpu_custom_call.1} parent=11 // pred_check
        %p121 = pneg %p77
      $region18: #{tpu_custom_call.1} parent=11 // pred_check_branch
        %123 = sbr.rel (%p121) target = $region20
      $region19: #{tpu_custom_call.1} parent=11 // pred_region
        _
      $region20: #{tpu_custom_call.1} parent=11 // pred_fallthru
        _
    $region12: #{tpu_custom_call.1} parent=5 // pred_fallthru
      _
    %p124 = scmp.lt.s32.totalorder %s9, 2
    // Predicated region
    $region21: #{tpu_custom_call.1} parent=5 // pred_check
      %p125 = pneg %p124
    $region22: #{tpu_custom_call.1} parent=5 // pred_check_branch
      %127 = sbr.rel (%p125) target = $region24
    $region23: #{tpu_custom_call.1} parent=5 // pred_region
      // Predicated region
      $region25: #{tpu_custom_call.1} parent=23 // pred_check
        %p128 = pneg %p29
      $region26: #{tpu_custom_call.1} parent=23 // pred_check_branch
        %130 = sbr.rel (%p128) target = $region28
      $region27: #{tpu_custom_call.1} parent=23 // pred_region
        %p131 = scmp.lt.s32.totalorder %s9, 1
        %s132 = scalar_select %p131, %s9, 1
        %s133 = smul.addr %s132, 32
        %s134 = smul.addr %s133, 8
        %s135 = scalar_lea.vmem %s0, %s134
      $region28: #{tpu_custom_call.1} parent=23 // pred_fallthru
        _
    $region24: #{tpu_custom_call.1} parent=5 // pred_fallthru
      _
    %p136 = scmp.le.s32.totalorder 1, %s9
    %p137 = scmp.lt.s32.totalorder %s9, 3
    %p138 = pnand %p136, %p137
    %p139 = pneg %p138
    // Predicated region
    $region29: #{tpu_custom_call.1} parent=5 // pred_check
      _
    $region30: #{tpu_custom_call.1} parent=5 // pred_check_branch
      %141 = sbr.rel (%p138) target = $region32
    $region31: #{tpu_custom_call.1} parent=5 // pred_region
      %s142 = ssub.s32 %s9, 1
      %p143 = scmp.lt.s32.totalorder %s14, 1
      %s144 = scalar_select %p143, %s14, 1
      %s145 = smul.addr %s144, 32
      %s146 = smul.addr %s145, 8
      %s147 = scalar_lea.vmem %s0, %s146
      %p148 = pneg %p35
      %p149 = pneg %p32
      %p150 = pneg %p56
      %p151 = pneg %p53
      %p152 = pneg %p77
      %p153 = pneg %p74
      %p154 = pneg %p103
      %p155 = pneg %p100
      %p156 = scmp.lt.s32.totalorder %s14, 1
      %s157 = scalar_select %p156, %s14, 1
      %s158 = smul.addr %s157, 32
      %s159 = smul.addr %s158, 8
      %s160 = scalar_lea.vmem %s3, %s159
      %p161 = scmp.lt.s32.totalorder %s14, 1
      %s162 = scalar_select %p161, %s14, 1
      %s163 = smul.addr %s162, 32
      %s164 = smul.addr %s163, 8
      %s165 = scalar_lea.vmem %s0, %s164
      %p166 = scmp.lt.s32.totalorder %s14, 1
      %s167 = scalar_select %p166, %s14, 1
      %s168 = smul.addr %s167, 32
      %s169 = smul.addr %s168, 8
      %s170 = scalar_lea.vmem %s3, %s169
      %v171 = vld [vmem:[%s165] sm:$0xff]
      %v172 = vld [vmem:[%s165 + $0x8] sm:$0xff]
      %v173 = vld [vmem:[%s165 + $0x10] sm:$0xff]
      %v174 = vld [vmem:[%s165 + $0x18] sm:$0xff]
      %v175 = vld [vmem:[%s165 + $0x20] sm:$0xff]
      %v176 = vld [vmem:[%s165 + $0x28] sm:$0xff]
      %v177 = vld [vmem:[%s165 + $0x30] sm:$0xff]
      %v178 = vld [vmem:[%s165 + $0x38] sm:$0xff]
      %v179 = vld [vmem:[%s165 + $0x40] sm:$0xff]
      %v180 = vld [vmem:[%s165 + $0x48] sm:$0xff]
      %v181 = vld [vmem:[%s165 + $0x50] sm:$0xff]
      %v182 = vld [vmem:[%s165 + $0x58] sm:$0xff]
      %v183 = vld [vmem:[%s165 + $0x60] sm:$0xff]
      %v184 = vld [vmem:[%s165 + $0x68] sm:$0xff]
      %v185 = vld [vmem:[%s165 + $0x70] sm:$0xff]
      %v186 = vld [vmem:[%s165 + $0x78] sm:$0xff]
      %v187 = vld [vmem:[%s165 + $0x80] sm:$0xff]
      %v188 = vld [vmem:[%s165 + $0x88] sm:$0xff]
      %v189 = vld [vmem:[%s165 + $0x90] sm:$0xff]
      %v190 = vld [vmem:[%s165 + $0x98] sm:$0xff]
      %v191 = vld [vmem:[%s165 + $0xa0] sm:$0xff]
      %v192 = vld [vmem:[%s165 + $0xa8] sm:$0xff]
      %v193 = vld [vmem:[%s165 + $0xb0] sm:$0xff]
      %v194 = vld [vmem:[%s165 + $0xb8] sm:$0xff]
      %v195 = vld [vmem:[%s165 + $0xc0] sm:$0xff]
      %v196 = vld [vmem:[%s165 + $0xc8] sm:$0xff]
      %v197 = vld [vmem:[%s165 + $0xd0] sm:$0xff]
      %v198 = vld [vmem:[%s165 + $0xd8] sm:$0xff]
      %v199 = vld [vmem:[%s165 + $0xe0] sm:$0xff]
      %v200 = vld [vmem:[%s165 + $0xe8] sm:$0xff]
      %v201 = vld [vmem:[%s165 + $0xf0] sm:$0xff]
      %v202 = vld [vmem:[%s165 + $0xf8] sm:$0xff]
      %s203 = scalar_lea.vmem [#allocation2], 24
      %vm204 = vcmask 31744
      %205 = vst.msk [vmem:[%s203 + $0x1] sm:$0xff] %vm204, %v171
      %206 = vst.msk [vmem:[%s203 + $0x9] sm:$0xff] %vm204, %v172
      %207 = vst.msk [vmem:[%s203 + $0x19] sm:$0xff] %vm204, %v173
      %208 = vst.msk [vmem:[%s203 + $0x21] sm:$0xff] %vm204, %v174
      %209 = vst.msk [vmem:[%s203 + $0x31] sm:$0xff] %vm204, %v175
      %210 = vst.msk [vmem:[%s203 + $0x39] sm:$0xff] %vm204, %v176
      %211 = vst.msk [vmem:[%s203 + $0x49] sm:$0xff] %vm204, %v177
      %212 = vst.msk [vmem:[%s203 + $0x51] sm:$0xff] %vm204, %v178
      %213 = vst.msk [vmem:[%s203 + $0x61] sm:$0xff] %vm204, %v179
      %214 = vst.msk [vmem:[%s203 + $0x69] sm:$0xff] %vm204, %v180
      %215 = vst.msk [vmem:[%s203 + $0x79] sm:$0xff] %vm204, %v181
      %216 = vst.msk [vmem:[%s203 + $0x81] sm:$0xff] %vm204, %v182
      %217 = vst.msk [vmem:[%s203 + $0x91] sm:$0xff] %vm204, %v183
      %218 = vst.msk [vmem:[%s203 + $0x99] sm:$0xff] %vm204, %v184
      %219 = vst.msk [vmem:[%s203 + $0xa9] sm:$0xff] %vm204, %v185
      %220 = vst.msk [vmem:[%s203 + $0xb1] sm:$0xff] %vm204, %v186
      %221 = vst.msk [vmem:[%s203 + $0xc1] sm:$0xff] %vm204, %v187
      %222 = vst.msk [vmem:[%s203 + $0xc9] sm:$0xff] %vm204, %v188
      %223 = vst.msk [vmem:[%s203 + $0xd9] sm:$0xff] %vm204, %v189
      %224 = vst.msk [vmem:[%s203 + $0xe1] sm:$0xff] %vm204, %v190
      %225 = vst.msk [vmem:[%s203 + $0xf1] sm:$0xff] %vm204, %v191
      %226 = vst.msk [vmem:[%s203 + $0xf9] sm:$0xff] %vm204, %v192
      %227 = vst.msk [vmem:[%s203 + $0x109] sm:$0xff] %vm204, %v193
      %228 = vst.msk [vmem:[%s203 + $0x111] sm:$0xff] %vm204, %v194
      %229 = vst.msk [vmem:[%s203 + $0x121] sm:$0xff] %vm204, %v195
      %230 = vst.msk [vmem:[%s203 + $0x129] sm:$0xff] %vm204, %v196
      %231 = vst.msk [vmem:[%s203 + $0x139] sm:$0xff] %vm204, %v197
      %232 = vst.msk [vmem:[%s203 + $0x141] sm:$0xff] %vm204, %v198
      %233 = vst.msk [vmem:[%s203 + $0x151] sm:$0xff] %vm204, %v199
      %234 = vst.msk [vmem:[%s203 + $0x159] sm:$0xff] %vm204, %v200
      %235 = vst.msk [vmem:[%s203 + $0x169] sm:$0xff] %vm204, %v201
      %236 = vst.msk [vmem:[%s203 + $0x171] sm:$0xff] %vm204, %v202
      %237 = vst.msk [vmem:[#allocation2 + $0x1] sm:$0xff] %vm204, %v173
      %238 = vst.msk [vmem:[#allocation2 + $0x9] sm:$0xff] %vm204, %v174
      %s239 = scalar_lea.vmem [#allocation2], 408
      %240 = vst.msk [vmem:[%s239 + $0x1] sm:$0xff] %vm204, %v199
      %241 = vst.msk [vmem:[%s239 + $0x9] sm:$0xff] %vm204, %v200
      %v242 = vld [vmem:[#allocation2 + $0x2] sm:$0x1]
      %v243 = vld [vmem:[#allocation2 + $0x1a] sm:$0x1]
      %v244 = vld [vmem:[#allocation2 + $0x32] sm:$0x1]
      %v245 = vld [vmem:[#allocation2 + $0x4a] sm:$0x1]
      %v246 = vld [vmem:[#allocation2 + $0x62] sm:$0x1]
      %v247 = vld [vmem:[#allocation2 + $0x7a] sm:$0x1]
      %v248 = vld [vmem:[#allocation2 + $0x92] sm:$0x1]
      %v249 = vld [vmem:[#allocation2 + $0xaa] sm:$0x1]
      %v250 = vld [vmem:[#allocation2 + $0xc2] sm:$0x1]
      %v251 = vld [vmem:[#allocation2 + $0xda] sm:$0x1]
      %v252 = vld [vmem:[#allocation2 + $0xf2] sm:$0x1]
      %v253 = vld [vmem:[#allocation2 + $0x10a] sm:$0x1]
      %v254 = vld [vmem:[#allocation2 + $0x122] sm:$0x1]
      %v255 = vld [vmem:[#allocation2 + $0x13a] sm:$0x1]
      %v256 = vld [vmem:[#allocation2 + $0x152] sm:$0x1]
      %v257 = vld [vmem:[#allocation2 + $0x16a] sm:$0x1]
      %v258 = vld [vmem:[#allocation2 + $0x182] sm:$0x1]
      %v259 = vld [vmem:[#allocation2 + $0x19a] sm:$0x1]
      %v260 = vld [vmem:[#allocation2 + $0xf] sm:$0x1]
      %v261 = vld [vmem:[#allocation2 + $0x27] sm:$0x1]
      %v262 = vld [vmem:[#allocation2 + $0x3f] sm:$0x1]
      %v263 = vld [vmem:[#allocation2 + $0x57] sm:$0x1]
      %v264 = vld [vmem:[#allocation2 + $0x6f] sm:$0x1]
      %v265 = vld [vmem:[#allocation2 + $0x87] sm:$0x1]
      %v266 = vld [vmem:[#allocation2 + $0x9f] sm:$0x1]
      %v267 = vld [vmem:[#allocation2 + $0xb7] sm:$0x1]
      %v268 = vld [vmem:[#allocation2 + $0xcf] sm:$0x1]
      %v269 = vld [vmem:[#allocation2 + $0xe7] sm:$0x1]
      %v270 = vld [vmem:[#allocation2 + $0xff] sm:$0x1]
      %v271 = vld [vmem:[#allocation2 + $0x117] sm:$0x1]
      %v272 = vld [vmem:[#allocation2 + $0x12f] sm:$0x1]
      %v273 = vld [vmem:[#allocation2 + $0x147] sm:$0x1]
      %v274 = vld [vmem:[#allocation2 + $0x15f] sm:$0x1]
      %v275 = vld [vmem:[#allocation2 + $0x177] sm:$0x1]
      %v276 = vld [vmem:[#allocation2 + $0x18f] sm:$0x1]
      %v277 = vld [vmem:[#allocation2 + $0x1a7] sm:$0x1]
      %vm278 = vcmask 24576
      %279 = vst.msk [vmem:[#allocation2] sm:$0x1] %vm278, %v242
      %280 = vst.msk [vmem:[#allocation2 + $0x18] sm:$0x1] %vm278, %v243
      %281 = vst.msk [vmem:[#allocation2 + $0x30] sm:$0x1] %vm278, %v244
      %282 = vst.msk [vmem:[#allocation2 + $0x48] sm:$0x1] %vm278, %v245
      %283 = vst.msk [vmem:[#allocation2 + $0x60] sm:$0x1] %vm278, %v246
      %284 = vst.msk [vmem:[#allocation2 + $0x78] sm:$0x1] %vm278, %v247
      %285 = vst.msk [vmem:[#allocation2 + $0x90] sm:$0x1] %vm278, %v248
      %286 = vst.msk [vmem:[#allocation2 + $0xa8] sm:$0x1] %vm278, %v249
      %287 = vst.msk [vmem:[#allocation2 + $0xc0] sm:$0x1] %vm278, %v250
      %288 = vst.msk [vmem:[#allocation2 + $0xd8] sm:$0x1] %vm278, %v251
      %289 = vst.msk [vmem:[#allocation2 + $0xf0] sm:$0x1] %vm278, %v252
      %290 = vst.msk [vmem:[#allocation2 + $0x108] sm:$0x1] %vm278, %v253
      %291 = vst.msk [vmem:[#allocation2 + $0x120] sm:$0x1] %vm278, %v254
      %292 = vst.msk [vmem:[#allocation2 + $0x138] sm:$0x1] %vm278, %v255
      %293 = vst.msk [vmem:[#allocation2 + $0x150] sm:$0x1] %vm278, %v256
      %294 = vst.msk [vmem:[#allocation2 + $0x168] sm:$0x1] %vm278, %v257
      %295 = vst.msk [vmem:[#allocation2 + $0x180] sm:$0x1] %vm278, %v258
      %296 = vst.msk [vmem:[#allocation2 + $0x198] sm:$0x1] %vm278, %v259
      %297 = vst.msk [vmem:[#allocation2 + $0x11] sm:$0x1] %vm278, %v260
      %298 = vst.msk [vmem:[#allocation2 + $0x29] sm:$0x1] %vm278, %v261
      %299 = vst.msk [vmem:[#allocation2 + $0x41] sm:$0x1] %vm278, %v262
      %300 = vst.msk [vmem:[#allocation2 + $0x59] sm:$0x1] %vm278, %v263
      %301 = vst.msk [vmem:[#allocation2 + $0x71] sm:$0x1] %vm278, %v264
      %302 = vst.msk [vmem:[#allocation2 + $0x89] sm:$0x1] %vm278, %v265
      %303 = vst.msk [vmem:[#allocation2 + $0xa1] sm:$0x1] %vm278, %v266
      %304 = vst.msk [vmem:[#allocation2 + $0xb9] sm:$0x1] %vm278, %v267
      %305 = vst.msk [vmem:[#allocation2 + $0xd1] sm:$0x1] %vm278, %v268
      %306 = vst.msk [vmem:[#allocation2 + $0xe9] sm:$0x1] %vm278, %v269
      %307 = vst.msk [vmem:[#allocation2 + $0x101] sm:$0x1] %vm278, %v270
      %308 = vst.msk [vmem:[#allocation2 + $0x119] sm:$0x1] %vm278, %v271
      %309 = vst.msk [vmem:[#allocation2 + $0x131] sm:$0x1] %vm278, %v272
      %310 = vst.msk [vmem:[#allocation2 + $0x149] sm:$0x1] %vm278, %v273
      %311 = vst.msk [vmem:[#allocation2 + $0x161] sm:$0x1] %vm278, %v274
      %312 = vst.msk [vmem:[#allocation2 + $0x179] sm:$0x1] %vm278, %v275
      %313 = vst.msk [vmem:[#allocation2 + $0x191] sm:$0x1] %vm278, %v276
      %314 = vst.msk [vmem:[#allocation2 + $0x1a9] sm:$0x1] %vm278, %v277
      %v315 = vld [vmem:[#allocation2] sm:$0xff]
      %v316 = vld [vmem:[#allocation2 + $0x8] sm:$0xff]
      %v317 = vld [vmem:[#allocation2 + $0x18] sm:$0xff]
      %v318 = vld [vmem:[#allocation2 + $0x20] sm:$0xff]
      %v319 = vld [vmem:[#allocation2 + $0x30] sm:$0xff]
      %v320 = vld [vmem:[#allocation2 + $0x38] sm:$0xff]
      %v321 = vld [vmem:[#allocation2 + $0x48] sm:$0xff]
      %v322 = vld [vmem:[#allocation2 + $0x50] sm:$0xff]
      %v323 = vld [vmem:[#allocation2 + $0x60] sm:$0xff]
      %v324 = vld [vmem:[#allocation2 + $0x68] sm:$0xff]
      %v325 = vld [vmem:[#allocation2 + $0x78] sm:$0xff]
      %v326 = vld [vmem:[#allocation2 + $0x80] sm:$0xff]
      %v327 = vld [vmem:[#allocation2 + $0x90] sm:$0xff]
      %v328 = vld [vmem:[#allocation2 + $0x98] sm:$0xff]
      %v329 = vld [vmem:[#allocation2 + $0xa8] sm:$0xff]
      %v330 = vld [vmem:[#allocation2 + $0xb0] sm:$0xff]
      %v331 = vld [vmem:[#allocation2 + $0xc0] sm:$0xff]
      %v332 = vld [vmem:[#allocation2 + $0xc8] sm:$0xff]
      %v333 = vld [vmem:[#allocation2 + $0xd8] sm:$0xff]
      %v334 = vld [vmem:[#allocation2 + $0xe0] sm:$0xff]
      %v335 = vld [vmem:[#allocation2 + $0xf0] sm:$0xff]
      %v336 = vld [vmem:[#allocation2 + $0xf8] sm:$0xff]
      %v337 = vld [vmem:[#allocation2 + $0x108] sm:$0xff]
      %v338 = vld [vmem:[#allocation2 + $0x110] sm:$0xff]
      %v339 = vld [vmem:[#allocation2 + $0x120] sm:$0xff]
      %v340 = vld [vmem:[#allocation2 + $0x128] sm:$0xff]
      %v341 = vld [vmem:[#allocation2 + $0x138] sm:$0xff]
      %v342 = vld [vmem:[#allocation2 + $0x140] sm:$0xff]
      %v343 = vld [vmem:[#allocation2 + $0x150] sm:$0xff]
      %v344 = vld [vmem:[#allocation2 + $0x158] sm:$0xff]
      %v345 = vld [vmem:[#allocation2 + $0x168] sm:$0xff]
      %v346 = vld [vmem:[#allocation2 + $0x170] sm:$0xff]
      %347 = vst.msk [vmem:[#allocation3] sm:$0xff] %vm204, %v315
      %348 = vst.msk [vmem:[#allocation3 + $0x8] sm:$0xff] %vm204, %v316
      %349 = vst.msk [vmem:[#allocation3 + $0x10] sm:$0xff] %vm204, %v317
      %350 = vst.msk [vmem:[#allocation3 + $0x18] sm:$0xff] %vm204, %v318
      %351 = vst.msk [vmem:[#allocation3 + $0x20] sm:$0xff] %vm204, %v319
      %352 = vst.msk [vmem:[#allocation3 + $0x28] sm:$0xff] %vm204, %v320
      %353 = vst.msk [vmem:[#allocation3 + $0x30] sm:$0xff] %vm204, %v321
      %354 = vst.msk [vmem:[#allocation3 + $0x38] sm:$0xff] %vm204, %v322
      %355 = vst.msk [vmem:[#allocation3 + $0x40] sm:$0xff] %vm204, %v323
      %356 = vst.msk [vmem:[#allocation3 + $0x48] sm:$0xff] %vm204, %v324
      %357 = vst.msk [vmem:[#allocation3 + $0x50] sm:$0xff] %vm204, %v325
      %358 = vst.msk [vmem:[#allocation3 + $0x58] sm:$0xff] %vm204, %v326
      %359 = vst.msk [vmem:[#allocation3 + $0x60] sm:$0xff] %vm204, %v327
      %360 = vst.msk [vmem:[#allocation3 + $0x68] sm:$0xff] %vm204, %v328
      %361 = vst.msk [vmem:[#allocation3 + $0x70] sm:$0xff] %vm204, %v329
      %362 = vst.msk [vmem:[#allocation3 + $0x78] sm:$0xff] %vm204, %v330
      %363 = vst.msk [vmem:[#allocation3 + $0x80] sm:$0xff] %vm204, %v331
      %364 = vst.msk [vmem:[#allocation3 + $0x88] sm:$0xff] %vm204, %v332
      %365 = vst.msk [vmem:[#allocation3 + $0x90] sm:$0xff] %vm204, %v333
      %366 = vst.msk [vmem:[#allocation3 + $0x98] sm:$0xff] %vm204, %v334
      %367 = vst.msk [vmem:[#allocation3 + $0xa0] sm:$0xff] %vm204, %v335
      %368 = vst.msk [vmem:[#allocation3 + $0xa8] sm:$0xff] %vm204, %v336
      %369 = vst.msk [vmem:[#allocation3 + $0xb0] sm:$0xff] %vm204, %v337
      %370 = vst.msk [vmem:[#allocation3 + $0xb8] sm:$0xff] %vm204, %v338
      %371 = vst.msk [vmem:[#allocation3 + $0xc0] sm:$0xff] %vm204, %v339
      %372 = vst.msk [vmem:[#allocation3 + $0xc8] sm:$0xff] %vm204, %v340
      %373 = vst.msk [vmem:[#allocation3 + $0xd0] sm:$0xff] %vm204, %v341
      %374 = vst.msk [vmem:[#allocation3 + $0xd8] sm:$0xff] %vm204, %v342
      %375 = vst.msk [vmem:[#allocation3 + $0xe0] sm:$0xff] %vm204, %v343
      %376 = vst.msk [vmem:[#allocation3 + $0xe8] sm:$0xff] %vm204, %v344
      %377 = vst.msk [vmem:[#allocation3 + $0xf0] sm:$0xff] %vm204, %v345
      %378 = vst.msk [vmem:[#allocation3 + $0xf8] sm:$0xff] %vm204, %v346
      %v379 = vld [vmem:[#allocation2 + $0x1] sm:$0xff]
      %v380 = vld [vmem:[#allocation2 + $0x9] sm:$0xff]
      %v381 = vld [vmem:[#allocation2 + $0x19] sm:$0xff]
      %v382 = vld [vmem:[#allocation2 + $0x21] sm:$0xff]
      %v383 = vld [vmem:[#allocation2 + $0x31] sm:$0xff]
      %v384 = vld [vmem:[#allocation2 + $0x39] sm:$0xff]
      %v385 = vld [vmem:[#allocation2 + $0x49] sm:$0xff]
      %v386 = vld [vmem:[#allocation2 + $0x51] sm:$0xff]
      %v387 = vld [vmem:[#allocation2 + $0x61] sm:$0xff]
      %v388 = vld [vmem:[#allocation2 + $0x69] sm:$0xff]
      %v389 = vld [vmem:[#allocation2 + $0x79] sm:$0xff]
      %v390 = vld [vmem:[#allocation2 + $0x81] sm:$0xff]
      %v391 = vld [vmem:[#allocation2 + $0x91] sm:$0xff]
      %v392 = vld [vmem:[#allocation2 + $0x99] sm:$0xff]
      %v393 = vld [vmem:[#allocation2 + $0xa9] sm:$0xff]
      %v394 = vld [vmem:[#allocation2 + $0xb1] sm:$0xff]
      %v395 = vld [vmem:[#allocation2 + $0xc1] sm:$0xff]
      %v396 = vld [vmem:[#allocation2 + $0xc9] sm:$0xff]
      %v397 = vld [vmem:[#allocation2 + $0xd9] sm:$0xff]
      %v398 = vld [vmem:[#allocation2 + $0xe1] sm:$0xff]
      %v399 = vld [vmem:[#allocation2 + $0xf1] sm:$0xff]
      %v400 = vld [vmem:[#allocation2 + $0xf9] sm:$0xff]
      %v401 = vld [vmem:[#allocation2 + $0x109] sm:$0xff]
      %v402 = vld [vmem:[#allocation2 + $0x111] sm:$0xff]
      %v403 = vld [vmem:[#allocation2 + $0x121] sm:$0xff]
      %v404 = vld [vmem:[#allocation2 + $0x129] sm:$0xff]
      %v405 = vld [vmem:[#allocation2 + $0x139] sm:$0xff]
      %v406 = vld [vmem:[#allocation2 + $0x141] sm:$0xff]
      %v407 = vld [vmem:[#allocation2 + $0x151] sm:$0xff]
      %v408 = vld [vmem:[#allocation2 + $0x159] sm:$0xff]
      %v409 = vld [vmem:[#allocation2 + $0x169] sm:$0xff]
      %v410 = vld [vmem:[#allocation2 + $0x171] sm:$0xff]
      %443 = vrot.lane.b32.xlu0 %v379, 4
      %v444 = vpop.permute.xlu0 %443
      %445 = vrot.lane.b32.xlu0 %v380, 4
      %v446 = vpop.permute.xlu0 %445
      %447 = vrot.lane.b32.xlu0 %v381, 4
      %v448 = vpop.permute.xlu0 %447
      %449 = vrot.lane.b32.xlu0 %v382, 4
      %v450 = vpop.permute.xlu0 %449
      %451 = vrot.lane.b32.xlu0 %v383, 4
      %v452 = vpop.permute.xlu0 %451
      %453 = vrot.lane.b32.xlu0 %v384, 4
      %v454 = vpop.permute.xlu0 %453
      %455 = vrot.lane.b32.xlu0 %v385, 4
      %v456 = vpop.permute.xlu0 %455
      %457 = vrot.lane.b32.xlu0 %v386, 4
      %v458 = vpop.permute.xlu0 %457
      %459 = vrot.lane.b32.xlu0 %v387, 4
      %v460 = vpop.permute.xlu0 %459
      %461 = vrot.lane.b32.xlu0 %v388, 4
      %v462 = vpop.permute.xlu0 %461
      %463 = vrot.lane.b32.xlu0 %v389, 4
      %v464 = vpop.permute.xlu0 %463
      %465 = vrot.lane.b32.xlu0 %v390, 4
      %v466 = vpop.permute.xlu0 %465
      %467 = vrot.lane.b32.xlu0 %v391, 4
      %v468 = vpop.permute.xlu0 %467
      %469 = vrot.lane.b32.xlu0 %v392, 4
      %v470 = vpop.permute.xlu0 %469
      %471 = vrot.lane.b32.xlu0 %v393, 4
      %v472 = vpop.permute.xlu0 %471
      %473 = vrot.lane.b32.xlu0 %v394, 4
      %v474 = vpop.permute.xlu0 %473
      %475 = vrot.lane.b32.xlu0 %v395, 4
      %v476 = vpop.permute.xlu0 %475
      %477 = vrot.lane.b32.xlu0 %v396, 4
      %v478 = vpop.permute.xlu0 %477
      %479 = vrot.lane.b32.xlu0 %v397, 4
      %v480 = vpop.permute.xlu0 %479
      %481 = vrot.lane.b32.xlu0 %v398, 4
      %v482 = vpop.permute.xlu0 %481
      %483 = vrot.lane.b32.xlu0 %v399, 4
      %v484 = vpop.permute.xlu0 %483
      %485 = vrot.lane.b32.xlu0 %v400, 4
      %v486 = vpop.permute.xlu0 %485
      %487 = vrot.lane.b32.xlu0 %v401, 4
      %v488 = vpop.permute.xlu0 %487
      %489 = vrot.lane.b32.xlu0 %v402, 4
      %v490 = vpop.permute.xlu0 %489
      %491 = vrot.lane.b32.xlu0 %v403, 4
      %v492 = vpop.permute.xlu0 %491
      %493 = vrot.lane.b32.xlu0 %v404, 4
      %v494 = vpop.permute.xlu0 %493
      %495 = vrot.lane.b32.xlu0 %v405, 4
      %v496 = vpop.permute.xlu0 %495
      %497 = vrot.lane.b32.xlu0 %v406, 4
      %v498 = vpop.permute.xlu0 %497
      %499 = vrot.lane.b32.xlu0 %v407, 4
      %v500 = vpop.permute.xlu0 %499
      %501 = vrot.lane.b32.xlu0 %v408, 4
      %v502 = vpop.permute.xlu0 %501
      %503 = vrot.lane.b32.xlu0 %v409, 4
      %v504 = vpop.permute.xlu0 %503
      %505 = vrot.lane.b32.xlu0 %v410, 4
      %v506 = vpop.permute.xlu0 %505
      %vm539 = vcmask 64544
      %540 = vst.msk [vmem:[#allocation3] sm:$0xff] %vm539, %v444
      %541 = vst.msk [vmem:[#allocation3 + $0x8] sm:$0xff] %vm539, %v446
      %542 = vst.msk [vmem:[#allocation3 + $0x10] sm:$0xff] %vm539, %v448
      %543 = vst.msk [vmem:[#allocation3 + $0x18] sm:$0xff] %vm539, %v450
      %544 = vst.msk [vmem:[#allocation3 + $0x20] sm:$0xff] %vm539, %v452
      %545 = vst.msk [vmem:[#allocation3 + $0x28] sm:$0xff] %vm539, %v454
      %546 = vst.msk [vmem:[#allocation3 + $0x30] sm:$0xff] %vm539, %v456
      %547 = vst.msk [vmem:[#allocation3 + $0x38] sm:$0xff] %vm539, %v458
      %548 = vst.msk [vmem:[#allocation3 + $0x40] sm:$0xff] %vm539, %v460
      %549 = vst.msk [vmem:[#allocation3 + $0x48] sm:$0xff] %vm539, %v462
      %550 = vst.msk [vmem:[#allocation3 + $0x50] sm:$0xff] %vm539, %v464
      %551 = vst.msk [vmem:[#allocation3 + $0x58] sm:$0xff] %vm539, %v466
      %552 = vst.msk [vmem:[#allocation3 + $0x60] sm:$0xff] %vm539, %v468
      %553 = vst.msk [vmem:[#allocation3 + $0x68] sm:$0xff] %vm539, %v470
      %554 = vst.msk [vmem:[#allocation3 + $0x70] sm:$0xff] %vm539, %v472
      %555 = vst.msk [vmem:[#allocation3 + $0x78] sm:$0xff] %vm539, %v474
      %556 = vst.msk [vmem:[#allocation3 + $0x80] sm:$0xff] %vm539, %v476
      %557 = vst.msk [vmem:[#allocation3 + $0x88] sm:$0xff] %vm539, %v478
      %558 = vst.msk [vmem:[#allocation3 + $0x90] sm:$0xff] %vm539, %v480
      %559 = vst.msk [vmem:[#allocation3 + $0x98] sm:$0xff] %vm539, %v482
      %560 = vst.msk [vmem:[#allocation3 + $0xa0] sm:$0xff] %vm539, %v484
      %561 = vst.msk [vmem:[#allocation3 + $0xa8] sm:$0xff] %vm539, %v486
      %562 = vst.msk [vmem:[#allocation3 + $0xb0] sm:$0xff] %vm539, %v488
      %563 = vst.msk [vmem:[#allocation3 + $0xb8] sm:$0xff] %vm539, %v490
      %564 = vst.msk [vmem:[#allocation3 + $0xc0] sm:$0xff] %vm539, %v492
      %565 = vst.msk [vmem:[#allocation3 + $0xc8] sm:$0xff] %vm539, %v494
      %566 = vst.msk [vmem:[#allocation3 + $0xd0] sm:$0xff] %vm539, %v496
      %567 = vst.msk [vmem:[#allocation3 + $0xd8] sm:$0xff] %vm539, %v498
      %568 = vst.msk [vmem:[#allocation3 + $0xe0] sm:$0xff] %vm539, %v500
      %569 = vst.msk [vmem:[#allocation3 + $0xe8] sm:$0xff] %vm539, %v502
      %570 = vst.msk [vmem:[#allocation3 + $0xf0] sm:$0xff] %vm539, %v504
      %571 = vst.msk [vmem:[#allocation3 + $0xf8] sm:$0xff] %vm539, %v506
      %v572 = vld [vmem:[#allocation2 + $0x2] sm:$0xff]
      %v573 = vld [vmem:[#allocation2 + $0xa] sm:$0xff]
      %v574 = vld [vmem:[#allocation2 + $0x1a] sm:$0xff]
      %v575 = vld [vmem:[#allocation2 + $0x22] sm:$0xff]
      %v576 = vld [vmem:[#allocation2 + $0x32] sm:$0xff]
      %v577 = vld [vmem:[#allocation2 + $0x3a] sm:$0xff]
      %v578 = vld [vmem:[#allocation2 + $0x4a] sm:$0xff]
      %v579 = vld [vmem:[#allocation2 + $0x52] sm:$0xff]
      %v580 = vld [vmem:[#allocation2 + $0x62] sm:$0xff]
      %v581 = vld [vmem:[#allocation2 + $0x6a] sm:$0xff]
      %v582 = vld [vmem:[#allocation2 + $0x7a] sm:$0xff]
      %v583 = vld [vmem:[#allocation2 + $0x82] sm:$0xff]
      %v584 = vld [vmem:[#allocation2 + $0x92] sm:$0xff]
      %v585 = vld [vmem:[#allocation2 + $0x9a] sm:$0xff]
      %v586 = vld [vmem:[#allocation2 + $0xaa] sm:$0xff]
      %v587 = vld [vmem:[#allocation2 + $0xb2] sm:$0xff]
      %v588 = vld [vmem:[#allocation2 + $0xc2] sm:$0xff]
      %v589 = vld [vmem:[#allocation2 + $0xca] sm:$0xff]
      %v590 = vld [vmem:[#allocation2 + $0xda] sm:$0xff]
      %v591 = vld [vmem:[#allocation2 + $0xe2] sm:$0xff]
      %v592 = vld [vmem:[#allocation2 + $0xf2] sm:$0xff]
      %v593 = vld [vmem:[#allocation2 + $0xfa] sm:$0xff]
      %v594 = vld [vmem:[#allocation2 + $0x10a] sm:$0xff]
      %v595 = vld [vmem:[#allocation2 + $0x112] sm:$0xff]
      %v596 = vld [vmem:[#allocation2 + $0x122] sm:$0xff]
      %v597 = vld [vmem:[#allocation2 + $0x12a] sm:$0xff]
      %v598 = vld [vmem:[#allocation2 + $0x13a] sm:$0xff]
      %v599 = vld [vmem:[#allocation2 + $0x142] sm:$0xff]
      %v600 = vld [vmem:[#allocation2 + $0x152] sm:$0xff]
      %v601 = vld [vmem:[#allocation2 + $0x15a] sm:$0xff]
      %v602 = vld [vmem:[#allocation2 + $0x16a] sm:$0xff]
      %v603 = vld [vmem:[#allocation2 + $0x172] sm:$0xff]
      %636 = vrot.lane.b32.xlu0 %v572, 8
      %v637 = vpop.permute.xlu0 %636
      %638 = vrot.lane.b32.xlu0 %v573, 8
      %v639 = vpop.permute.xlu0 %638
      %640 = vrot.lane.b32.xlu0 %v574, 8
      %v641 = vpop.permute.xlu0 %640
      %642 = vrot.lane.b32.xlu0 %v575, 8
      %v643 = vpop.permute.xlu0 %642
      %644 = vrot.lane.b32.xlu0 %v576, 8
      %v645 = vpop.permute.xlu0 %644
      %646 = vrot.lane.b32.xlu0 %v577, 8
      %v647 = vpop.permute.xlu0 %646
      %648 = vrot.lane.b32.xlu0 %v578, 8
      %v649 = vpop.permute.xlu0 %648
      %650 = vrot.lane.b32.xlu0 %v579, 8
      %v651 = vpop.permute.xlu0 %650
      %652 = vrot.lane.b32.xlu0 %v580, 8
      %v653 = vpop.permute.xlu0 %652
      %654 = vrot.lane.b32.xlu0 %v581, 8
      %v655 = vpop.permute.xlu0 %654
      %656 = vrot.lane.b32.xlu0 %v582, 8
      %v657 = vpop.permute.xlu0 %656
      %658 = vrot.lane.b32.xlu0 %v583, 8
      %v659 = vpop.permute.xlu0 %658
      %660 = vrot.lane.b32.xlu0 %v584, 8
      %v661 = vpop.permute.xlu0 %660
      %662 = vrot.lane.b32.xlu0 %v585, 8
      %v663 = vpop.permute.xlu0 %662
      %664 = vrot.lane.b32.xlu0 %v586, 8
      %v665 = vpop.permute.xlu0 %664
      %666 = vrot.lane.b32.xlu0 %v587, 8
      %v667 = vpop.permute.xlu0 %666
      %668 = vrot.lane.b32.xlu0 %v588, 8
      %v669 = vpop.permute.xlu0 %668
      %670 = vrot.lane.b32.xlu0 %v589, 8
      %v671 = vpop.permute.xlu0 %670
      %672 = vrot.lane.b32.xlu0 %v590, 8
      %v673 = vpop.permute.xlu0 %672
      %674 = vrot.lane.b32.xlu0 %v591, 8
      %v675 = vpop.permute.xlu0 %674
      %676 = vrot.lane.b32.xlu0 %v592, 8
      %v677 = vpop.permute.xlu0 %676
      %678 = vrot.lane.b32.xlu0 %v593, 8
      %v679 = vpop.permute.xlu0 %678
      %680 = vrot.lane.b32.xlu0 %v594, 8
      %v681 = vpop.permute.xlu0 %680
      %682 = vrot.lane.b32.xlu0 %v595, 8
      %v683 = vpop.permute.xlu0 %682
      %684 = vrot.lane.b32.xlu0 %v596, 8
      %v685 = vpop.permute.xlu0 %684
      %686 = vrot.lane.b32.xlu0 %v597, 8
      %v687 = vpop.permute.xlu0 %686
      %688 = vrot.lane.b32.xlu0 %v598, 8
      %v689 = vpop.permute.xlu0 %688
      %690 = vrot.lane.b32.xlu0 %v599, 8
      %v691 = vpop.permute.xlu0 %690
      %692 = vrot.lane.b32.xlu0 %v600, 8
      %v693 = vpop.permute.xlu0 %692
      %694 = vrot.lane.b32.xlu0 %v601, 8
      %v695 = vpop.permute.xlu0 %694
      %696 = vrot.lane.b32.xlu0 %v602, 8
      %v697 = vpop.permute.xlu0 %696
      %698 = vrot.lane.b32.xlu0 %v603, 8
      %v699 = vpop.permute.xlu0 %698
      %vm732 = vcmask 97344
      %733 = vst.msk [vmem:[#allocation3] sm:$0xff] %vm732, %v637
      %734 = vst.msk [vmem:[#allocation3 + $0x8] sm:$0xff] %vm732, %v639
      %735 = vst.msk [vmem:[#allocation3 + $0x10] sm:$0xff] %vm732, %v641
      %736 = vst.msk [vmem:[#allocation3 + $0x18] sm:$0xff] %vm732, %v643
      %737 = vst.msk [vmem:[#allocation3 + $0x20] sm:$0xff] %vm732, %v645
      %738 = vst.msk [vmem:[#allocation3 + $0x28] sm:$0xff] %vm732, %v647
      %739 = vst.msk [vmem:[#allocation3 + $0x30] sm:$0xff] %vm732, %v649
      %740 = vst.msk [vmem:[#allocation3 + $0x38] sm:$0xff] %vm732, %v651
      %741 = vst.msk [vmem:[#allocation3 + $0x40] sm:$0xff] %vm732, %v653
      %742 = vst.msk [vmem:[#allocation3 + $0x48] sm:$0xff] %vm732, %v655
      %743 = vst.msk [vmem:[#allocation3 + $0x50] sm:$0xff] %vm732, %v657
      %744 = vst.msk [vmem:[#allocation3 + $0x58] sm:$0xff] %vm732, %v659
      %745 = vst.msk [vmem:[#allocation3 + $0x60] sm:$0xff] %vm732, %v661
      %746 = vst.msk [vmem:[#allocation3 + $0x68] sm:$0xff] %vm732, %v663
      %747 = vst.msk [vmem:[#allocation3 + $0x70] sm:$0xff] %vm732, %v665
      %748 = vst.msk [vmem:[#allocation3 + $0x78] sm:$0xff] %vm732, %v667
      %749 = vst.msk [vmem:[#allocation3 + $0x80] sm:$0xff] %vm732, %v669
      %750 = vst.msk [vmem:[#allocation3 + $0x88] sm:$0xff] %vm732, %v671
      %751 = vst.msk [vmem:[#allocation3 + $0x90] sm:$0xff] %vm732, %v673
      %752 = vst.msk [vmem:[#allocation3 + $0x98] sm:$0xff] %vm732, %v675
      %753 = vst.msk [vmem:[#allocation3 + $0xa0] sm:$0xff] %vm732, %v677
      %754 = vst.msk [vmem:[#allocation3 + $0xa8] sm:$0xff] %vm732, %v679
      %755 = vst.msk [vmem:[#allocation3 + $0xb0] sm:$0xff] %vm732, %v681
      %756 = vst.msk [vmem:[#allocation3 + $0xb8] sm:$0xff] %vm732, %v683
      %757 = vst.msk [vmem:[#allocation3 + $0xc0] sm:$0xff] %vm732, %v685
      %758 = vst.msk [vmem:[#allocation3 + $0xc8] sm:$0xff] %vm732, %v687
      %759 = vst.msk [vmem:[#allocation3 + $0xd0] sm:$0xff] %vm732, %v689
      %760 = vst.msk [vmem:[#allocation3 + $0xd8] sm:$0xff] %vm732, %v691
      %761 = vst.msk [vmem:[#allocation3 + $0xe0] sm:$0xff] %vm732, %v693
      %762 = vst.msk [vmem:[#allocation3 + $0xe8] sm:$0xff] %vm732, %v695
      %763 = vst.msk [vmem:[#allocation3 + $0xf0] sm:$0xff] %vm732, %v697
      %764 = vst.msk [vmem:[#allocation3 + $0xf8] sm:$0xff] %vm732, %v699
      %v765 = vld [vmem:[%s203] sm:$0xff]
      %v766 = vld [vmem:[%s203 + $0x8] sm:$0xff]
      %v767 = vld [vmem:[%s203 + $0x18] sm:$0xff]
      %v768 = vld [vmem:[%s203 + $0x20] sm:$0xff]
      %v769 = vld [vmem:[%s203 + $0x30] sm:$0xff]
      %v770 = vld [vmem:[%s203 + $0x38] sm:$0xff]
      %v771 = vld [vmem:[%s203 + $0x48] sm:$0xff]
      %v772 = vld [vmem:[%s203 + $0x50] sm:$0xff]
      %v773 = vld [vmem:[%s203 + $0x60] sm:$0xff]
      %v774 = vld [vmem:[%s203 + $0x68] sm:$0xff]
      %v775 = vld [vmem:[%s203 + $0x78] sm:$0xff]
      %v776 = vld [vmem:[%s203 + $0x80] sm:$0xff]
      %v777 = vld [vmem:[%s203 + $0x90] sm:$0xff]
      %v778 = vld [vmem:[%s203 + $0x98] sm:$0xff]
      %v779 = vld [vmem:[%s203 + $0xa8] sm:$0xff]
      %v780 = vld [vmem:[%s203 + $0xb0] sm:$0xff]
      %v781 = vld [vmem:[%s203 + $0xc0] sm:$0xff]
      %v782 = vld [vmem:[%s203 + $0xc8] sm:$0xff]
      %v783 = vld [vmem:[%s203 + $0xd8] sm:$0xff]
      %v784 = vld [vmem:[%s203 + $0xe0] sm:$0xff]
      %v785 = vld [vmem:[%s203 + $0xf0] sm:$0xff]
      %v786 = vld [vmem:[%s203 + $0xf8] sm:$0xff]
      %v787 = vld [vmem:[%s203 + $0x108] sm:$0xff]
      %v788 = vld [vmem:[%s203 + $0x110] sm:$0xff]
      %v789 = vld [vmem:[%s203 + $0x120] sm:$0xff]
      %v790 = vld [vmem:[%s203 + $0x128] sm:$0xff]
      %v791 = vld [vmem:[%s203 + $0x138] sm:$0xff]
      %v792 = vld [vmem:[%s203 + $0x140] sm:$0xff]
      %v793 = vld [vmem:[%s203 + $0x150] sm:$0xff]
      %v794 = vld [vmem:[%s203 + $0x158] sm:$0xff]
      %v795 = vld [vmem:[%s203 + $0x168] sm:$0xff]
      %v796 = vld [vmem:[%s203 + $0x170] sm:$0xff]
      %829 = vrot.lane.b32.xlu0 %v765, 12
      %v830 = vpop.permute.xlu0 %829
      %831 = vrot.lane.b32.xlu0 %v766, 12
      %v832 = vpop.permute.xlu0 %831
      %833 = vrot.lane.b32.xlu0 %v767, 12
      %v834 = vpop.permute.xlu0 %833
      %835 = vrot.lane.b32.xlu0 %v768, 12
      %v836 = vpop.permute.xlu0 %835
      %837 = vrot.lane.b32.xlu0 %v769, 12
      %v838 = vpop.permute.xlu0 %837
      %839 = vrot.lane.b32.xlu0 %v770, 12
      %v840 = vpop.permute.xlu0 %839
      %841 = vrot.lane.b32.xlu0 %v771, 12
      %v842 = vpop.permute.xlu0 %841
      %843 = vrot.lane.b32.xlu0 %v772, 12
      %v844 = vpop.permute.xlu0 %843
      %845 = vrot.lane.b32.xlu0 %v773, 12
      %v846 = vpop.permute.xlu0 %845
      %847 = vrot.lane.b32.xlu0 %v774, 12
      %v848 = vpop.permute.xlu0 %847
      %849 = vrot.lane.b32.xlu0 %v775, 12
      %v850 = vpop.permute.xlu0 %849
      %851 = vrot.lane.b32.xlu0 %v776, 12
      %v852 = vpop.permute.xlu0 %851
      %853 = vrot.lane.b32.xlu0 %v777, 12
      %v854 = vpop.permute.xlu0 %853
      %855 = vrot.lane.b32.xlu0 %v778, 12
      %v856 = vpop.permute.xlu0 %855
      %857 = vrot.lane.b32.xlu0 %v779, 12
      %v858 = vpop.permute.xlu0 %857
      %859 = vrot.lane.b32.xlu0 %v780, 12
      %v860 = vpop.permute.xlu0 %859
      %861 = vrot.lane.b32.xlu0 %v781, 12
      %v862 = vpop.permute.xlu0 %861
      %863 = vrot.lane.b32.xlu0 %v782, 12
      %v864 = vpop.permute.xlu0 %863
      %865 = vrot.lane.b32.xlu0 %v783, 12
      %v866 = vpop.permute.xlu0 %865
      %867 = vrot.lane.b32.xlu0 %v784, 12
      %v868 = vpop.permute.xlu0 %867
      %869 = vrot.lane.b32.xlu0 %v785, 12
      %v870 = vpop.permute.xlu0 %869
      %871 = vrot.lane.b32.xlu0 %v786, 12
      %v872 = vpop.permute.xlu0 %871
      %873 = vrot.lane.b32.xlu0 %v787, 12
      %v874 = vpop.permute.xlu0 %873
      %875 = vrot.lane.b32.xlu0 %v788, 12
      %v876 = vpop.permute.xlu0 %875
      %877 = vrot.lane.b32.xlu0 %v789, 12
      %v878 = vpop.permute.xlu0 %877
      %879 = vrot.lane.b32.xlu0 %v790, 12
      %v880 = vpop.permute.xlu0 %879
      %881 = vrot.lane.b32.xlu0 %v791, 12
      %v882 = vpop.permute.xlu0 %881
      %883 = vrot.lane.b32.xlu0 %v792, 12
      %v884 = vpop.permute.xlu0 %883
      %885 = vrot.lane.b32.xlu0 %v793, 12
      %v886 = vpop.permute.xlu0 %885
      %887 = vrot.lane.b32.xlu0 %v794, 12
      %v888 = vpop.permute.xlu0 %887
      %889 = vrot.lane.b32.xlu0 %v795, 12
      %v890 = vpop.permute.xlu0 %889
      %891 = vrot.lane.b32.xlu0 %v796, 12
      %v892 = vpop.permute.xlu0 %891
      %vm925 = vcmask 130144
      %926 = vst.msk [vmem:[#allocation3] sm:$0xff] %vm925, %v830
      %927 = vst.msk [vmem:[#allocation3 + $0x8] sm:$0xff] %vm925, %v832
      %928 = vst.msk [vmem:[#allocation3 + $0x10] sm:$0xff] %vm925, %v834
      %929 = vst.msk [vmem:[#allocation3 + $0x18] sm:$0xff] %vm925, %v836
      %930 = vst.msk [vmem:[#allocation3 + $0x20] sm:$0xff] %vm925, %v838
      %931 = vst.msk [vmem:[#allocation3 + $0x28] sm:$0xff] %vm925, %v840
      %932 = vst.msk [vmem:[#allocation3 + $0x30] sm:$0xff] %vm925, %v842
      %933 = vst.msk [vmem:[#allocation3 + $0x38] sm:$0xff] %vm925, %v844
      %934 = vst.msk [vmem:[#allocation3 + $0x40] sm:$0xff] %vm925, %v846
      %935 = vst.msk [vmem:[#allocation3 + $0x48] sm:$0xff] %vm925, %v848
      %936 = vst.msk [vmem:[#allocation3 + $0x50] sm:$0xff] %vm925, %v850
      %937 = vst.msk [vmem:[#allocation3 + $0x58] sm:$0xff] %vm925, %v852
      %938 = vst.msk [vmem:[#allocation3 + $0x60] sm:$0xff] %vm925, %v854
      %939 = vst.msk [vmem:[#allocation3 + $0x68] sm:$0xff] %vm925, %v856
      %940 = vst.msk [vmem:[#allocation3 + $0x70] sm:$0xff] %vm925, %v858
      %941 = vst.msk [vmem:[#allocation3 + $0x78] sm:$0xff] %vm925, %v860
      %942 = vst.msk [vmem:[#allocation3 + $0x80] sm:$0xff] %vm925, %v862
      %943 = vst.msk [vmem:[#allocation3 + $0x88] sm:$0xff] %vm925, %v864
      %944 = vst.msk [vmem:[#allocation3 + $0x90] sm:$0xff] %vm925, %v866
      %945 = vst.msk [vmem:[#allocation3 + $0x98] sm:$0xff] %vm925, %v868
      %946 = vst.msk [vmem:[#allocation3 + $0xa0] sm:$0xff] %vm925, %v870
      %947 = vst.msk [vmem:[#allocation3 + $0xa8] sm:$0xff] %vm925, %v872
      %948 = vst.msk [vmem:[#allocation3 + $0xb0] sm:$0xff] %vm925, %v874
      %949 = vst.msk [vmem:[#allocation3 + $0xb8] sm:$0xff] %vm925, %v876
      %950 = vst.msk [vmem:[#allocation3 + $0xc0] sm:$0xff] %vm925, %v878
      %951 = vst.msk [vmem:[#allocation3 + $0xc8] sm:$0xff] %vm925, %v880
      %952 = vst.msk [vmem:[#allocation3 + $0xd0] sm:$0xff] %vm925, %v882
      %953 = vst.msk [vmem:[#allocation3 + $0xd8] sm:$0xff] %vm925, %v884
      %954 = vst.msk [vmem:[#allocation3 + $0xe0] sm:$0xff] %vm925, %v886
      %955 = vst.msk [vmem:[#allocation3 + $0xe8] sm:$0xff] %vm925, %v888
      %956 = vst.msk [vmem:[#allocation3 + $0xf0] sm:$0xff] %vm925, %v890
      %957 = vst.msk [vmem:[#allocation3 + $0xf8] sm:$0xff] %vm925, %v892
      %v958 = vld [vmem:[%s203 + $0x1] sm:$0xff]
      %v959 = vld [vmem:[%s203 + $0x9] sm:$0xff]
      %v960 = vld [vmem:[%s203 + $0x19] sm:$0xff]
      %v961 = vld [vmem:[%s203 + $0x21] sm:$0xff]
      %v962 = vld [vmem:[%s203 + $0x31] sm:$0xff]
      %v963 = vld [vmem:[%s203 + $0x39] sm:$0xff]
      %v964 = vld [vmem:[%s203 + $0x49] sm:$0xff]
      %v965 = vld [vmem:[%s203 + $0x51] sm:$0xff]
      %v966 = vld [vmem:[%s203 + $0x61] sm:$0xff]
      %v967 = vld [vmem:[%s203 + $0x69] sm:$0xff]
      %v968 = vld [vmem:[%s203 + $0x79] sm:$0xff]
      %v969 = vld [vmem:[%s203 + $0x81] sm:$0xff]
      %v970 = vld [vmem:[%s203 + $0x91] sm:$0xff]
      %v971 = vld [vmem:[%s203 + $0x99] sm:$0xff]
      %v972 = vld [vmem:[%s203 + $0xa9] sm:$0xff]
      %v973 = vld [vmem:[%s203 + $0xb1] sm:$0xff]
      %v974 = vld [vmem:[%s203 + $0xc1] sm:$0xff]
      %v975 = vld [vmem:[%s203 + $0xc9] sm:$0xff]
      %v976 = vld [vmem:[%s203 + $0xd9] sm:$0xff]
      %v977 = vld [vmem:[%s203 + $0xe1] sm:$0xff]
      %v978 = vld [vmem:[%s203 + $0xf1] sm:$0xff]
      %v979 = vld [vmem:[%s203 + $0xf9] sm:$0xff]
      %v980 = vld [vmem:[%s203 + $0x109] sm:$0xff]
      %v981 = vld [vmem:[%s203 + $0x111] sm:$0xff]
      %v982 = vld [vmem:[%s203 + $0x121] sm:$0xff]
      %v983 = vld [vmem:[%s203 + $0x129] sm:$0xff]
      %v984 = vld [vmem:[%s203 + $0x139] sm:$0xff]
      %v985 = vld [vmem:[%s203 + $0x141] sm:$0xff]
      %v986 = vld [vmem:[%s203 + $0x151] sm:$0xff]
      %v987 = vld [vmem:[%s203 + $0x159] sm:$0xff]
      %v988 = vld [vmem:[%s203 + $0x169] sm:$0xff]
      %v989 = vld [vmem:[%s203 + $0x171] sm:$0xff]
      %1022 = vrot.lane.b32.xlu0 %v958, 16
      %v1023 = vpop.permute.xlu0 %1022
      %1024 = vrot.lane.b32.xlu0 %v959, 16
      %v1025 = vpop.permute.xlu0 %1024
      %1026 = vrot.lane.b32.xlu0 %v960, 16
      %v1027 = vpop.permute.xlu0 %1026
      %1028 = vrot.lane.b32.xlu0 %v961, 16
      %v1029 = vpop.permute.xlu0 %1028
      %1030 = vrot.lane.b32.xlu0 %v962, 16
      %v1031 = vpop.permute.xlu0 %1030
      %1032 = vrot.lane.b32.xlu0 %v963, 16
      %v1033 = vpop.permute.xlu0 %1032
      %1034 = vrot.lane.b32.xlu0 %v964, 16
      %v1035 = vpop.permute.xlu0 %1034
      %1036 = vrot.lane.b32.xlu0 %v965, 16
      %v1037 = vpop.permute.xlu0 %1036
      %1038 = vrot.lane.b32.xlu0 %v966, 16
      %v1039 = vpop.permute.xlu0 %1038
      %1040 = vrot.lane.b32.xlu0 %v967, 16
      %v1041 = vpop.permute.xlu0 %1040
      %1042 = vrot.lane.b32.xlu0 %v968, 16
      %v1043 = vpop.permute.xlu0 %1042
      %1044 = vrot.lane.b32.xlu0 %v969, 16
      %v1045 = vpop.permute.xlu0 %1044
      %1046 = vrot.lane.b32.xlu0 %v970, 16
      %v1047 = vpop.permute.xlu0 %1046
      %1048 = vrot.lane.b32.xlu0 %v971, 16
      %v1049 = vpop.permute.xlu0 %1048
      %1050 = vrot.lane.b32.xlu0 %v972, 16
      %v1051 = vpop.permute.xlu0 %1050
      %1052 = vrot.lane.b32.xlu0 %v973, 16
      %v1053 = vpop.permute.xlu0 %1052
      %1054 = vrot.lane.b32.xlu0 %v974, 16
      %v1055 = vpop.permute.xlu0 %1054
      %1056 = vrot.lane.b32.xlu0 %v975, 16
      %v1057 = vpop.permute.xlu0 %1056
      %1058 = vrot.lane.b32.xlu0 %v976, 16
      %v1059 = vpop.permute.xlu0 %1058
      %1060 = vrot.lane.b32.xlu0 %v977, 16
      %v1061 = vpop.permute.xlu0 %1060
      %1062 = vrot.lane.b32.xlu0 %v978, 16
      %v1063 = vpop.permute.xlu0 %1062
      %1064 = vrot.lane.b32.xlu0 %v979, 16
      %v1065 = vpop.permute.xlu0 %1064
      %1066 = vrot.lane.b32.xlu0 %v980, 16
      %v1067 = vpop.permute.xlu0 %1066
      %1068 = vrot.lane.b32.xlu0 %v981, 16
      %v1069 = vpop.permute.xlu0 %1068
      %1070 = vrot.lane.b32.xlu0 %v982, 16
      %v1071 = vpop.permute.xlu0 %1070
      %1072 = vrot.lane.b32.xlu0 %v983, 16
      %v1073 = vpop.permute.xlu0 %1072
      %1074 = vrot.lane.b32.xlu0 %v984, 16
      %v1075 = vpop.permute.xlu0 %1074
      %1076 = vrot.lane.b32.xlu0 %v985, 16
      %v1077 = vpop.permute.xlu0 %1076
      %1078 = vrot.lane.b32.xlu0 %v986, 16
      %v1079 = vpop.permute.xlu0 %1078
      %1080 = vrot.lane.b32.xlu0 %v987, 16
      %v1081 = vpop.permute.xlu0 %1080
      %1082 = vrot.lane.b32.xlu0 %v988, 16
      %v1083 = vpop.permute.xlu0 %1082
      %1084 = vrot.lane.b32.xlu0 %v989, 16
      %v1085 = vpop.permute.xlu0 %1084
      %vm1118 = vcmask 162944
      %1119 = vst.msk [vmem:[#allocation3] sm:$0xff] %vm1118, %v1023
      %1120 = vst.msk [vmem:[#allocation3 + $0x8] sm:$0xff] %vm1118, %v1025
      %1121 = vst.msk [vmem:[#allocation3 + $0x10] sm:$0xff] %vm1118, %v1027
      %1122 = vst.msk [vmem:[#allocation3 + $0x18] sm:$0xff] %vm1118, %v1029
      %1123 = vst.msk [vmem:[#allocation3 + $0x20] sm:$0xff] %vm1118, %v1031
      %1124 = vst.msk [vmem:[#allocation3 + $0x28] sm:$0xff] %vm1118, %v1033
      %1125 = vst.msk [vmem:[#allocation3 + $0x30] sm:$0xff] %vm1118, %v1035
      %1126 = vst.msk [vmem:[#allocation3 + $0x38] sm:$0xff] %vm1118, %v1037
      %1127 = vst.msk [vmem:[#allocation3 + $0x40] sm:$0xff] %vm1118, %v1039
      %1128 = vst.msk [vmem:[#allocation3 + $0x48] sm:$0xff] %vm1118, %v1041
      %1129 = vst.msk [vmem:[#allocation3 + $0x50] sm:$0xff] %vm1118, %v1043
      %1130 = vst.msk [vmem:[#allocation3 + $0x58] sm:$0xff] %vm1118, %v1045
      %1131 = vst.msk [vmem:[#allocation3 + $0x60] sm:$0xff] %vm1118, %v1047
      %1132 = vst.msk [vmem:[#allocation3 + $0x68] sm:$0xff] %vm1118, %v1049
      %1133 = vst.msk [vmem:[#allocation3 + $0x70] sm:$0xff] %vm1118, %v1051
      %1134 = vst.msk [vmem:[#allocation3 + $0x78] sm:$0xff] %vm1118, %v1053
      %1135 = vst.msk [vmem:[#allocation3 + $0x80] sm:$0xff] %vm1118, %v1055
      %1136 = vst.msk [vmem:[#allocation3 + $0x88] sm:$0xff] %vm1118, %v1057
      %1137 = vst.msk [vmem:[#allocation3 + $0x90] sm:$0xff] %vm1118, %v1059
      %1138 = vst.msk [vmem:[#allocation3 + $0x98] sm:$0xff] %vm1118, %v1061
      %1139 = vst.msk [vmem:[#allocation3 + $0xa0] sm:$0xff] %vm1118, %v1063
      %1140 = vst.msk [vmem:[#allocation3 + $0xa8] sm:$0xff] %vm1118, %v1065
      %1141 = vst.msk [vmem:[#allocation3 + $0xb0] sm:$0xff] %vm1118, %v1067
      %1142 = vst.msk [vmem:[#allocation3 + $0xb8] sm:$0xff] %vm1118, %v1069
      %1143 = vst.msk [vmem:[#allocation3 + $0xc0] sm:$0xff] %vm1118, %v1071
      %1144 = vst.msk [vmem:[#allocation3 + $0xc8] sm:$0xff] %vm1118, %v1073
      %1145 = vst.msk [vmem:[#allocation3 + $0xd0] sm:$0xff] %vm1118, %v1075
      %1146 = vst.msk [vmem:[#allocation3 + $0xd8] sm:$0xff] %vm1118, %v1077
      %1147 = vst.msk [vmem:[#allocation3 + $0xe0] sm:$0xff] %vm1118, %v1079
      %1148 = vst.msk [vmem:[#allocation3 + $0xe8] sm:$0xff] %vm1118, %v1081
      %1149 = vst.msk [vmem:[#allocation3 + $0xf0] sm:$0xff] %vm1118, %v1083
      %1150 = vst.msk [vmem:[#allocation3 + $0xf8] sm:$0xff] %vm1118, %v1085
      %v1151 = vld [vmem:[%s203 + $0x2] sm:$0xff]
      %v1152 = vld [vmem:[%s203 + $0xa] sm:$0xff]
      %v1153 = vld [vmem:[%s203 + $0x1a] sm:$0xff]
      %v1154 = vld [vmem:[%s203 + $0x22] sm:$0xff]
      %v1155 = vld [vmem:[%s203 + $0x32] sm:$0xff]
      %v1156 = vld [vmem:[%s203 + $0x3a] sm:$0xff]
      %v1157 = vld [vmem:[%s203 + $0x4a] sm:$0xff]
      %v1158 = vld [vmem:[%s203 + $0x52] sm:$0xff]
      %v1159 = vld [vmem:[%s203 + $0x62] sm:$0xff]
      %v1160 = vld [vmem:[%s203 + $0x6a] sm:$0xff]
      %v1161 = vld [vmem:[%s203 + $0x7a] sm:$0xff]
      %v1162 = vld [vmem:[%s203 + $0x82] sm:$0xff]
      %v1163 = vld [vmem:[%s203 + $0x92] sm:$0xff]
      %v1164 = vld [vmem:[%s203 + $0x9a] sm:$0xff]
      %v1165 = vld [vmem:[%s203 + $0xaa] sm:$0xff]
      %v1166 = vld [vmem:[%s203 + $0xb2] sm:$0xff]
      %v1167 = vld [vmem:[%s203 + $0xc2] sm:$0xff]
      %v1168 = vld [vmem:[%s203 + $0xca] sm:$0xff]
      %v1169 = vld [vmem:[%s203 + $0xda] sm:$0xff]
      %v1170 = vld [vmem:[%s203 + $0xe2] sm:$0xff]
      %v1171 = vld [vmem:[%s203 + $0xf2] sm:$0xff]
      %v1172 = vld [vmem:[%s203 + $0xfa] sm:$0xff]
      %v1173 = vld [vmem:[%s203 + $0x10a] sm:$0xff]
      %v1174 = vld [vmem:[%s203 + $0x112] sm:$0xff]
      %v1175 = vld [vmem:[%s203 + $0x122] sm:$0xff]
      %v1176 = vld [vmem:[%s203 + $0x12a] sm:$0xff]
      %v1177 = vld [vmem:[%s203 + $0x13a] sm:$0xff]
      %v1178 = vld [vmem:[%s203 + $0x142] sm:$0xff]
      %v1179 = vld [vmem:[%s203 + $0x152] sm:$0xff]
      %v1180 = vld [vmem:[%s203 + $0x15a] sm:$0xff]
      %v1181 = vld [vmem:[%s203 + $0x16a] sm:$0xff]
      %v1182 = vld [vmem:[%s203 + $0x172] sm:$0xff]
      %1215 = vrot.lane.b32.xlu0 %v1151, 20
      %v1216 = vpop.permute.xlu0 %1215
      %1217 = vrot.lane.b32.xlu0 %v1152, 20
      %v1218 = vpop.permute.xlu0 %1217
      %1219 = vrot.lane.b32.xlu0 %v1153, 20
      %v1220 = vpop.permute.xlu0 %1219
      %1221 = vrot.lane.b32.xlu0 %v1154, 20
      %v1222 = vpop.permute.xlu0 %1221
      %1223 = vrot.lane.b32.xlu0 %v1155, 20
      %v1224 = vpop.permute.xlu0 %1223
      %1225 = vrot.lane.b32.xlu0 %v1156, 20
      %v1226 = vpop.permute.xlu0 %1225
      %1227 = vrot.lane.b32.xlu0 %v1157, 20
      %v1228 = vpop.permute.xlu0 %1227
      %1229 = vrot.lane.b32.xlu0 %v1158, 20
      %v1230 = vpop.permute.xlu0 %1229
      %1231 = vrot.lane.b32.xlu0 %v1159, 20
      %v1232 = vpop.permute.xlu0 %1231
      %1233 = vrot.lane.b32.xlu0 %v1160, 20
      %v1234 = vpop.permute.xlu0 %1233
      %1235 = vrot.lane.b32.xlu0 %v1161, 20
      %v1236 = vpop.permute.xlu0 %1235
      %1237 = vrot.lane.b32.xlu0 %v1162, 20
      %v1238 = vpop.permute.xlu0 %1237
      %1239 = vrot.lane.b32.xlu0 %v1163, 20
      %v1240 = vpop.permute.xlu0 %1239
      %1241 = vrot.lane.b32.xlu0 %v1164, 20
      %v1242 = vpop.permute.xlu0 %1241
      %1243 = vrot.lane.b32.xlu0 %v1165, 20
      %v1244 = vpop.permute.xlu0 %1243
      %1245 = vrot.lane.b32.xlu0 %v1166, 20
      %v1246 = vpop.permute.xlu0 %1245
      %1247 = vrot.lane.b32.xlu0 %v1167, 20
      %v1248 = vpop.permute.xlu0 %1247
      %1249 = vrot.lane.b32.xlu0 %v1168, 20
      %v1250 = vpop.permute.xlu0 %1249
      %1251 = vrot.lane.b32.xlu0 %v1169, 20
      %v1252 = vpop.permute.xlu0 %1251
      %1253 = vrot.lane.b32.xlu0 %v1170, 20
      %v1254 = vpop.permute.xlu0 %1253
      %1255 = vrot.lane.b32.xlu0 %v1171, 20
      %v1256 = vpop.permute.xlu0 %1255
      %1257 = vrot.lane.b32.xlu0 %v1172, 20
      %v1258 = vpop.permute.xlu0 %1257
      %1259 = vrot.lane.b32.xlu0 %v1173, 20
      %v1260 = vpop.permute.xlu0 %1259
      %1261 = vrot.lane.b32.xlu0 %v1174, 20
      %v1262 = vpop.permute.xlu0 %1261
      %1263 = vrot.lane.b32.xlu0 %v1175, 20
      %v1264 = vpop.permute.xlu0 %1263
      %1265 = vrot.lane.b32.xlu0 %v1176, 20
      %v1266 = vpop.permute.xlu0 %1265
      %1267 = vrot.lane.b32.xlu0 %v1177, 20
      %v1268 = vpop.permute.xlu0 %1267
      %1269 = vrot.lane.b32.xlu0 %v1178, 20
      %v1270 = vpop.permute.xlu0 %1269
      %1271 = vrot.lane.b32.xlu0 %v1179, 20
      %v1272 = vpop.permute.xlu0 %1271
      %1273 = vrot.lane.b32.xlu0 %v1180, 20
      %v1274 = vpop.permute.xlu0 %1273
      %1275 = vrot.lane.b32.xlu0 %v1181, 20
      %v1276 = vpop.permute.xlu0 %1275
      %1277 = vrot.lane.b32.xlu0 %v1182, 20
      %v1278 = vpop.permute.xlu0 %1277
      %vm1311 = vcmask 195744
      %1312 = vst.msk [vmem:[#allocation3] sm:$0xff] %vm1311, %v1216
      %1313 = vst.msk [vmem:[#allocation3 + $0x8] sm:$0xff] %vm1311, %v1218
      %1314 = vst.msk [vmem:[#allocation3 + $0x10] sm:$0xff] %vm1311, %v1220
      %1315 = vst.msk [vmem:[#allocation3 + $0x18] sm:$0xff] %vm1311, %v1222
      %1316 = vst.msk [vmem:[#allocation3 + $0x20] sm:$0xff] %vm1311, %v1224
      %1317 = vst.msk [vmem:[#allocation3 + $0x28] sm:$0xff] %vm1311, %v1226
      %1318 = vst.msk [vmem:[#allocation3 + $0x30] sm:$0xff] %vm1311, %v1228
      %1319 = vst.msk [vmem:[#allocation3 + $0x38] sm:$0xff] %vm1311, %v1230
      %1320 = vst.msk [vmem:[#allocation3 + $0x40] sm:$0xff] %vm1311, %v1232
      %1321 = vst.msk [vmem:[#allocation3 + $0x48] sm:$0xff] %vm1311, %v1234
      %1322 = vst.msk [vmem:[#allocation3 + $0x50] sm:$0xff] %vm1311, %v1236
      %1323 = vst.msk [vmem:[#allocation3 + $0x58] sm:$0xff] %vm1311, %v1238
      %1324 = vst.msk [vmem:[#allocation3 + $0x60] sm:$0xff] %vm1311, %v1240
      %1325 = vst.msk [vmem:[#allocation3 + $0x68] sm:$0xff] %vm1311, %v1242
      %1326 = vst.msk [vmem:[#allocation3 + $0x70] sm:$0xff] %vm1311, %v1244
      %1327 = vst.msk [vmem:[#allocation3 + $0x78] sm:$0xff] %vm1311, %v1246
      %1328 = vst.msk [vmem:[#allocation3 + $0x80] sm:$0xff] %vm1311, %v1248
      %1329 = vst.msk [vmem:[#allocation3 + $0x88] sm:$0xff] %vm1311, %v1250
      %1330 = vst.msk [vmem:[#allocation3 + $0x90] sm:$0xff] %vm1311, %v1252
      %1331 = vst.msk [vmem:[#allocation3 + $0x98] sm:$0xff] %vm1311, %v1254
      %1332 = vst.msk [vmem:[#allocation3 + $0xa0] sm:$0xff] %vm1311, %v1256
      %1333 = vst.msk [vmem:[#allocation3 + $0xa8] sm:$0xff] %vm1311, %v1258
      %1334 = vst.msk [vmem:[#allocation3 + $0xb0] sm:$0xff] %vm1311, %v1260
      %1335 = vst.msk [vmem:[#allocation3 + $0xb8] sm:$0xff] %vm1311, %v1262
      %1336 = vst.msk [vmem:[#allocation3 + $0xc0] sm:$0xff] %vm1311, %v1264
      %1337 = vst.msk [vmem:[#allocation3 + $0xc8] sm:$0xff] %vm1311, %v1266
      %1338 = vst.msk [vmem:[#allocation3 + $0xd0] sm:$0xff] %vm1311, %v1268
      %1339 = vst.msk [vmem:[#allocation3 + $0xd8] sm:$0xff] %vm1311, %v1270
      %1340 = vst.msk [vmem:[#allocation3 + $0xe0] sm:$0xff] %vm1311, %v1272
      %1341 = vst.msk [vmem:[#allocation3 + $0xe8] sm:$0xff] %vm1311, %v1274
      %1342 = vst.msk [vmem:[#allocation3 + $0xf0] sm:$0xff] %vm1311, %v1276
      %1343 = vst.msk [vmem:[#allocation3 + $0xf8] sm:$0xff] %vm1311, %v1278
      %s1344 = scalar_lea.vmem [#allocation2], 48
      %v1345 = vld [vmem:[%s1344] sm:$0xff]
      %v1346 = vld [vmem:[%s1344 + $0x8] sm:$0xff]
      %v1347 = vld [vmem:[%s1344 + $0x18] sm:$0xff]
      %v1348 = vld [vmem:[%s1344 + $0x20] sm:$0xff]
      %v1349 = vld [vmem:[%s1344 + $0x30] sm:$0xff]
      %v1350 = vld [vmem:[%s1344 + $0x38] sm:$0xff]
      %v1351 = vld [vmem:[%s1344 + $0x48] sm:$0xff]
      %v1352 = vld [vmem:[%s1344 + $0x50] sm:$0xff]
      %v1353 = vld [vmem:[%s1344 + $0x60] sm:$0xff]
      %v1354 = vld [vmem:[%s1344 + $0x68] sm:$0xff]
      %v1355 = vld [vmem:[%s1344 + $0x78] sm:$0xff]
      %v1356 = vld [vmem:[%s1344 + $0x80] sm:$0xff]
      %v1357 = vld [vmem:[%s1344 + $0x90] sm:$0xff]
      %v1358 = vld [vmem:[%s1344 + $0x98] sm:$0xff]
      %v1359 = vld [vmem:[%s1344 + $0xa8] sm:$0xff]
      %v1360 = vld [vmem:[%s1344 + $0xb0] sm:$0xff]
      %v1361 = vld [vmem:[%s1344 + $0xc0] sm:$0xff]
      %v1362 = vld [vmem:[%s1344 + $0xc8] sm:$0xff]
      %v1363 = vld [vmem:[%s1344 + $0xd8] sm:$0xff]
      %v1364 = vld [vmem:[%s1344 + $0xe0] sm:$0xff]
      %v1365 = vld [vmem:[%s1344 + $0xf0] sm:$0xff]
      %v1366 = vld [vmem:[%s1344 + $0xf8] sm:$0xff]
      %v1367 = vld [vmem:[%s1344 + $0x108] sm:$0xff]
      %v1368 = vld [vmem:[%s1344 + $0x110] sm:$0xff]
      %v1369 = vld [vmem:[%s1344 + $0x120] sm:$0xff]
      %v1370 = vld [vmem:[%s1344 + $0x128] sm:$0xff]
      %v1371 = vld [vmem:[%s1344 + $0x138] sm:$0xff]
      %v1372 = vld [vmem:[%s1344 + $0x140] sm:$0xff]
      %v1373 = vld [vmem:[%s1344 + $0x150] sm:$0xff]
      %v1374 = vld [vmem:[%s1344 + $0x158] sm:$0xff]
      %v1375 = vld [vmem:[%s1344 + $0x168] sm:$0xff]
      %v1376 = vld [vmem:[%s1344 + $0x170] sm:$0xff]
      %1409 = vrot.lane.b32.xlu0 %v1345, 24
      %v1410 = vpop.permute.xlu0 %1409
      %1411 = vrot.lane.b32.xlu0 %v1346, 24
      %v1412 = vpop.permute.xlu0 %1411
      %1413 = vrot.lane.b32.xlu0 %v1347, 24
      %v1414 = vpop.permute.xlu0 %1413
      %1415 = vrot.lane.b32.xlu0 %v1348, 24
      %v1416 = vpop.permute.xlu0 %1415
      %1417 = vrot.lane.b32.xlu0 %v1349, 24
      %v1418 = vpop.permute.xlu0 %1417
      %1419 = vrot.lane.b32.xlu0 %v1350, 24
      %v1420 = vpop.permute.xlu0 %1419
      %1421 = vrot.lane.b32.xlu0 %v1351, 24
      %v1422 = vpop.permute.xlu0 %1421
      %1423 = vrot.lane.b32.xlu0 %v1352, 24
      %v1424 = vpop.permute.xlu0 %1423
      %1425 = vrot.lane.b32.xlu0 %v1353, 24
      %v1426 = vpop.permute.xlu0 %1425
      %1427 = vrot.lane.b32.xlu0 %v1354, 24
      %v1428 = vpop.permute.xlu0 %1427
      %1429 = vrot.lane.b32.xlu0 %v1355, 24
      %v1430 = vpop.permute.xlu0 %1429
      %1431 = vrot.lane.b32.xlu0 %v1356, 24
      %v1432 = vpop.permute.xlu0 %1431
      %1433 = vrot.lane.b32.xlu0 %v1357, 24
      %v1434 = vpop.permute.xlu0 %1433
      %1435 = vrot.lane.b32.xlu0 %v1358, 24
      %v1436 = vpop.permute.xlu0 %1435
      %1437 = vrot.lane.b32.xlu0 %v1359, 24
      %v1438 = vpop.permute.xlu0 %1437
      %1439 = vrot.lane.b32.xlu0 %v1360, 24
      %v1440 = vpop.permute.xlu0 %1439
      %1441 = vrot.lane.b32.xlu0 %v1361, 24
      %v1442 = vpop.permute.xlu0 %1441
      %1443 = vrot.lane.b32.xlu0 %v1362, 24
      %v1444 = vpop.permute.xlu0 %1443
      %1445 = vrot.lane.b32.xlu0 %v1363, 24
      %v1446 = vpop.permute.xlu0 %1445
      %1447 = vrot.lane.b32.xlu0 %v1364, 24
      %v1448 = vpop.permute.xlu0 %1447
      %1449 = vrot.lane.b32.xlu0 %v1365, 24
      %v1450 = vpop.permute.xlu0 %1449
      %1451 = vrot.lane.b32.xlu0 %v1366, 24
      %v1452 = vpop.permute.xlu0 %1451
      %1453 = vrot.lane.b32.xlu0 %v1367, 24
      %v1454 = vpop.permute.xlu0 %1453
      %1455 = vrot.lane.b32.xlu0 %v1368, 24
      %v1456 = vpop.permute.xlu0 %1455
      %1457 = vrot.lane.b32.xlu0 %v1369, 24
      %v1458 = vpop.permute.xlu0 %1457
      %1459 = vrot.lane.b32.xlu0 %v1370, 24
      %v1460 = vpop.permute.xlu0 %1459
      %1461 = vrot.lane.b32.xlu0 %v1371, 24
      %v1462 = vpop.permute.xlu0 %1461
      %1463 = vrot.lane.b32.xlu0 %v1372, 24
      %v1464 = vpop.permute.xlu0 %1463
      %1465 = vrot.lane.b32.xlu0 %v1373, 24
      %v1466 = vpop.permute.xlu0 %1465
      %1467 = vrot.lane.b32.xlu0 %v1374, 24
      %v1468 = vpop.permute.xlu0 %1467
      %1469 = vrot.lane.b32.xlu0 %v1375, 24
      %v1470 = vpop.permute.xlu0 %1469
      %1471 = vrot.lane.b32.xlu0 %v1376, 24
      %v1472 = vpop.permute.xlu0 %1471
      %vm1505 = vcmask 228544
      %1506 = vst.msk [vmem:[#allocation3] sm:$0xff] %vm1505, %v1410
      %1507 = vst.msk [vmem:[#allocation3 + $0x8] sm:$0xff] %vm1505, %v1412
      %1508 = vst.msk [vmem:[#allocation3 + $0x10] sm:$0xff] %vm1505, %v1414
      %1509 = vst.msk [vmem:[#allocation3 + $0x18] sm:$0xff] %vm1505, %v1416
      %1510 = vst.msk [vmem:[#allocation3 + $0x20] sm:$0xff] %vm1505, %v1418
      %1511 = vst.msk [vmem:[#allocation3 + $0x28] sm:$0xff] %vm1505, %v1420
      %1512 = vst.msk [vmem:[#allocation3 + $0x30] sm:$0xff] %vm1505, %v1422
      %1513 = vst.msk [vmem:[#allocation3 + $0x38] sm:$0xff] %vm1505, %v1424
      %1514 = vst.msk [vmem:[#allocation3 + $0x40] sm:$0xff] %vm1505, %v1426
      %1515 = vst.msk [vmem:[#allocation3 + $0x48] sm:$0xff] %vm1505, %v1428
      %1516 = vst.msk [vmem:[#allocation3 + $0x50] sm:$0xff] %vm1505, %v1430
      %1517 = vst.msk [vmem:[#allocation3 + $0x58] sm:$0xff] %vm1505, %v1432
      %1518 = vst.msk [vmem:[#allocation3 + $0x60] sm:$0xff] %vm1505, %v1434
      %1519 = vst.msk [vmem:[#allocation3 + $0x68] sm:$0xff] %vm1505, %v1436
      %1520 = vst.msk [vmem:[#allocation3 + $0x70] sm:$0xff] %vm1505, %v1438
      %1521 = vst.msk [vmem:[#allocation3 + $0x78] sm:$0xff] %vm1505, %v1440
      %1522 = vst.msk [vmem:[#allocation3 + $0x80] sm:$0xff] %vm1505, %v1442
      %1523 = vst.msk [vmem:[#allocation3 + $0x88] sm:$0xff] %vm1505, %v1444
      %1524 = vst.msk [vmem:[#allocation3 + $0x90] sm:$0xff] %vm1505, %v1446
      %1525 = vst.msk [vmem:[#allocation3 + $0x98] sm:$0xff] %vm1505, %v1448
      %1526 = vst.msk [vmem:[#allocation3 + $0xa0] sm:$0xff] %vm1505, %v1450
      %1527 = vst.msk [vmem:[#allocation3 + $0xa8] sm:$0xff] %vm1505, %v1452
      %1528 = vst.msk [vmem:[#allocation3 + $0xb0] sm:$0xff] %vm1505, %v1454
      %1529 = vst.msk [vmem:[#allocation3 + $0xb8] sm:$0xff] %vm1505, %v1456
      %1530 = vst.msk [vmem:[#allocation3 + $0xc0] sm:$0xff] %vm1505, %v1458
      %1531 = vst.msk [vmem:[#allocation3 + $0xc8] sm:$0xff] %vm1505, %v1460
      %1532 = vst.msk [vmem:[#allocation3 + $0xd0] sm:$0xff] %vm1505, %v1462
      %1533 = vst.msk [vmem:[#allocation3 + $0xd8] sm:$0xff] %vm1505, %v1464
      %1534 = vst.msk [vmem:[#allocation3 + $0xe0] sm:$0xff] %vm1505, %v1466
      %1535 = vst.msk [vmem:[#allocation3 + $0xe8] sm:$0xff] %vm1505, %v1468
      %1536 = vst.msk [vmem:[#allocation3 + $0xf0] sm:$0xff] %vm1505, %v1470
      %1537 = vst.msk [vmem:[#allocation3 + $0xf8] sm:$0xff] %vm1505, %v1472
      %v1538 = vld [vmem:[%s1344 + $0x1] sm:$0xff]
      %v1539 = vld [vmem:[%s1344 + $0x9] sm:$0xff]
      %v1540 = vld [vmem:[%s1344 + $0x19] sm:$0xff]
      %v1541 = vld [vmem:[%s1344 + $0x21] sm:$0xff]
      %v1542 = vld [vmem:[%s1344 + $0x31] sm:$0xff]
      %v1543 = vld [vmem:[%s1344 + $0x39] sm:$0xff]
      %v1544 = vld [vmem:[%s1344 + $0x49] sm:$0xff]
      %v1545 = vld [vmem:[%s1344 + $0x51] sm:$0xff]
      %v1546 = vld [vmem:[%s1344 + $0x61] sm:$0xff]
      %v1547 = vld [vmem:[%s1344 + $0x69] sm:$0xff]
      %v1548 = vld [vmem:[%s1344 + $0x79] sm:$0xff]
      %v1549 = vld [vmem:[%s1344 + $0x81] sm:$0xff]
      %v1550 = vld [vmem:[%s1344 + $0x91] sm:$0xff]
      %v1551 = vld [vmem:[%s1344 + $0x99] sm:$0xff]
      %v1552 = vld [vmem:[%s1344 + $0xa9] sm:$0xff]
      %v1553 = vld [vmem:[%s1344 + $0xb1] sm:$0xff]
      %v1554 = vld [vmem:[%s1344 + $0xc1] sm:$0xff]
      %v1555 = vld [vmem:[%s1344 + $0xc9] sm:$0xff]
      %v1556 = vld [vmem:[%s1344 + $0xd9] sm:$0xff]
      %v1557 = vld [vmem:[%s1344 + $0xe1] sm:$0xff]
      %v1558 = vld [vmem:[%s1344 + $0xf1] sm:$0xff]
      %v1559 = vld [vmem:[%s1344 + $0xf9] sm:$0xff]
      %v1560 = vld [vmem:[%s1344 + $0x109] sm:$0xff]
      %v1561 = vld [vmem:[%s1344 + $0x111] sm:$0xff]
      %v1562 = vld [vmem:[%s1344 + $0x121] sm:$0xff]
      %v1563 = vld [vmem:[%s1344 + $0x129] sm:$0xff]
      %v1564 = vld [vmem:[%s1344 + $0x139] sm:$0xff]
      %v1565 = vld [vmem:[%s1344 + $0x141] sm:$0xff]
      %v1566 = vld [vmem:[%s1344 + $0x151] sm:$0xff]
      %v1567 = vld [vmem:[%s1344 + $0x159] sm:$0xff]
      %v1568 = vld [vmem:[%s1344 + $0x169] sm:$0xff]
      %v1569 = vld [vmem:[%s1344 + $0x171] sm:$0xff]
      %1602 = vrot.lane.b32.xlu0 %v1538, 28
      %v1603 = vpop.permute.xlu0 %1602
      %1604 = vrot.lane.b32.xlu0 %v1539, 28
      %v1605 = vpop.permute.xlu0 %1604
      %1606 = vrot.lane.b32.xlu0 %v1540, 28
      %v1607 = vpop.permute.xlu0 %1606
      %1608 = vrot.lane.b32.xlu0 %v1541, 28
      %v1609 = vpop.permute.xlu0 %1608
      %1610 = vrot.lane.b32.xlu0 %v1542, 28
      %v1611 = vpop.permute.xlu0 %1610
      %1612 = vrot.lane.b32.xlu0 %v1543, 28
      %v1613 = vpop.permute.xlu0 %1612
      %1614 = vrot.lane.b32.xlu0 %v1544, 28
      %v1615 = vpop.permute.xlu0 %1614
      %1616 = vrot.lane.b32.xlu0 %v1545, 28
      %v1617 = vpop.permute.xlu0 %1616
      %1618 = vrot.lane.b32.xlu0 %v1546, 28
      %v1619 = vpop.permute.xlu0 %1618
      %1620 = vrot.lane.b32.xlu0 %v1547, 28
      %v1621 = vpop.permute.xlu0 %1620
      %1622 = vrot.lane.b32.xlu0 %v1548, 28
      %v1623 = vpop.permute.xlu0 %1622
      %1624 = vrot.lane.b32.xlu0 %v1549, 28
      %v1625 = vpop.permute.xlu0 %1624
      %1626 = vrot.lane.b32.xlu0 %v1550, 28
      %v1627 = vpop.permute.xlu0 %1626
      %1628 = vrot.lane.b32.xlu0 %v1551, 28
      %v1629 = vpop.permute.xlu0 %1628
      %1630 = vrot.lane.b32.xlu0 %v1552, 28
      %v1631 = vpop.permute.xlu0 %1630
      %1632 = vrot.lane.b32.xlu0 %v1553, 28
      %v1633 = vpop.permute.xlu0 %1632
      %1634 = vrot.lane.b32.xlu0 %v1554, 28
      %v1635 = vpop.permute.xlu0 %1634
      %1636 = vrot.lane.b32.xlu0 %v1555, 28
      %v1637 = vpop.permute.xlu0 %1636
      %1638 = vrot.lane.b32.xlu0 %v1556, 28
      %v1639 = vpop.permute.xlu0 %1638
      %1640 = vrot.lane.b32.xlu0 %v1557, 28
      %v1641 = vpop.permute.xlu0 %1640
      %1642 = vrot.lane.b32.xlu0 %v1558, 28
      %v1643 = vpop.permute.xlu0 %1642
      %1644 = vrot.lane.b32.xlu0 %v1559, 28
      %v1645 = vpop.permute.xlu0 %1644
      %1646 = vrot.lane.b32.xlu0 %v1560, 28
      %v1647 = vpop.permute.xlu0 %1646
      %1648 = vrot.lane.b32.xlu0 %v1561, 28
      %v1649 = vpop.permute.xlu0 %1648
      %1650 = vrot.lane.b32.xlu0 %v1562, 28
      %v1651 = vpop.permute.xlu0 %1650
      %1652 = vrot.lane.b32.xlu0 %v1563, 28
      %v1653 = vpop.permute.xlu0 %1652
      %1654 = vrot.lane.b32.xlu0 %v1564, 28
      %v1655 = vpop.permute.xlu0 %1654
      %1656 = vrot.lane.b32.xlu0 %v1565, 28
      %v1657 = vpop.permute.xlu0 %1656
      %1658 = vrot.lane.b32.xlu0 %v1566, 28
      %v1659 = vpop.permute.xlu0 %1658
      %1660 = vrot.lane.b32.xlu0 %v1567, 28
      %v1661 = vpop.permute.xlu0 %1660
      %1662 = vrot.lane.b32.xlu0 %v1568, 28
      %v1663 = vpop.permute.xlu0 %1662
      %1664 = vrot.lane.b32.xlu0 %v1569, 28
      %v1665 = vpop.permute.xlu0 %1664
      %vm1698 = vcmask 261344
      %1699 = vst.msk [vmem:[#allocation3] sm:$0xff] %vm1698, %v1603
      %1700 = vst.msk [vmem:[#allocation3 + $0x8] sm:$0xff] %vm1698, %v1605
      %1701 = vst.msk [vmem:[#allocation3 + $0x10] sm:$0xff] %vm1698, %v1607
      %1702 = vst.msk [vmem:[#allocation3 + $0x18] sm:$0xff] %vm1698, %v1609
      %1703 = vst.msk [vmem:[#allocation3 + $0x20] sm:$0xff] %vm1698, %v1611
      %1704 = vst.msk [vmem:[#allocation3 + $0x28] sm:$0xff] %vm1698, %v1613
      %1705 = vst.msk [vmem:[#allocation3 + $0x30] sm:$0xff] %vm1698, %v1615
      %1706 = vst.msk [vmem:[#allocation3 + $0x38] sm:$0xff] %vm1698, %v1617
      %1707 = vst.msk [vmem:[#allocation3 + $0x40] sm:$0xff] %vm1698, %v1619
      %1708 = vst.msk [vmem:[#allocation3 + $0x48] sm:$0xff] %vm1698, %v1621
      %1709 = vst.msk [vmem:[#allocation3 + $0x50] sm:$0xff] %vm1698, %v1623
      %1710 = vst.msk [vmem:[#allocation3 + $0x58] sm:$0xff] %vm1698, %v1625
      %1711 = vst.msk [vmem:[#allocation3 + $0x60] sm:$0xff] %vm1698, %v1627
      %1712 = vst.msk [vmem:[#allocation3 + $0x68] sm:$0xff] %vm1698, %v1629
      %1713 = vst.msk [vmem:[#allocation3 + $0x70] sm:$0xff] %vm1698, %v1631
      %1714 = vst.msk [vmem:[#allocation3 + $0x78] sm:$0xff] %vm1698, %v1633
      %1715 = vst.msk [vmem:[#allocation3 + $0x80] sm:$0xff] %vm1698, %v1635
      %1716 = vst.msk [vmem:[#allocation3 + $0x88] sm:$0xff] %vm1698, %v1637
      %1717 = vst.msk [vmem:[#allocation3 + $0x90] sm:$0xff] %vm1698, %v1639
      %1718 = vst.msk [vmem:[#allocation3 + $0x98] sm:$0xff] %vm1698, %v1641
      %1719 = vst.msk [vmem:[#allocation3 + $0xa0] sm:$0xff] %vm1698, %v1643
      %1720 = vst.msk [vmem:[#allocation3 + $0xa8] sm:$0xff] %vm1698, %v1645
      %1721 = vst.msk [vmem:[#allocation3 + $0xb0] sm:$0xff] %vm1698, %v1647
      %1722 = vst.msk [vmem:[#allocation3 + $0xb8] sm:$0xff] %vm1698, %v1649
      %1723 = vst.msk [vmem:[#allocation3 + $0xc0] sm:$0xff] %vm1698, %v1651
      %1724 = vst.msk [vmem:[#allocation3 + $0xc8] sm:$0xff] %vm1698, %v1653
      %1725 = vst.msk [vmem:[#allocation3 + $0xd0] sm:$0xff] %vm1698, %v1655
      %1726 = vst.msk [vmem:[#allocation3 + $0xd8] sm:$0xff] %vm1698, %v1657
      %1727 = vst.msk [vmem:[#allocation3 + $0xe0] sm:$0xff] %vm1698, %v1659
      %1728 = vst.msk [vmem:[#allocation3 + $0xe8] sm:$0xff] %vm1698, %v1661
      %1729 = vst.msk [vmem:[#allocation3 + $0xf0] sm:$0xff] %vm1698, %v1663
      %1730 = vst.msk [vmem:[#allocation3 + $0xf8] sm:$0xff] %vm1698, %v1665
      %v1731 = vld [vmem:[%s1344 + $0x2] sm:$0xff]
      %v1732 = vld [vmem:[%s1344 + $0xa] sm:$0xff]
      %v1733 = vld [vmem:[%s1344 + $0x1a] sm:$0xff]
      %v1734 = vld [vmem:[%s1344 + $0x22] sm:$0xff]
      %v1735 = vld [vmem:[%s1344 + $0x32] sm:$0xff]
      %v1736 = vld [vmem:[%s1344 + $0x3a] sm:$0xff]
      %v1737 = vld [vmem:[%s1344 + $0x4a] sm:$0xff]
      %v1738 = vld [vmem:[%s1344 + $0x52] sm:$0xff]
      %v1739 = vld [vmem:[%s1344 + $0x62] sm:$0xff]
      %v1740 = vld [vmem:[%s1344 + $0x6a] sm:$0xff]
      %v1741 = vld [vmem:[%s1344 + $0x7a] sm:$0xff]
      %v1742 = vld [vmem:[%s1344 + $0x82] sm:$0xff]
      %v1743 = vld [vmem:[%s1344 + $0x92] sm:$0xff]
      %v1744 = vld [vmem:[%s1344 + $0x9a] sm:$0xff]
      %v1745 = vld [vmem:[%s1344 + $0xaa] sm:$0xff]
      %v1746 = vld [vmem:[%s1344 + $0xb2] sm:$0xff]
      %v1747 = vld [vmem:[%s1344 + $0xc2] sm:$0xff]
      %v1748 = vld [vmem:[%s1344 + $0xca] sm:$0xff]
      %v1749 = vld [vmem:[%s1344 + $0xda] sm:$0xff]
      %v1750 = vld [vmem:[%s1344 + $0xe2] sm:$0xff]
      %v1751 = vld [vmem:[%s1344 + $0xf2] sm:$0xff]
      %v1752 = vld [vmem:[%s1344 + $0xfa] sm:$0xff]
      %v1753 = vld [vmem:[%s1344 + $0x10a] sm:$0xff]
      %v1754 = vld [vmem:[%s1344 + $0x112] sm:$0xff]
      %v1755 = vld [vmem:[%s1344 + $0x122] sm:$0xff]
      %v1756 = vld [vmem:[%s1344 + $0x12a] sm:$0xff]
      %v1757 = vld [vmem:[%s1344 + $0x13a] sm:$0xff]
      %v1758 = vld [vmem:[%s1344 + $0x142] sm:$0xff]
      %v1759 = vld [vmem:[%s1344 + $0x152] sm:$0xff]
      %v1760 = vld [vmem:[%s1344 + $0x15a] sm:$0xff]
      %v1761 = vld [vmem:[%s1344 + $0x16a] sm:$0xff]
      %v1762 = vld [vmem:[%s1344 + $0x172] sm:$0xff]
      %1795 = vrot.lane.b32.xlu0 %v1731, 32
      %v1796 = vpop.permute.xlu0 %1795
      %1797 = vrot.lane.b32.xlu0 %v1732, 32
      %v1798 = vpop.permute.xlu0 %1797
      %1799 = vrot.lane.b32.xlu0 %v1733, 32
      %v1800 = vpop.permute.xlu0 %1799
      %1801 = vrot.lane.b32.xlu0 %v1734, 32
      %v1802 = vpop.permute.xlu0 %1801
      %1803 = vrot.lane.b32.xlu0 %v1735, 32
      %v1804 = vpop.permute.xlu0 %1803
      %1805 = vrot.lane.b32.xlu0 %v1736, 32
      %v1806 = vpop.permute.xlu0 %1805
      %1807 = vrot.lane.b32.xlu0 %v1737, 32
      %v1808 = vpop.permute.xlu0 %1807
      %1809 = vrot.lane.b32.xlu0 %v1738, 32
      %v1810 = vpop.permute.xlu0 %1809
      %1811 = vrot.lane.b32.xlu0 %v1739, 32
      %v1812 = vpop.permute.xlu0 %1811
      %1813 = vrot.lane.b32.xlu0 %v1740, 32
      %v1814 = vpop.permute.xlu0 %1813
      %1815 = vrot.lane.b32.xlu0 %v1741, 32
      %v1816 = vpop.permute.xlu0 %1815
      %1817 = vrot.lane.b32.xlu0 %v1742, 32
      %v1818 = vpop.permute.xlu0 %1817
      %1819 = vrot.lane.b32.xlu0 %v1743, 32
      %v1820 = vpop.permute.xlu0 %1819
      %1821 = vrot.lane.b32.xlu0 %v1744, 32
      %v1822 = vpop.permute.xlu0 %1821
      %1823 = vrot.lane.b32.xlu0 %v1745, 32
      %v1824 = vpop.permute.xlu0 %1823
      %1825 = vrot.lane.b32.xlu0 %v1746, 32
      %v1826 = vpop.permute.xlu0 %1825
      %1827 = vrot.lane.b32.xlu0 %v1747, 32
      %v1828 = vpop.permute.xlu0 %1827
      %1829 = vrot.lane.b32.xlu0 %v1748, 32
      %v1830 = vpop.permute.xlu0 %1829
      %1831 = vrot.lane.b32.xlu0 %v1749, 32
      %v1832 = vpop.permute.xlu0 %1831
      %1833 = vrot.lane.b32.xlu0 %v1750, 32
      %v1834 = vpop.permute.xlu0 %1833
      %1835 = vrot.lane.b32.xlu0 %v1751, 32
      %v1836 = vpop.permute.xlu0 %1835
      %1837 = vrot.lane.b32.xlu0 %v1752, 32
      %v1838 = vpop.permute.xlu0 %1837
      %1839 = vrot.lane.b32.xlu0 %v1753, 32
      %v1840 = vpop.permute.xlu0 %1839
      %1841 = vrot.lane.b32.xlu0 %v1754, 32
      %v1842 = vpop.permute.xlu0 %1841
      %1843 = vrot.lane.b32.xlu0 %v1755, 32
      %v1844 = vpop.permute.xlu0 %1843
      %1845 = vrot.lane.b32.xlu0 %v1756, 32
      %v1846 = vpop.permute.xlu0 %1845
      %1847 = vrot.lane.b32.xlu0 %v1757, 32
      %v1848 = vpop.permute.xlu0 %1847
      %1849 = vrot.lane.b32.xlu0 %v1758, 32
      %v1850 = vpop.permute.xlu0 %1849
      %1851 = vrot.lane.b32.xlu0 %v1759, 32
      %v1852 = vpop.permute.xlu0 %1851
      %1853 = vrot.lane.b32.xlu0 %v1760, 32
      %v1854 = vpop.permute.xlu0 %1853
      %1855 = vrot.lane.b32.xlu0 %v1761, 32
      %v1856 = vpop.permute.xlu0 %1855
      %1857 = vrot.lane.b32.xlu0 %v1762, 32
      %v1858 = vpop.permute.xlu0 %1857
      %vm1891 = vcmask 294144
      %1892 = vst.msk [vmem:[#allocation3] sm:$0xff] %vm1891, %v1796
      %1893 = vst.msk [vmem:[#allocation3 + $0x8] sm:$0xff] %vm1891, %v1798
      %1894 = vst.msk [vmem:[#allocation3 + $0x10] sm:$0xff] %vm1891, %v1800
      %1895 = vst.msk [vmem:[#allocation3 + $0x18] sm:$0xff] %vm1891, %v1802
      %1896 = vst.msk [vmem:[#allocation3 + $0x20] sm:$0xff] %vm1891, %v1804
      %1897 = vst.msk [vmem:[#allocation3 + $0x28] sm:$0xff] %vm1891, %v1806
      %1898 = vst.msk [vmem:[#allocation3 + $0x30] sm:$0xff] %vm1891, %v1808
      %1899 = vst.msk [vmem:[#allocation3 + $0x38] sm:$0xff] %vm1891, %v1810
      %1900 = vst.msk [vmem:[#allocation3 + $0x40] sm:$0xff] %vm1891, %v1812
      %1901 = vst.msk [vmem:[#allocation3 + $0x48] sm:$0xff] %vm1891, %v1814
      %1902 = vst.msk [vmem:[#allocation3 + $0x50] sm:$0xff] %vm1891, %v1816
      %1903 = vst.msk [vmem:[#allocation3 + $0x58] sm:$0xff] %vm1891, %v1818
      %1904 = vst.msk [vmem:[#allocation3 + $0x60] sm:$0xff] %vm1891, %v1820
      %1905 = vst.msk [vmem:[#allocation3 + $0x68] sm:$0xff] %vm1891, %v1822
      %1906 = vst.msk [vmem:[#allocation3 + $0x70] sm:$0xff] %vm1891, %v1824
      %1907 = vst.msk [vmem:[#allocation3 + $0x78] sm:$0xff] %vm1891, %v1826
      %1908 = vst.msk [vmem:[#allocation3 + $0x80] sm:$0xff] %vm1891, %v1828
      %1909 = vst.msk [vmem:[#allocation3 + $0x88] sm:$0xff] %vm1891, %v1830
      %1910 = vst.msk [vmem:[#allocation3 + $0x90] sm:$0xff] %vm1891, %v1832
      %1911 = vst.msk [vmem:[#allocation3 + $0x98] sm:$0xff] %vm1891, %v1834
      %1912 = vst.msk [vmem:[#allocation3 + $0xa0] sm:$0xff] %vm1891, %v1836
      %1913 = vst.msk [vmem:[#allocation3 + $0xa8] sm:$0xff] %vm1891, %v1838
      %1914 = vst.msk [vmem:[#allocation3 + $0xb0] sm:$0xff] %vm1891, %v1840
      %1915 = vst.msk [vmem:[#allocation3 + $0xb8] sm:$0xff] %vm1891, %v1842
      %1916 = vst.msk [vmem:[#allocation3 + $0xc0] sm:$0xff] %vm1891, %v1844
      %1917 = vst.msk [vmem:[#allocation3 + $0xc8] sm:$0xff] %vm1891, %v1846
      %1918 = vst.msk [vmem:[#allocation3 + $0xd0] sm:$0xff] %vm1891, %v1848
      %1919 = vst.msk [vmem:[#allocation3 + $0xd8] sm:$0xff] %vm1891, %v1850
      %1920 = vst.msk [vmem:[#allocation3 + $0xe0] sm:$0xff] %vm1891, %v1852
      %1921 = vst.msk [vmem:[#allocation3 + $0xe8] sm:$0xff] %vm1891, %v1854
      %1922 = vst.msk [vmem:[#allocation3 + $0xf0] sm:$0xff] %vm1891, %v1856
      %1923 = vst.msk [vmem:[#allocation3 + $0xf8] sm:$0xff] %vm1891, %v1858
      %v1924 = vld [vmem:[#allocation3] sm:$0xff]
      %v1925 = vld [vmem:[#allocation3 + $0x8] sm:$0xff]
      %v1926 = vld [vmem:[#allocation3 + $0x10] sm:$0xff]
      %v1927 = vld [vmem:[#allocation3 + $0x18] sm:$0xff]
      %v1928 = vld [vmem:[#allocation3 + $0x20] sm:$0xff]
      %v1929 = vld [vmem:[#allocation3 + $0x28] sm:$0xff]
      %v1930 = vld [vmem:[#allocation3 + $0x30] sm:$0xff]
      %v1931 = vld [vmem:[#allocation3 + $0x38] sm:$0xff]
      %v1932 = vld [vmem:[#allocation3 + $0x40] sm:$0xff]
      %v1933 = vld [vmem:[#allocation3 + $0x48] sm:$0xff]
      %v1934 = vld [vmem:[#allocation3 + $0x50] sm:$0xff]
      %v1935 = vld [vmem:[#allocation3 + $0x58] sm:$0xff]
      %v1936 = vld [vmem:[#allocation3 + $0x60] sm:$0xff]
      %v1937 = vld [vmem:[#allocation3 + $0x68] sm:$0xff]
      %v1938 = vld [vmem:[#allocation3 + $0x70] sm:$0xff]
      %v1939 = vld [vmem:[#allocation3 + $0x78] sm:$0xff]
      %v1940 = vld [vmem:[#allocation3 + $0x80] sm:$0xff]
      %v1941 = vld [vmem:[#allocation3 + $0x88] sm:$0xff]
      %v1942 = vld [vmem:[#allocation3 + $0x90] sm:$0xff]
      %v1943 = vld [vmem:[#allocation3 + $0x98] sm:$0xff]
      %v1944 = vld [vmem:[#allocation3 + $0xa0] sm:$0xff]
      %v1945 = vld [vmem:[#allocation3 + $0xa8] sm:$0xff]
      %v1946 = vld [vmem:[#allocation3 + $0xb0] sm:$0xff]
      %v1947 = vld [vmem:[#allocation3 + $0xb8] sm:$0xff]
      %v1948 = vld [vmem:[#allocation3 + $0xc0] sm:$0xff]
      %v1949 = vld [vmem:[#allocation3 + $0xc8] sm:$0xff]
      %v1950 = vld [vmem:[#allocation3 + $0xd0] sm:$0xff]
      %v1951 = vld [vmem:[#allocation3 + $0xd8] sm:$0xff]
      %v1952 = vld [vmem:[#allocation3 + $0xe0] sm:$0xff]
      %v1953 = vld [vmem:[#allocation3 + $0xe8] sm:$0xff]
      %v1954 = vld [vmem:[#allocation3 + $0xf0] sm:$0xff]
      %v1955 = vld [vmem:[#allocation3 + $0xf8] sm:$0xff]
      %v1956 = vld [vmem:[%s1] sm:$0xff]
      %v1957 = vld [vmem:[%s1 + $0x8] sm:$0xff]
      %v1958 = vld [vmem:[%s1 + $0x10] sm:$0xff]
      %v1959 = vld [vmem:[%s1 + $0x18] sm:$0xff]
      %v1960 = vld [vmem:[%s1 + $0x20] sm:$0xf]
      %vm1961 = vcmask 293888
      %v1963 = vsel %vm1961, %v1924, 0
      %v1966 = vsel %vm1961, %v1925, 0
      %v1969 = vsel %vm1961, %v1926, 0
      %v1972 = vsel %vm1961, %v1927, 0
      %v1975 = vsel %vm1961, %v1928, 0
      %v1978 = vsel %vm1961, %v1929, 0
      %v1981 = vsel %vm1961, %v1930, 0
      %v1984 = vsel %vm1961, %v1931, 0
      %v1987 = vsel %vm1961, %v1932, 0
      %v1990 = vsel %vm1961, %v1933, 0
      %v1993 = vsel %vm1961, %v1934, 0
      %v1996 = vsel %vm1961, %v1935, 0
      %v1999 = vsel %vm1961, %v1936, 0
      %v2002 = vsel %vm1961, %v1937, 0
      %v2005 = vsel %vm1961, %v1938, 0
      %v2008 = vsel %vm1961, %v1939, 0
      %v2011 = vsel %vm1961, %v1940, 0
      %v2014 = vsel %vm1961, %v1941, 0
      %v2017 = vsel %vm1961, %v1942, 0
      %v2020 = vsel %vm1961, %v1943, 0
      %v2023 = vsel %vm1961, %v1944, 0
      %v2026 = vsel %vm1961, %v1945, 0
      %v2029 = vsel %vm1961, %v1946, 0
      %v2032 = vsel %vm1961, %v1947, 0
      %v2035 = vsel %vm1961, %v1948, 0
      %v2038 = vsel %vm1961, %v1949, 0
      %v2041 = vsel %vm1961, %v1950, 0
      %v2044 = vsel %vm1961, %v1951, 0
      %v2047 = vsel %vm1961, %v1952, 0
      %v2050 = vsel %vm1961, %v1953, 0
      %v2053 = vsel %vm1961, %v1954, 0
      %v2056 = vsel %vm1961, %v1955, 0
      %vm2058 = vcmask 1043456
      %v2060 = vsel %vm2058, %v1960, 0
      %2062 = vmatpush.msra.mxu0 0.0
      %2063 = vmatpush.msra.mxu0 0.0
      %2064 = vmatpush.msra.mxu0 0.0
      %2065 = vmatpush.msra.mxu0 0.0
      %2066 = vmatpush.msra.mxu0 0.0
      %2067 = vmatpush.msra.mxu0 0.0
      %2068 = vmatpush.msra.mxu0 0.0
      %2069 = vmatpush.msra.mxu0 0.0
      %2070 = vmatpush.msra.mxu0 0.0
      %2071 = vmatpush.msra.mxu0 0.0
      %2072 = vmatpush.msra.mxu0 0.0
      %2073 = vmatpush.msra.mxu0 %v2060
      %2074 = vmatpush.msra.mxu0 %v1959
      %2075 = vmatpush.msra.mxu0 %v1958
      %2076 = vmatpush.msra.mxu0 %v1957
      %2077 = vmatpush.msra.mxu0 %v1956
      %2078 = vmatmul.f32.gmra.mxu0 %v1963
      %v2079 = vpop.f32.mrf.mxu0
      %v2080 = vadd.f32 0.0, %v2079
      %2081 = vmatmul.f32.gmra.mxu0 %v1966
      %v2082 = vpop.f32.mrf.mxu0
      %v2083 = vadd.f32 0.0, %v2082
      %2084 = vmatmul.f32.gmra.mxu0 %v1969
      %v2085 = vpop.f32.mrf.mxu0
      %v2086 = vadd.f32 0.0, %v2085
      %2087 = vmatmul.f32.gmra.mxu0 %v1972
      %v2088 = vpop.f32.mrf.mxu0
      %v2089 = vadd.f32 0.0, %v2088
      %2090 = vmatmul.f32.gmra.mxu0 %v1975
      %v2091 = vpop.f32.mrf.mxu0
      %v2092 = vadd.f32 0.0, %v2091
      %2093 = vmatmul.f32.gmra.mxu0 %v1978
      %v2094 = vpop.f32.mrf.mxu0
      %v2095 = vadd.f32 0.0, %v2094
      %2096 = vmatmul.f32.gmra.mxu0 %v1981
      %v2097 = vpop.f32.mrf.mxu0
      %v2098 = vadd.f32 0.0, %v2097
      %2099 = vmatmul.f32.gmra.mxu0 %v1984
      %v2100 = vpop.f32.mrf.mxu0
      %v2101 = vadd.f32 0.0, %v2100
      %2102 = vmatmul.f32.gmra.mxu0 %v1987
      %v2103 = vpop.f32.mrf.mxu0
      %v2104 = vadd.f32 0.0, %v2103
      %2105 = vmatmul.f32.gmra.mxu0 %v1990
      %v2106 = vpop.f32.mrf.mxu0
      %v2107 = vadd.f32 0.0, %v2106
      %2108 = vmatmul.f32.gmra.mxu0 %v1993
      %v2109 = vpop.f32.mrf.mxu0
      %v2110 = vadd.f32 0.0, %v2109
      %2111 = vmatmul.f32.gmra.mxu0 %v1996
      %v2112 = vpop.f32.mrf.mxu0
      %v2113 = vadd.f32 0.0, %v2112
      %2114 = vmatmul.f32.gmra.mxu0 %v1999
      %v2115 = vpop.f32.mrf.mxu0
      %v2116 = vadd.f32 0.0, %v2115
      %2117 = vmatmul.f32.gmra.mxu0 %v2002
      %v2118 = vpop.f32.mrf.mxu0
      %v2119 = vadd.f32 0.0, %v2118
      %2120 = vmatmul.f32.gmra.mxu0 %v2005
      %v2121 = vpop.f32.mrf.mxu0
      %v2122 = vadd.f32 0.0, %v2121
      %2123 = vmatmul.f32.gmra.mxu0 %v2008
      %v2124 = vpop.f32.mrf.mxu0
      %v2125 = vadd.f32 0.0, %v2124
      %2126 = vmatmul.f32.gmra.mxu0 %v2011
      %v2127 = vpop.f32.mrf.mxu0
      %v2128 = vadd.f32 0.0, %v2127
      %2129 = vmatmul.f32.gmra.mxu0 %v2014
      %v2130 = vpop.f32.mrf.mxu0
      %v2131 = vadd.f32 0.0, %v2130
      %2132 = vmatmul.f32.gmra.mxu0 %v2017
      %v2133 = vpop.f32.mrf.mxu0
      %v2134 = vadd.f32 0.0, %v2133
      %2135 = vmatmul.f32.gmra.mxu0 %v2020
      %v2136 = vpop.f32.mrf.mxu0
      %v2137 = vadd.f32 0.0, %v2136
      %2138 = vmatmul.f32.gmra.mxu0 %v2023
      %v2139 = vpop.f32.mrf.mxu0
      %v2140 = vadd.f32 0.0, %v2139
      %2141 = vmatmul.f32.gmra.mxu0 %v2026
      %v2142 = vpop.f32.mrf.mxu0
      %v2143 = vadd.f32 0.0, %v2142
      %2144 = vmatmul.f32.gmra.mxu0 %v2029
      %v2145 = vpop.f32.mrf.mxu0
      %v2146 = vadd.f32 0.0, %v2145
      %2147 = vmatmul.f32.gmra.mxu0 %v2032
      %v2148 = vpop.f32.mrf.mxu0
      %v2149 = vadd.f32 0.0, %v2148
      %2150 = vmatmul.f32.gmra.mxu0 %v2035
      %v2151 = vpop.f32.mrf.mxu0
      %v2152 = vadd.f32 0.0, %v2151
      %2153 = vmatmul.f32.gmra.mxu0 %v2038
      %v2154 = vpop.f32.mrf.mxu0
      %v2155 = vadd.f32 0.0, %v2154
      %2156 = vmatmul.f32.gmra.mxu0 %v2041
      %v2157 = vpop.f32.mrf.mxu0
      %v2158 = vadd.f32 0.0, %v2157
      %2159 = vmatmul.f32.gmra.mxu0 %v2044
      %v2160 = vpop.f32.mrf.mxu0
      %v2161 = vadd.f32 0.0, %v2160
      %2162 = vmatmul.f32.gmra.mxu0 %v2047
      %v2163 = vpop.f32.mrf.mxu0
      %v2164 = vadd.f32 0.0, %v2163
      %2165 = vmatmul.f32.gmra.mxu0 %v2050
      %v2166 = vpop.f32.mrf.mxu0
      %v2167 = vadd.f32 0.0, %v2166
      %2168 = vmatmul.f32.gmra.mxu0 %v2053
      %v2169 = vpop.f32.mrf.mxu0
      %v2170 = vadd.f32 0.0, %v2169
      %2171 = vmatmul.f32.gmra.mxu0 %v2056
      %v2172 = vpop.f32.mrf.mxu0
      %v2173 = vadd.f32 0.0, %v2172
      %2174 = vdwg.mxu0
      %v2175 = vld [vmem:[%s2] sm:$0x1]
      %v2176 = vld [vmem:[%s2 + $0x1] sm:$0x1]
      %v2177 = vsel %vm204, %v2080, 0.0
      %v2178 = vsel %vm204, %v2083, 0.0
      %v2179 = vadd.f32 %v2177, %v2178
      %v2180 = vsel %vm204, %v2086, 0.0
      %v2181 = vadd.f32 %v2179, %v2180
      %v2182 = vsel %vm204, %v2089, 0.0
      %v2183 = vadd.f32 %v2181, %v2182
      %v2184 = vsel %vm204, %v2092, 0.0
      %v2185 = vadd.f32 %v2183, %v2184
      %v2186 = vsel %vm204, %v2095, 0.0
      %v2187 = vadd.f32 %v2185, %v2186
      %v2188 = vsel %vm204, %v2098, 0.0
      %v2189 = vadd.f32 %v2187, %v2188
      %v2190 = vsel %vm204, %v2101, 0.0
      %v2191 = vadd.f32 %v2189, %v2190
      %v2192 = vsel %vm204, %v2104, 0.0
      %v2193 = vadd.f32 %v2191, %v2192
      %v2194 = vsel %vm204, %v2107, 0.0
      %v2195 = vadd.f32 %v2193, %v2194
      %v2196 = vsel %vm204, %v2110, 0.0
      %v2197 = vadd.f32 %v2195, %v2196
      %v2198 = vsel %vm204, %v2113, 0.0
      %v2199 = vadd.f32 %v2197, %v2198
      %v2200 = vsel %vm204, %v2116, 0.0
      %v2201 = vadd.f32 %v2199, %v2200
      %v2202 = vsel %vm204, %v2119, 0.0
      %v2203 = vadd.f32 %v2201, %v2202
      %v2204 = vsel %vm204, %v2122, 0.0
      %v2205 = vadd.f32 %v2203, %v2204
      %v2206 = vsel %vm204, %v2125, 0.0
      %v2207 = vadd.f32 %v2205, %v2206
      %v2208 = vsel %vm204, %v2128, 0.0
      %v2209 = vadd.f32 %v2207, %v2208
      %v2210 = vsel %vm204, %v2131, 0.0
      %v2211 = vadd.f32 %v2209, %v2210
      %v2212 = vsel %vm204, %v2134, 0.0
      %v2213 = vadd.f32 %v2211, %v2212
      %v2214 = vsel %vm204, %v2137, 0.0
      %v2215 = vadd.f32 %v2213, %v2214
      %v2216 = vsel %vm204, %v2140, 0.0
      %v2217 = vadd.f32 %v2215, %v2216
      %v2218 = vsel %vm204, %v2143, 0.0
      %v2219 = vadd.f32 %v2217, %v2218
      %v2220 = vsel %vm204, %v2146, 0.0
      %v2221 = vadd.f32 %v2219, %v2220
      %v2222 = vsel %vm204, %v2149, 0.0
      %v2223 = vadd.f32 %v2221, %v2222
      %v2224 = vsel %vm204, %v2152, 0.0
      %v2225 = vadd.f32 %v2223, %v2224
      %v2226 = vsel %vm204, %v2155, 0.0
      %v2227 = vadd.f32 %v2225, %v2226
      %v2228 = vsel %vm204, %v2158, 0.0
      %v2229 = vadd.f32 %v2227, %v2228
      %v2230 = vsel %vm204, %v2161, 0.0
      %v2231 = vadd.f32 %v2229, %v2230
      %v2232 = vsel %vm204, %v2164, 0.0
      %v2233 = vadd.f32 %v2231, %v2232
      %v2234 = vsel %vm204, %v2167, 0.0
      %v2235 = vadd.f32 %v2233, %v2234
      %v2236 = vsel %vm204, %v2170, 0.0
      %v2237 = vadd.f32 %v2235, %v2236
      %v2238 = vsel %vm204, %v2173, 0.0
      %v2239 = vadd.f32 %v2237, %v2238
      %v2240 = vrot.slane %v2239, 4
      %v2241 = vadd.f32 %v2239, %v2240
      %v2242 = vrot.slane %v2241, 2
      %v2243 = vadd.f32 %v2241, %v2242
      %v2244 = vrot.slane %v2243, 1
      %v2245 = vadd.f32 %v2243, %v2244
      %v2246 = vrcp.pop 256.0
      %v2247 = vmul.f32 256.0, %v2246
      %v2248 = vsub.f32 1.0, %v2247
      %v2249 = vmul.f32 %v2246, %v2248
      %v2250 = vadd.f32 %v2246, %v2249
      %vm2251 = vweird.f32 %v2246
      %v2252 = vsel %vm2251, %v2246, %v2250
      %v2253 = vmul.f32 %v2245, %v2252
      %v2254 = vmul.f32 %v2080, %v2080
      %v2255 = vmul.f32 %v2083, %v2083
      %v2256 = vmul.f32 %v2086, %v2086
      %v2257 = vmul.f32 %v2089, %v2089
      %v2258 = vmul.f32 %v2092, %v2092
      %v2259 = vmul.f32 %v2095, %v2095
      %v2260 = vmul.f32 %v2098, %v2098
      %v2261 = vmul.f32 %v2101, %v2101
      %v2262 = vmul.f32 %v2104, %v2104
      %v2263 = vmul.f32 %v2107, %v2107
      %v2264 = vmul.f32 %v2110, %v2110
      %v2265 = vmul.f32 %v2113, %v2113
      %v2266 = vmul.f32 %v2116, %v2116
      %v2267 = vmul.f32 %v2119, %v2119
      %v2268 = vmul.f32 %v2122, %v2122
      %v2269 = vmul.f32 %v2125, %v2125
      %v2270 = vmul.f32 %v2128, %v2128
      %v2271 = vmul.f32 %v2131, %v2131
      %v2272 = vmul.f32 %v2134, %v2134
      %v2273 = vmul.f32 %v2137, %v2137
      %v2274 = vmul.f32 %v2140, %v2140
      %v2275 = vmul.f32 %v2143, %v2143
      %v2276 = vmul.f32 %v2146, %v2146
      %v2277 = vmul.f32 %v2149, %v2149
      %v2278 = vmul.f32 %v2152, %v2152
      %v2279 = vmul.f32 %v2155, %v2155
      %v2280 = vmul.f32 %v2158, %v2158
      %v2281 = vmul.f32 %v2161, %v2161
      %v2282 = vmul.f32 %v2164, %v2164
      %v2283 = vmul.f32 %v2167, %v2167
      %v2284 = vmul.f32 %v2170, %v2170
      %v2285 = vmul.f32 %v2173, %v2173
      %v2286 = vsel %vm204, %v2254, 0.0
      %v2287 = vsel %vm204, %v2255, 0.0
      %v2288 = vadd.f32 %v2286, %v2287
      %v2289 = vsel %vm204, %v2256, 0.0
      %v2290 = vadd.f32 %v2288, %v2289
      %v2291 = vsel %vm204, %v2257, 0.0
      %v2292 = vadd.f32 %v2290, %v2291
      %v2293 = vsel %vm204, %v2258, 0.0
      %v2294 = vadd.f32 %v2292, %v2293
      %v2295 = vsel %vm204, %v2259, 0.0
      %v2296 = vadd.f32 %v2294, %v2295
      %v2297 = vsel %vm204, %v2260, 0.0
      %v2298 = vadd.f32 %v2296, %v2297
      %v2299 = vsel %vm204, %v2261, 0.0
      %v2300 = vadd.f32 %v2298, %v2299
      %v2301 = vsel %vm204, %v2262, 0.0
      %v2302 = vadd.f32 %v2300, %v2301
      %v2303 = vsel %vm204, %v2263, 0.0
      %v2304 = vadd.f32 %v2302, %v2303
      %v2305 = vsel %vm204, %v2264, 0.0
      %v2306 = vadd.f32 %v2304, %v2305
      %v2307 = vsel %vm204, %v2265, 0.0
      %v2308 = vadd.f32 %v2306, %v2307
      %v2309 = vsel %vm204, %v2266, 0.0
      %v2310 = vadd.f32 %v2308, %v2309
      %v2311 = vsel %vm204, %v2267, 0.0
      %v2312 = vadd.f32 %v2310, %v2311
      %v2313 = vsel %vm204, %v2268, 0.0
      %v2314 = vadd.f32 %v2312, %v2313
      %v2315 = vsel %vm204, %v2269, 0.0
      %v2316 = vadd.f32 %v2314, %v2315
      %v2317 = vsel %vm204, %v2270, 0.0
      %v2318 = vadd.f32 %v2316, %v2317
      %v2319 = vsel %vm204, %v2271, 0.0
      %v2320 = vadd.f32 %v2318, %v2319
      %v2321 = vsel %vm204, %v2272, 0.0
      %v2322 = vadd.f32 %v2320, %v2321
      %v2323 = vsel %vm204, %v2273, 0.0
      %v2324 = vadd.f32 %v2322, %v2323
      %v2325 = vsel %vm204, %v2274, 0.0
      %v2326 = vadd.f32 %v2324, %v2325
      %v2327 = vsel %vm204, %v2275, 0.0
      %v2328 = vadd.f32 %v2326, %v2327
      %v2329 = vsel %vm204, %v2276, 0.0
      %v2330 = vadd.f32 %v2328, %v2329
      %v2331 = vsel %vm204, %v2277, 0.0
      %v2332 = vadd.f32 %v2330, %v2331
      %v2333 = vsel %vm204, %v2278, 0.0
      %v2334 = vadd.f32 %v2332, %v2333
      %v2335 = vsel %vm204, %v2279, 0.0
      %v2336 = vadd.f32 %v2334, %v2335
      %v2337 = vsel %vm204, %v2280, 0.0
      %v2338 = vadd.f32 %v2336, %v2337
      %v2339 = vsel %vm204, %v2281, 0.0
      %v2340 = vadd.f32 %v2338, %v2339
      %v2341 = vsel %vm204, %v2282, 0.0
      %v2342 = vadd.f32 %v2340, %v2341
      %v2343 = vsel %vm204, %v2283, 0.0
      %v2344 = vadd.f32 %v2342, %v2343
      %v2345 = vsel %vm204, %v2284, 0.0
      %v2346 = vadd.f32 %v2344, %v2345
      %v2347 = vsel %vm204, %v2285, 0.0
      %v2348 = vadd.f32 %v2346, %v2347
      %v2349 = vrot.slane %v2348, 4
      %v2350 = vadd.f32 %v2348, %v2349
      %v2351 = vrot.slane %v2350, 2
      %v2352 = vadd.f32 %v2350, %v2351
      %v2353 = vrot.slane %v2352, 1
      %v2354 = vadd.f32 %v2352, %v2353
      %v2355 = vmul.f32 %v2354, %v2252
      %v2356 = vmul.f32 %v2253, %v2253
      %v2357 = vsub.f32 %v2355, %v2356
      %v2358 = vmax.f32 %v2357, 0.0
      %v2359 = vadd.f32 %v2358, 1e-05
      %v2360 = vrsqrt.pop %v2359
      %v2361 = vmul.f32 %v2360, %v2359
      %v2362 = vmul.f32 %v2361, %v2360
      %v2363 = vmul.f32 0.5, %v2362
      %v2364 = vsub.f32 1.5, %v2363
      %v2365 = vmul.f32 %v2360, %v2364
      %vm2366 = vweird.f32 %v2359
      %vm2367 = vweird.f32 %v2360
      %vm2368 = vmor %vm2366, %vm2367
      %v2369 = vsel %vm2368, %v2360, %v2365
      %v2370 = vmul.f32 %v2175, %v2369
      %v2371 = vmul.f32 %v2253, %v2370
      %v2372 = vsub.f32 %v2176, %v2371
      %v2373 = vperm.slane %v2370, 0
      %v2374 = vmul.f32 %v2080, %v2373
      %v2375 = vmul.f32 %v2083, %v2373
      %v2376 = vmul.f32 %v2086, %v2373
      %v2377 = vmul.f32 %v2089, %v2373
      %v2378 = vmul.f32 %v2092, %v2373
      %v2379 = vmul.f32 %v2095, %v2373
      %v2380 = vmul.f32 %v2098, %v2373
      %v2381 = vmul.f32 %v2101, %v2373
      %v2382 = vmul.f32 %v2104, %v2373
      %v2383 = vmul.f32 %v2107, %v2373
      %v2384 = vmul.f32 %v2110, %v2373
      %v2385 = vmul.f32 %v2113, %v2373
      %v2386 = vmul.f32 %v2116, %v2373
      %v2387 = vmul.f32 %v2119, %v2373
      %v2388 = vmul.f32 %v2122, %v2373
      %v2389 = vmul.f32 %v2125, %v2373
      %v2390 = vmul.f32 %v2128, %v2373
      %v2391 = vmul.f32 %v2131, %v2373
      %v2392 = vmul.f32 %v2134, %v2373
      %v2393 = vmul.f32 %v2137, %v2373
      %v2394 = vmul.f32 %v2140, %v2373
      %v2395 = vmul.f32 %v2143, %v2373
      %v2396 = vmul.f32 %v2146, %v2373
      %v2397 = vmul.f32 %v2149, %v2373
      %v2398 = vmul.f32 %v2152, %v2373
      %v2399 = vmul.f32 %v2155, %v2373
      %v2400 = vmul.f32 %v2158, %v2373
      %v2401 = vmul.f32 %v2161, %v2373
      %v2402 = vmul.f32 %v2164, %v2373
      %v2403 = vmul.f32 %v2167, %v2373
      %v2404 = vmul.f32 %v2170, %v2373
      %v2405 = vmul.f32 %v2173, %v2373
      %v2406 = vperm.slane %v2372, 0
      %v2407 = vadd.f32 %v2374, %v2406
      %v2408 = vadd.f32 %v2375, %v2406
      %v2409 = vadd.f32 %v2376, %v2406
      %v2410 = vadd.f32 %v2377, %v2406
      %v2411 = vadd.f32 %v2378, %v2406
      %v2412 = vadd.f32 %v2379, %v2406
      %v2413 = vadd.f32 %v2380, %v2406
      %v2414 = vadd.f32 %v2381, %v2406
      %v2415 = vadd.f32 %v2382, %v2406
      %v2416 = vadd.f32 %v2383, %v2406
      %v2417 = vadd.f32 %v2384, %v2406
      %v2418 = vadd.f32 %v2385, %v2406
      %v2419 = vadd.f32 %v2386, %v2406
      %v2420 = vadd.f32 %v2387, %v2406
      %v2421 = vadd.f32 %v2388, %v2406
      %v2422 = vadd.f32 %v2389, %v2406
      %v2423 = vadd.f32 %v2390, %v2406
      %v2424 = vadd.f32 %v2391, %v2406
      %v2425 = vadd.f32 %v2392, %v2406
      %v2426 = vadd.f32 %v2393, %v2406
      %v2427 = vadd.f32 %v2394, %v2406
      %v2428 = vadd.f32 %v2395, %v2406
      %v2429 = vadd.f32 %v2396, %v2406
      %v2430 = vadd.f32 %v2397, %v2406
      %v2431 = vadd.f32 %v2398, %v2406
      %v2432 = vadd.f32 %v2399, %v2406
      %v2433 = vadd.f32 %v2400, %v2406
      %v2434 = vadd.f32 %v2401, %v2406
      %v2435 = vadd.f32 %v2402, %v2406
      %v2436 = vadd.f32 %v2403, %v2406
      %v2437 = vadd.f32 %v2404, %v2406
      %v2438 = vadd.f32 %v2405, %v2406
      %v2439 = vmax.f32 %v2407, 0.0
      %v2440 = vmax.f32 %v2408, 0.0
      %v2441 = vmax.f32 %v2409, 0.0
      %v2442 = vmax.f32 %v2410, 0.0
      %v2443 = vmax.f32 %v2411, 0.0
      %v2444 = vmax.f32 %v2412, 0.0
      %v2445 = vmax.f32 %v2413, 0.0
      %v2446 = vmax.f32 %v2414, 0.0
      %v2447 = vmax.f32 %v2415, 0.0
      %v2448 = vmax.f32 %v2416, 0.0
      %v2449 = vmax.f32 %v2417, 0.0
      %v2450 = vmax.f32 %v2418, 0.0
      %v2451 = vmax.f32 %v2419, 0.0
      %v2452 = vmax.f32 %v2420, 0.0
      %v2453 = vmax.f32 %v2421, 0.0
      %v2454 = vmax.f32 %v2422, 0.0
      %v2455 = vmax.f32 %v2423, 0.0
      %v2456 = vmax.f32 %v2424, 0.0
      %v2457 = vmax.f32 %v2425, 0.0
      %v2458 = vmax.f32 %v2426, 0.0
      %v2459 = vmax.f32 %v2427, 0.0
      %v2460 = vmax.f32 %v2428, 0.0
      %v2461 = vmax.f32 %v2429, 0.0
      %v2462 = vmax.f32 %v2430, 0.0
      %v2463 = vmax.f32 %v2431, 0.0
      %v2464 = vmax.f32 %v2432, 0.0
      %v2465 = vmax.f32 %v2433, 0.0
      %v2466 = vmax.f32 %v2434, 0.0
      %v2467 = vmax.f32 %v2435, 0.0
      %v2468 = vmax.f32 %v2436, 0.0
      %v2469 = vmax.f32 %v2437, 0.0
      %v2470 = vmax.f32 %v2438, 0.0
      %2471 = vst.msk [vmem:[%s203 + $0x1] sm:$0xff] %vm204, %v2439
      %2472 = vst.msk [vmem:[%s203 + $0x9] sm:$0xff] %vm204, %v2440
      %2473 = vst.msk [vmem:[%s203 + $0x19] sm:$0xff] %vm204, %v2441
      %2474 = vst.msk [vmem:[%s203 + $0x21] sm:$0xff] %vm204, %v2442
      %2475 = vst.msk [vmem:[%s203 + $0x31] sm:$0xff] %vm204, %v2443
      %2476 = vst.msk [vmem:[%s203 + $0x39] sm:$0xff] %vm204, %v2444
      %2477 = vst.msk [vmem:[%s203 + $0x49] sm:$0xff] %vm204, %v2445
      %2478 = vst.msk [vmem:[%s203 + $0x51] sm:$0xff] %vm204, %v2446
      %2479 = vst.msk [vmem:[%s203 + $0x61] sm:$0xff] %vm204, %v2447
      %2480 = vst.msk [vmem:[%s203 + $0x69] sm:$0xff] %vm204, %v2448
      %2481 = vst.msk [vmem:[%s203 + $0x79] sm:$0xff] %vm204, %v2449
      %2482 = vst.msk [vmem:[%s203 + $0x81] sm:$0xff] %vm204, %v2450
      %2483 = vst.msk [vmem:[%s203 + $0x91] sm:$0xff] %vm204, %v2451
      %2484 = vst.msk [vmem:[%s203 + $0x99] sm:$0xff] %vm204, %v2452
      %2485 = vst.msk [vmem:[%s203 + $0xa9] sm:$0xff] %vm204, %v2453
      %2486 = vst.msk [vmem:[%s203 + $0xb1] sm:$0xff] %vm204, %v2454
      %2487 = vst.msk [vmem:[%s203 + $0xc1] sm:$0xff] %vm204, %v2455
      %2488 = vst.msk [vmem:[%s203 + $0xc9] sm:$0xff] %vm204, %v2456
      %2489 = vst.msk [vmem:[%s203 + $0xd9] sm:$0xff] %vm204, %v2457
      %2490 = vst.msk [vmem:[%s203 + $0xe1] sm:$0xff] %vm204, %v2458
      %2491 = vst.msk [vmem:[%s203 + $0xf1] sm:$0xff] %vm204, %v2459
      %2492 = vst.msk [vmem:[%s203 + $0xf9] sm:$0xff] %vm204, %v2460
      %2493 = vst.msk [vmem:[%s203 + $0x109] sm:$0xff] %vm204, %v2461
      %2494 = vst.msk [vmem:[%s203 + $0x111] sm:$0xff] %vm204, %v2462
      %2495 = vst.msk [vmem:[%s203 + $0x121] sm:$0xff] %vm204, %v2463
      %2496 = vst.msk [vmem:[%s203 + $0x129] sm:$0xff] %vm204, %v2464
      %2497 = vst.msk [vmem:[%s203 + $0x139] sm:$0xff] %vm204, %v2465
      %2498 = vst.msk [vmem:[%s203 + $0x141] sm:$0xff] %vm204, %v2466
      %2499 = vst.msk [vmem:[%s203 + $0x151] sm:$0xff] %vm204, %v2467
      %2500 = vst.msk [vmem:[%s203 + $0x159] sm:$0xff] %vm204, %v2468
      %2501 = vst.msk [vmem:[%s203 + $0x169] sm:$0xff] %vm204, %v2469
      %2502 = vst.msk [vmem:[%s203 + $0x171] sm:$0xff] %vm204, %v2470
      %2503 = vst.msk [vmem:[#allocation2 + $0x1] sm:$0xff] %vm204, %v2441
      %2504 = vst.msk [vmem:[#allocation2 + $0x9] sm:$0xff] %vm204, %v2442
      %2505 = vst.msk [vmem:[%s239 + $0x1] sm:$0xff] %vm204, %v2467
      %2506 = vst.msk [vmem:[%s239 + $0x9] sm:$0xff] %vm204, %v2468
      %v2507 = vld [vmem:[#allocation2 + $0x2] sm:$0x1]
      %v2508 = vld [vmem:[#allocation2 + $0x1a] sm:$0x1]
      %v2509 = vld [vmem:[#allocation2 + $0x32] sm:$0x1]
      %v2510 = vld [vmem:[#allocation2 + $0x4a] sm:$0x1]
      %v2511 = vld [vmem:[#allocation2 + $0x62] sm:$0x1]
      %v2512 = vld [vmem:[#allocation2 + $0x7a] sm:$0x1]
      %v2513 = vld [vmem:[#allocation2 + $0x92] sm:$0x1]
      %v2514 = vld [vmem:[#allocation2 + $0xaa] sm:$0x1]
      %v2515 = vld [vmem:[#allocation2 + $0xc2] sm:$0x1]
      %v2516 = vld [vmem:[#allocation2 + $0xda] sm:$0x1]
      %v2517 = vld [vmem:[#allocation2 + $0xf2] sm:$0x1]
      %v2518 = vld [vmem:[#allocation2 + $0x10a] sm:$0x1]
      %v2519 = vld [vmem:[#allocation2 + $0x122] sm:$0x1]
      %v2520 = vld [vmem:[#allocation2 + $0x13a] sm:$0x1]
      %v2521 = vld [vmem:[#allocation2 + $0x152] sm:$0x1]
      %v2522 = vld [vmem:[#allocation2 + $0x16a] sm:$0x1]
      %v2523 = vld [vmem:[#allocation2 + $0x182] sm:$0x1]
      %v2524 = vld [vmem:[#allocation2 + $0x19a] sm:$0x1]
      %v2525 = vld [vmem:[#allocation2 + $0xf] sm:$0x1]
      %v2526 = vld [vmem:[#allocation2 + $0x27] sm:$0x1]
      %v2527 = vld [vmem:[#allocation2 + $0x3f] sm:$0x1]
      %v2528 = vld [vmem:[#allocation2 + $0x57] sm:$0x1]
      %v2529 = vld [vmem:[#allocation2 + $0x6f] sm:$0x1]
      %v2530 = vld [vmem:[#allocation2 + $0x87] sm:$0x1]
      %v2531 = vld [vmem:[#allocation2 + $0x9f] sm:$0x1]
      %v2532 = vld [vmem:[#allocation2 + $0xb7] sm:$0x1]
      %v2533 = vld [vmem:[#allocation2 + $0xcf] sm:$0x1]
      %v2534 = vld [vmem:[#allocation2 + $0xe7] sm:$0x1]
      %v2535 = vld [vmem:[#allocation2 + $0xff] sm:$0x1]
      %v2536 = vld [vmem:[#allocation2 + $0x117] sm:$0x1]
      %v2537 = vld [vmem:[#allocation2 + $0x12f] sm:$0x1]
      %v2538 = vld [vmem:[#allocation2 + $0x147] sm:$0x1]
      %v2539 = vld [vmem:[#allocation2 + $0x15f] sm:$0x1]
      %v2540 = vld [vmem:[#allocation2 + $0x177] sm:$0x1]
      %v2541 = vld [vmem:[#allocation2 + $0x18f] sm:$0x1]
      %v2542 = vld [vmem:[#allocation2 + $0x1a7] sm:$0x1]
      %2543 = vst.msk [vmem:[#allocation2] sm:$0x1] %vm278, %v2507
      %2544 = vst.msk [vmem:[#allocation2 + $0x18] sm:$0x1] %vm278, %v2508
      %2545 = vst.msk [vmem:[#allocation2 + $0x30] sm:$0x1] %vm278, %v2509
      %2546 = vst.msk [vmem:[#allocation2 + $0x48] sm:$0x1] %vm278, %v2510
      %2547 = vst.msk [vmem:[#allocation2 + $0x60] sm:$0x1] %vm278, %v2511
      %2548 = vst.msk [vmem:[#allocation2 + $0x78] sm:$0x1] %vm278, %v2512
      %2549 = vst.msk [vmem:[#allocation2 + $0x90] sm:$0x1] %vm278, %v2513
      %2550 = vst.msk [vmem:[#allocation2 + $0xa8] sm:$0x1] %vm278, %v2514
      %2551 = vst.msk [vmem:[#allocation2 + $0xc0] sm:$0x1] %vm278, %v2515
      %2552 = vst.msk [vmem:[#allocation2 + $0xd8] sm:$0x1] %vm278, %v2516
      %2553 = vst.msk [vmem:[#allocation2 + $0xf0] sm:$0x1] %vm278, %v2517
      %2554 = vst.msk [vmem:[#allocation2 + $0x108] sm:$0x1] %vm278, %v2518
      %2555 = vst.msk [vmem:[#allocation2 + $0x120] sm:$0x1] %vm278, %v2519
      %2556 = vst.msk [vmem:[#allocation2 + $0x138] sm:$0x1] %vm278, %v2520
      %2557 = vst.msk [vmem:[#allocation2 + $0x150] sm:$0x1] %vm278, %v2521
      %2558 = vst.msk [vmem:[#allocation2 + $0x168] sm:$0x1] %vm278, %v2522
      %2559 = vst.msk [vmem:[#allocation2 + $0x180] sm:$0x1] %vm278, %v2523
      %2560 = vst.msk [vmem:[#allocation2 + $0x198] sm:$0x1] %vm278, %v2524
      %2561 = vst.msk [vmem:[#allocation2 + $0x11] sm:$0x1] %vm278, %v2525
      %2562 = vst.msk [vmem:[#allocation2 + $0x29] sm:$0x1] %vm278, %v2526
      %2563 = vst.msk [vmem:[#allocation2 + $0x41] sm:$0x1] %vm278, %v2527
      %2564 = vst.msk [vmem:[#allocation2 + $0x59] sm:$0x1] %vm278, %v2528
      %2565 = vst.msk [vmem:[#allocation2 + $0x71] sm:$0x1] %vm278, %v2529
      %2566 = vst.msk [vmem:[#allocation2 + $0x89] sm:$0x1] %vm278, %v2530
      %2567 = vst.msk [vmem:[#allocation2 + $0xa1] sm:$0x1] %vm278, %v2531
      %2568 = vst.msk [vmem:[#allocation2 + $0xb9] sm:$0x1] %vm278, %v2532
      %2569 = vst.msk [vmem:[#allocation2 + $0xd1] sm:$0x1] %vm278, %v2533
      %2570 = vst.msk [vmem:[#allocation2 + $0xe9] sm:$0x1] %vm278, %v2534
      %2571 = vst.msk [vmem:[#allocation2 + $0x101] sm:$0x1] %vm278, %v2535
      %2572 = vst.msk [vmem:[#allocation2 + $0x119] sm:$0x1] %vm278, %v2536
      %2573 = vst.msk [vmem:[#allocation2 + $0x131] sm:$0x1] %vm278, %v2537
      %2574 = vst.msk [vmem:[#allocation2 + $0x149] sm:$0x1] %vm278, %v2538
      %2575 = vst.msk [vmem:[#allocation2 + $0x161] sm:$0x1] %vm278, %v2539
      %2576 = vst.msk [vmem:[#allocation2 + $0x179] sm:$0x1] %vm278, %v2540
      %2577 = vst.msk [vmem:[#allocation2 + $0x191] sm:$0x1] %vm278, %v2541
      %2578 = vst.msk [vmem:[#allocation2 + $0x1a9] sm:$0x1] %vm278, %v2542
      %v2579 = vld [vmem:[#allocation2] sm:$0xff]
      %v2580 = vld [vmem:[#allocation2 + $0x8] sm:$0xff]
      %v2581 = vld [vmem:[#allocation2 + $0x18] sm:$0xff]
      %v2582 = vld [vmem:[#allocation2 + $0x20] sm:$0xff]
      %v2583 = vld [vmem:[#allocation2 + $0x30] sm:$0xff]
      %v2584 = vld [vmem:[#allocation2 + $0x38] sm:$0xff]
      %v2585 = vld [vmem:[#allocation2 + $0x48] sm:$0xff]
      %v2586 = vld [vmem:[#allocation2 + $0x50] sm:$0xff]
      %v2587 = vld [vmem:[#allocation2 + $0x60] sm:$0xff]
      %v2588 = vld [vmem:[#allocation2 + $0x68] sm:$0xff]
      %v2589 = vld [vmem:[#allocation2 + $0x78] sm:$0xff]
      %v2590 = vld [vmem:[#allocation2 + $0x80] sm:$0xff]
      %v2591 = vld [vmem:[#allocation2 + $0x90] sm:$0xff]
      %v2592 = vld [vmem:[#allocation2 + $0x98] sm:$0xff]
      %v2593 = vld [vmem:[#allocation2 + $0xa8] sm:$0xff]
      %v2594 = vld [vmem:[#allocation2 + $0xb0] sm:$0xff]
      %v2595 = vld [vmem:[#allocation2 + $0xc0] sm:$0xff]
      %v2596 = vld [vmem:[#allocation2 + $0xc8] sm:$0xff]
      %v2597 = vld [vmem:[#allocation2 + $0xd8] sm:$0xff]
      %v2598 = vld [vmem:[#allocation2 + $0xe0] sm:$0xff]
      %v2599 = vld [vmem:[#allocation2 + $0xf0] sm:$0xff]
      %v2600 = vld [vmem:[#allocation2 + $0xf8] sm:$0xff]
      %v2601 = vld [vmem:[#allocation2 + $0x108] sm:$0xff]
      %v2602 = vld [vmem:[#allocation2 + $0x110] sm:$0xff]
      %v2603 = vld [vmem:[#allocation2 + $0x120] sm:$0xff]
      %v2604 = vld [vmem:[#allocation2 + $0x128] sm:$0xff]
      %v2605 = vld [vmem:[#allocation2 + $0x138] sm:$0xff]
      %v2606 = vld [vmem:[#allocation2 + $0x140] sm:$0xff]
      %v2607 = vld [vmem:[#allocation2 + $0x150] sm:$0xff]
      %v2608 = vld [vmem:[#allocation2 + $0x158] sm:$0xff]
      %v2609 = vld [vmem:[#allocation2 + $0x168] sm:$0xff]
      %v2610 = vld [vmem:[#allocation2 + $0x170] sm:$0xff]
      %2611 = vst.msk [vmem:[#allocation3] sm:$0xff] %vm204, %v2579
      %2612 = vst.msk [vmem:[#allocation3 + $0x8] sm:$0xff] %vm204, %v2580
      %2613 = vst.msk [vmem:[#allocation3 + $0x10] sm:$0xff] %vm204, %v2581
      %2614 = vst.msk [vmem:[#allocation3 + $0x18] sm:$0xff] %vm204, %v2582
      %2615 = vst.msk [vmem:[#allocation3 + $0x20] sm:$0xff] %vm204, %v2583
      %2616 = vst.msk [vmem:[#allocation3 + $0x28] sm:$0xff] %vm204, %v2584
      %2617 = vst.msk [vmem:[#allocation3 + $0x30] sm:$0xff] %vm204, %v2585
      %2618 = vst.msk [vmem:[#allocation3 + $0x38] sm:$0xff] %vm204, %v2586
      %2619 = vst.msk [vmem:[#allocation3 + $0x40] sm:$0xff] %vm204, %v2587
      %2620 = vst.msk [vmem:[#allocation3 + $0x48] sm:$0xff] %vm204, %v2588
      %2621 = vst.msk [vmem:[#allocation3 + $0x50] sm:$0xff] %vm204, %v2589
      %2622 = vst.msk [vmem:[#allocation3 + $0x58] sm:$0xff] %vm204, %v2590
      %2623 = vst.msk [vmem:[#allocation3 + $0x60] sm:$0xff] %vm204, %v2591
      %2624 = vst.msk [vmem:[#allocation3 + $0x68] sm:$0xff] %vm204, %v2592
      %2625 = vst.msk [vmem:[#allocation3 + $0x70] sm:$0xff] %vm204, %v2593
      %2626 = vst.msk [vmem:[#allocation3 + $0x78] sm:$0xff] %vm204, %v2594
      %2627 = vst.msk [vmem:[#allocation3 + $0x80] sm:$0xff] %vm204, %v2595
      %2628 = vst.msk [vmem:[#allocation3 + $0x88] sm:$0xff] %vm204, %v2596
      %2629 = vst.msk [vmem:[#allocation3 + $0x90] sm:$0xff] %vm204, %v2597
      %2630 = vst.msk [vmem:[#allocation3 + $0x98] sm:$0xff] %vm204, %v2598
      %2631 = vst.msk [vmem:[#allocation3 + $0xa0] sm:$0xff] %vm204, %v2599
      %2632 = vst.msk [vmem:[#allocation3 + $0xa8] sm:$0xff] %vm204, %v2600
      %2633 = vst.msk [vmem:[#allocation3 + $0xb0] sm:$0xff] %vm204, %v2601
      %2634 = vst.msk [vmem:[#allocation3 + $0xb8] sm:$0xff] %vm204, %v2602
      %2635 = vst.msk [vmem:[#allocation3 + $0xc0] sm:$0xff] %vm204, %v2603
      %2636 = vst.msk [vmem:[#allocation3 + $0xc8] sm:$0xff] %vm204, %v2604
      %2637 = vst.msk [vmem:[#allocation3 + $0xd0] sm:$0xff] %vm204, %v2605
      %2638 = vst.msk [vmem:[#allocation3 + $0xd8] sm:$0xff] %vm204, %v2606
      %2639 = vst.msk [vmem:[#allocation3 + $0xe0] sm:$0xff] %vm204, %v2607
      %2640 = vst.msk [vmem:[#allocation3 + $0xe8] sm:$0xff] %vm204, %v2608
      %2641 = vst.msk [vmem:[#allocation3 + $0xf0] sm:$0xff] %vm204, %v2609
      %2642 = vst.msk [vmem:[#allocation3 + $0xf8] sm:$0xff] %vm204, %v2610
      %v2643 = vld [vmem:[#allocation2 + $0x1] sm:$0xff]
      %v2644 = vld [vmem:[#allocation2 + $0x9] sm:$0xff]
      %v2645 = vld [vmem:[#allocation2 + $0x19] sm:$0xff]
      %v2646 = vld [vmem:[#allocation2 + $0x21] sm:$0xff]
      %v2647 = vld [vmem:[#allocation2 + $0x31] sm:$0xff]
      %v2648 = vld [vmem:[#allocation2 + $0x39] sm:$0xff]
      %v2649 = vld [vmem:[#allocation2 + $0x49] sm:$0xff]
      %v2650 = vld [vmem:[#allocation2 + $0x51] sm:$0xff]
      %v2651 = vld [vmem:[#allocation2 + $0x61] sm:$0xff]
      %v2652 = vld [vmem:[#allocation2 + $0x69] sm:$0xff]
      %v2653 = vld [vmem:[#allocation2 + $0x79] sm:$0xff]
      %v2654 = vld [vmem:[#allocation2 + $0x81] sm:$0xff]
      %v2655 = vld [vmem:[#allocation2 + $0x91] sm:$0xff]
      %v2656 = vld [vmem:[#allocation2 + $0x99] sm:$0xff]
      %v2657 = vld [vmem:[#allocation2 + $0xa9] sm:$0xff]
      %v2658 = vld [vmem:[#allocation2 + $0xb1] sm:$0xff]
      %v2659 = vld [vmem:[#allocation2 + $0xc1] sm:$0xff]
      %v2660 = vld [vmem:[#allocation2 + $0xc9] sm:$0xff]
      %v2661 = vld [vmem:[#allocation2 + $0xd9] sm:$0xff]
      %v2662 = vld [vmem:[#allocation2 + $0xe1] sm:$0xff]
      %v2663 = vld [vmem:[#allocation2 + $0xf1] sm:$0xff]
      %v2664 = vld [vmem:[#allocation2 + $0xf9] sm:$0xff]
      %v2665 = vld [vmem:[#allocation2 + $0x109] sm:$0xff]
      %v2666 = vld [vmem:[#allocation2 + $0x111] sm:$0xff]
      %v2667 = vld [vmem:[#allocation2 + $0x121] sm:$0xff]
      %v2668 = vld [vmem:[#allocation2 + $0x129] sm:$0xff]
      %v2669 = vld [vmem:[#allocation2 + $0x139] sm:$0xff]
      %v2670 = vld [vmem:[#allocation2 + $0x141] sm:$0xff]
      %v2671 = vld [vmem:[#allocation2 + $0x151] sm:$0xff]
      %v2672 = vld [vmem:[#allocation2 + $0x159] sm:$0xff]
      %v2673 = vld [vmem:[#allocation2 + $0x169] sm:$0xff]
      %v2674 = vld [vmem:[#allocation2 + $0x171] sm:$0xff]
      %2707 = vrot.lane.b32.xlu0 %v2643, 4
      %v2708 = vpop.permute.xlu0 %2707
      %2709 = vrot.lane.b32.xlu0 %v2644, 4
      %v2710 = vpop.permute.xlu0 %2709
      %2711 = vrot.lane.b32.xlu0 %v2645, 4
      %v2712 = vpop.permute.xlu0 %2711
      %2713 = vrot.lane.b32.xlu0 %v2646, 4
      %v2714 = vpop.permute.xlu0 %2713
      %2715 = vrot.lane.b32.xlu0 %v2647, 4
      %v2716 = vpop.permute.xlu0 %2715
      %2717 = vrot.lane.b32.xlu0 %v2648, 4
      %v2718 = vpop.permute.xlu0 %2717
      %2719 = vrot.lane.b32.xlu0 %v2649, 4
      %v2720 = vpop.permute.xlu0 %2719
      %2721 = vrot.lane.b32.xlu0 %v2650, 4
      %v2722 = vpop.permute.xlu0 %2721
      %2723 = vrot.lane.b32.xlu0 %v2651, 4
      %v2724 = vpop.permute.xlu0 %2723
      %2725 = vrot.lane.b32.xlu0 %v2652, 4
      %v2726 = vpop.permute.xlu0 %2725
      %2727 = vrot.lane.b32.xlu0 %v2653, 4
      %v2728 = vpop.permute.xlu0 %2727
      %2729 = vrot.lane.b32.xlu0 %v2654, 4
      %v2730 = vpop.permute.xlu0 %2729
      %2731 = vrot.lane.b32.xlu0 %v2655, 4
      %v2732 = vpop.permute.xlu0 %2731
      %2733 = vrot.lane.b32.xlu0 %v2656, 4
      %v2734 = vpop.permute.xlu0 %2733
      %2735 = vrot.lane.b32.xlu0 %v2657, 4
      %v2736 = vpop.permute.xlu0 %2735
      %2737 = vrot.lane.b32.xlu0 %v2658, 4
      %v2738 = vpop.permute.xlu0 %2737
      %2739 = vrot.lane.b32.xlu0 %v2659, 4
      %v2740 = vpop.permute.xlu0 %2739
      %2741 = vrot.lane.b32.xlu0 %v2660, 4
      %v2742 = vpop.permute.xlu0 %2741
      %2743 = vrot.lane.b32.xlu0 %v2661, 4
      %v2744 = vpop.permute.xlu0 %2743
      %2745 = vrot.lane.b32.xlu0 %v2662, 4
      %v2746 = vpop.permute.xlu0 %2745
      %2747 = vrot.lane.b32.xlu0 %v2663, 4
      %v2748 = vpop.permute.xlu0 %2747
      %2749 = vrot.lane.b32.xlu0 %v2664, 4
      %v2750 = vpop.permute.xlu0 %2749
      %2751 = vrot.lane.b32.xlu0 %v2665, 4
      %v2752 = vpop.permute.xlu0 %2751
      %2753 = vrot.lane.b32.xlu0 %v2666, 4
      %v2754 = vpop.permute.xlu0 %2753
      %2755 = vrot.lane.b32.xlu0 %v2667, 4
      %v2756 = vpop.permute.xlu0 %2755
      %2757 = vrot.lane.b32.xlu0 %v2668, 4
      %v2758 = vpop.permute.xlu0 %2757
      %2759 = vrot.lane.b32.xlu0 %v2669, 4
      %v2760 = vpop.permute.xlu0 %2759
      %2761 = vrot.lane.b32.xlu0 %v2670, 4
      %v2762 = vpop.permute.xlu0 %2761
      %2763 = vrot.lane.b32.xlu0 %v2671, 4
      %v2764 = vpop.permute.xlu0 %2763
      %2765 = vrot.lane.b32.xlu0 %v2672, 4
      %v2766 = vpop.permute.xlu0 %2765
      %2767 = vrot.lane.b32.xlu0 %v2673, 4
      %v2768 = vpop.permute.xlu0 %2767
      %2769 = vrot.lane.b32.xlu0 %v2674, 4
      %v2770 = vpop.permute.xlu0 %2769
      %2803 = vst.msk [vmem:[#allocation3] sm:$0xff] %vm539, %v2708
      %2804 = vst.msk [vmem:[#allocation3 + $0x8] sm:$0xff] %vm539, %v2710
      %2805 = vst.msk [vmem:[#allocation3 + $0x10] sm:$0xff] %vm539, %v2712
      %2806 = vst.msk [vmem:[#allocation3 + $0x18] sm:$0xff] %vm539, %v2714
      %2807 = vst.msk [vmem:[#allocation3 + $0x20] sm:$0xff] %vm539, %v2716
      %2808 = vst.msk [vmem:[#allocation3 + $0x28] sm:$0xff] %vm539, %v2718
      %2809 = vst.msk [vmem:[#allocation3 + $0x30] sm:$0xff] %vm539, %v2720
      %2810 = vst.msk [vmem:[#allocation3 + $0x38] sm:$0xff] %vm539, %v2722
      %2811 = vst.msk [vmem:[#allocation3 + $0x40] sm:$0xff] %vm539, %v2724
      %2812 = vst.msk [vmem:[#allocation3 + $0x48] sm:$0xff] %vm539, %v2726
      %2813 = vst.msk [vmem:[#allocation3 + $0x50] sm:$0xff] %vm539, %v2728
      %2814 = vst.msk [vmem:[#allocation3 + $0x58] sm:$0xff] %vm539, %v2730
      %2815 = vst.msk [vmem:[#allocation3 + $0x60] sm:$0xff] %vm539, %v2732
      %2816 = vst.msk [vmem:[#allocation3 + $0x68] sm:$0xff] %vm539, %v2734
      %2817 = vst.msk [vmem:[#allocation3 + $0x70] sm:$0xff] %vm539, %v2736
      %2818 = vst.msk [vmem:[#allocation3 + $0x78] sm:$0xff] %vm539, %v2738
      %2819 = vst.msk [vmem:[#allocation3 + $0x80] sm:$0xff] %vm539, %v2740
      %2820 = vst.msk [vmem:[#allocation3 + $0x88] sm:$0xff] %vm539, %v2742
      %2821 = vst.msk [vmem:[#allocation3 + $0x90] sm:$0xff] %vm539, %v2744
      %2822 = vst.msk [vmem:[#allocation3 + $0x98] sm:$0xff] %vm539, %v2746
      %2823 = vst.msk [vmem:[#allocation3 + $0xa0] sm:$0xff] %vm539, %v2748
      %2824 = vst.msk [vmem:[#allocation3 + $0xa8] sm:$0xff] %vm539, %v2750
      %2825 = vst.msk [vmem:[#allocation3 + $0xb0] sm:$0xff] %vm539, %v2752
      %2826 = vst.msk [vmem:[#allocation3 + $0xb8] sm:$0xff] %vm539, %v2754
      %2827 = vst.msk [vmem:[#allocation3 + $0xc0] sm:$0xff] %vm539, %v2756
      %2828 = vst.msk [vmem:[#allocation3 + $0xc8] sm:$0xff] %vm539, %v2758
      %2829 = vst.msk [vmem:[#allocation3 + $0xd0] sm:$0xff] %vm539, %v2760
      %2830 = vst.msk [vmem:[#allocation3 + $0xd8] sm:$0xff] %vm539, %v2762
      %2831 = vst.msk [vmem:[#allocation3 + $0xe0] sm:$0xff] %vm539, %v2764
      %2832 = vst.msk [vmem:[#allocation3 + $0xe8] sm:$0xff] %vm539, %v2766
      %2833 = vst.msk [vmem:[#allocation3 + $0xf0] sm:$0xff] %vm539, %v2768
      %2834 = vst.msk [vmem:[#allocation3 + $0xf8] sm:$0xff] %vm539, %v2770
      %v2835 = vld [vmem:[#allocation2 + $0x2] sm:$0xff]
      %v2836 = vld [vmem:[#allocation2 + $0xa] sm:$0xff]
      %v2837 = vld [vmem:[#allocation2 + $0x1a] sm:$0xff]
      %v2838 = vld [vmem:[#allocation2 + $0x22] sm:$0xff]
      %v2839 = vld [vmem:[#allocation2 + $0x32] sm:$0xff]
      %v2840 = vld [vmem:[#allocation2 + $0x3a] sm:$0xff]
      %v2841 = vld [vmem:[#allocation2 + $0x4a] sm:$0xff]
      %v2842 = vld [vmem:[#allocation2 + $0x52] sm:$0xff]
      %v2843 = vld [vmem:[#allocation2 + $0x62] sm:$0xff]
      %v2844 = vld [vmem:[#allocation2 + $0x6a] sm:$0xff]
      %v2845 = vld [vmem:[#allocation2 + $0x7a] sm:$0xff]
      %v2846 = vld [vmem:[#allocation2 + $0x82] sm:$0xff]
      %v2847 = vld [vmem:[#allocation2 + $0x92] sm:$0xff]
      %v2848 = vld [vmem:[#allocation2 + $0x9a] sm:$0xff]
      %v2849 = vld [vmem:[#allocation2 + $0xaa] sm:$0xff]
      %v2850 = vld [vmem:[#allocation2 + $0xb2] sm:$0xff]
      %v2851 = vld [vmem:[#allocation2 + $0xc2] sm:$0xff]
      %v2852 = vld [vmem:[#allocation2 + $0xca] sm:$0xff]
      %v2853 = vld [vmem:[#allocation2 + $0xda] sm:$0xff]
      %v2854 = vld [vmem:[#allocation2 + $0xe2] sm:$0xff]
      %v2855 = vld [vmem:[#allocation2 + $0xf2] sm:$0xff]
      %v2856 = vld [vmem:[#allocation2 + $0xfa] sm:$0xff]
      %v2857 = vld [vmem:[#allocation2 + $0x10a] sm:$0xff]
      %v2858 = vld [vmem:[#allocation2 + $0x112] sm:$0xff]
      %v2859 = vld [vmem:[#allocation2 + $0x122] sm:$0xff]
      %v2860 = vld [vmem:[#allocation2 + $0x12a] sm:$0xff]
      %v2861 = vld [vmem:[#allocation2 + $0x13a] sm:$0xff]
      %v2862 = vld [vmem:[#allocation2 + $0x142] sm:$0xff]
      %v2863 = vld [vmem:[#allocation2 + $0x152] sm:$0xff]
      %v2864 = vld [vmem:[#allocation2 + $0x15a] sm:$0xff]
      %v2865 = vld [vmem:[#allocation2 + $0x16a] sm:$0xff]
      %v2866 = vld [vmem:[#allocation2 + $0x172] sm:$0xff]
      %2899 = vrot.lane.b32.xlu0 %v2835, 8
      %v2900 = vpop.permute.xlu0 %2899
      %2901 = vrot.lane.b32.xlu0 %v2836, 8
      %v2902 = vpop.permute.xlu0 %2901
      %2903 = vrot.lane.b32.xlu0 %v2837, 8
      %v2904 = vpop.permute.xlu0 %2903
      %2905 = vrot.lane.b32.xlu0 %v2838, 8
      %v2906 = vpop.permute.xlu0 %2905
      %2907 = vrot.lane.b32.xlu0 %v2839, 8
      %v2908 = vpop.permute.xlu0 %2907
      %2909 = vrot.lane.b32.xlu0 %v2840, 8
      %v2910 = vpop.permute.xlu0 %2909
      %2911 = vrot.lane.b32.xlu0 %v2841, 8
      %v2912 = vpop.permute.xlu0 %2911
      %2913 = vrot.lane.b32.xlu0 %v2842, 8
      %v2914 = vpop.permute.xlu0 %2913
      %2915 = vrot.lane.b32.xlu0 %v2843, 8
      %v2916 = vpop.permute.xlu0 %2915
      %2917 = vrot.lane.b32.xlu0 %v2844, 8
      %v2918 = vpop.permute.xlu0 %2917
      %2919 = vrot.lane.b32.xlu0 %v2845, 8
      %v2920 = vpop.permute.xlu0 %2919
      %2921 = vrot.lane.b32.xlu0 %v2846, 8
      %v2922 = vpop.permute.xlu0 %2921
      %2923 = vrot.lane.b32.xlu0 %v2847, 8
      %v2924 = vpop.permute.xlu0 %2923
      %2925 = vrot.lane.b32.xlu0 %v2848, 8
      %v2926 = vpop.permute.xlu0 %2925
      %2927 = vrot.lane.b32.xlu0 %v2849, 8
      %v2928 = vpop.permute.xlu0 %2927
      %2929 = vrot.lane.b32.xlu0 %v2850, 8
      %v2930 = vpop.permute.xlu0 %2929
      %2931 = vrot.lane.b32.xlu0 %v2851, 8
      %v2932 = vpop.permute.xlu0 %2931
      %2933 = vrot.lane.b32.xlu0 %v2852, 8
      %v2934 = vpop.permute.xlu0 %2933
      %2935 = vrot.lane.b32.xlu0 %v2853, 8
      %v2936 = vpop.permute.xlu0 %2935
      %2937 = vrot.lane.b32.xlu0 %v2854, 8
      %v2938 = vpop.permute.xlu0 %2937
      %2939 = vrot.lane.b32.xlu0 %v2855, 8
      %v2940 = vpop.permute.xlu0 %2939
      %2941 = vrot.lane.b32.xlu0 %v2856, 8
      %v2942 = vpop.permute.xlu0 %2941
      %2943 = vrot.lane.b32.xlu0 %v2857, 8
      %v2944 = vpop.permute.xlu0 %2943
      %2945 = vrot.lane.b32.xlu0 %v2858, 8
      %v2946 = vpop.permute.xlu0 %2945
      %2947 = vrot.lane.b32.xlu0 %v2859, 8
      %v2948 = vpop.permute.xlu0 %2947
      %2949 = vrot.lane.b32.xlu0 %v2860, 8
      %v2950 = vpop.permute.xlu0 %2949
      %2951 = vrot.lane.b32.xlu0 %v2861, 8
      %v2952 = vpop.permute.xlu0 %2951
      %2953 = vrot.lane.b32.xlu0 %v2862, 8
      %v2954 = vpop.permute.xlu0 %2953
      %2955 = vrot.lane.b32.xlu0 %v2863, 8
      %v2956 = vpop.permute.xlu0 %2955
      %2957 = vrot.lane.b32.xlu0 %v2864, 8
      %v2958 = vpop.permute.xlu0 %2957
      %2959 = vrot.lane.b32.xlu0 %v2865, 8
      %v2960 = vpop.permute.xlu0 %2959
      %2961 = vrot.lane.b32.xlu0 %v2866, 8
      %v2962 = vpop.permute.xlu0 %2961
      %2995 = vst.msk [vmem:[#allocation3] sm:$0xff] %vm732, %v2900
      %2996 = vst.msk [vmem:[#allocation3 + $0x8] sm:$0xff] %vm732, %v2902
      %2997 = vst.msk [vmem:[#allocation3 + $0x10] sm:$0xff] %vm732, %v2904
      %2998 = vst.msk [vmem:[#allocation3 + $0x18] sm:$0xff] %vm732, %v2906
      %2999 = vst.msk [vmem:[#allocation3 + $0x20] sm:$0xff] %vm732, %v2908
      %3000 = vst.msk [vmem:[#allocation3 + $0x28] sm:$0xff] %vm732, %v2910
      %3001 = vst.msk [vmem:[#allocation3 + $0x30] sm:$0xff] %vm732, %v2912
      %3002 = vst.msk [vmem:[#allocation3 + $0x38] sm:$0xff] %vm732, %v2914
      %3003 = vst.msk [vmem:[#allocation3 + $0x40] sm:$0xff] %vm732, %v2916
      %3004 = vst.msk [vmem:[#allocation3 + $0x48] sm:$0xff] %vm732, %v2918
      %3005 = vst.msk [vmem:[#allocation3 + $0x50] sm:$0xff] %vm732, %v2920
      %3006 = vst.msk [vmem:[#allocation3 + $0x58] sm:$0xff] %vm732, %v2922
      %3007 = vst.msk [vmem:[#allocation3 + $0x60] sm:$0xff] %vm732, %v2924
      %3008 = vst.msk [vmem:[#allocation3 + $0x68] sm:$0xff] %vm732, %v2926
      %3009 = vst.msk [vmem:[#allocation3 + $0x70] sm:$0xff] %vm732, %v2928
      %3010 = vst.msk [vmem:[#allocation3 + $0x78] sm:$0xff] %vm732, %v2930
      %3011 = vst.msk [vmem:[#allocation3 + $0x80] sm:$0xff] %vm732, %v2932
      %3012 = vst.msk [vmem:[#allocation3 + $0x88] sm:$0xff] %vm732, %v2934
      %3013 = vst.msk [vmem:[#allocation3 + $0x90] sm:$0xff] %vm732, %v2936
      %3014 = vst.msk [vmem:[#allocation3 + $0x98] sm:$0xff] %vm732, %v2938
      %3015 = vst.msk [vmem:[#allocation3 + $0xa0] sm:$0xff] %vm732, %v2940
      %3016 = vst.msk [vmem:[#allocation3 + $0xa8] sm:$0xff] %vm732, %v2942
      %3017 = vst.msk [vmem:[#allocation3 + $0xb0] sm:$0xff] %vm732, %v2944
      %3018 = vst.msk [vmem:[#allocation3 + $0xb8] sm:$0xff] %vm732, %v2946
      %3019 = vst.msk [vmem:[#allocation3 + $0xc0] sm:$0xff] %vm732, %v2948
      %3020 = vst.msk [vmem:[#allocation3 + $0xc8] sm:$0xff] %vm732, %v2950
      %3021 = vst.msk [vmem:[#allocation3 + $0xd0] sm:$0xff] %vm732, %v2952
      %3022 = vst.msk [vmem:[#allocation3 + $0xd8] sm:$0xff] %vm732, %v2954
      %3023 = vst.msk [vmem:[#allocation3 + $0xe0] sm:$0xff] %vm732, %v2956
      %3024 = vst.msk [vmem:[#allocation3 + $0xe8] sm:$0xff] %vm732, %v2958
      %3025 = vst.msk [vmem:[#allocation3 + $0xf0] sm:$0xff] %vm732, %v2960
      %3026 = vst.msk [vmem:[#allocation3 + $0xf8] sm:$0xff] %vm732, %v2962
      %v3027 = vld [vmem:[%s203] sm:$0xff]
      %v3028 = vld [vmem:[%s203 + $0x8] sm:$0xff]
      %v3029 = vld [vmem:[%s203 + $0x18] sm:$0xff]
      %v3030 = vld [vmem:[%s203 + $0x20] sm:$0xff]
      %v3031 = vld [vmem:[%s203 + $0x30] sm:$0xff]
      %v3032 = vld [vmem:[%s203 + $0x38] sm:$0xff]
      %v3033 = vld [vmem:[%s203 + $0x48] sm:$0xff]
      %v3034 = vld [vmem:[%s203 + $0x50] sm:$0xff]
      %v3035 = vld [vmem:[%s203 + $0x60] sm:$0xff]
      %v3036 = vld [vmem:[%s203 + $0x68] sm:$0xff]
      %v3037 = vld [vmem:[%s203 + $0x78] sm:$0xff]
      %v3038 = vld [vmem:[%s203 + $0x80] sm:$0xff]
      %v3039 = vld [vmem:[%s203 + $0x90] sm:$0xff]
      %v3040 = vld [vmem:[%s203 + $0x98] sm:$0xff]
      %v3041 = vld [vmem:[%s203 + $0xa8] sm:$0xff]
      %v3042 = vld [vmem:[%s203 + $0xb0] sm:$0xff]
      %v3043 = vld [vmem:[%s203 + $0xc0] sm:$0xff]
      %v3044 = vld [vmem:[%s203 + $0xc8] sm:$0xff]
      %v3045 = vld [vmem:[%s203 + $0xd8] sm:$0xff]
      %v3046 = vld [vmem:[%s203 + $0xe0] sm:$0xff]
      %v3047 = vld [vmem:[%s203 + $0xf0] sm:$0xff]
      %v3048 = vld [vmem:[%s203 + $0xf8] sm:$0xff]
      %v3049 = vld [vmem:[%s203 + $0x108] sm:$0xff]
      %v3050 = vld [vmem:[%s203 + $0x110] sm:$0xff]
      %v3051 = vld [vmem:[%s203 + $0x120] sm:$0xff]
      %v3052 = vld [vmem:[%s203 + $0x128] sm:$0xff]
      %v3053 = vld [vmem:[%s203 + $0x138] sm:$0xff]
      %v3054 = vld [vmem:[%s203 + $0x140] sm:$0xff]
      %v3055 = vld [vmem:[%s203 + $0x150] sm:$0xff]
      %v3056 = vld [vmem:[%s203 + $0x158] sm:$0xff]
      %v3057 = vld [vmem:[%s203 + $0x168] sm:$0xff]
      %v3058 = vld [vmem:[%s203 + $0x170] sm:$0xff]
      %3091 = vrot.lane.b32.xlu0 %v3027, 12
      %v3092 = vpop.permute.xlu0 %3091
      %3093 = vrot.lane.b32.xlu0 %v3028, 12
      %v3094 = vpop.permute.xlu0 %3093
      %3095 = vrot.lane.b32.xlu0 %v3029, 12
      %v3096 = vpop.permute.xlu0 %3095
      %3097 = vrot.lane.b32.xlu0 %v3030, 12
      %v3098 = vpop.permute.xlu0 %3097
      %3099 = vrot.lane.b32.xlu0 %v3031, 12
      %v3100 = vpop.permute.xlu0 %3099
      %3101 = vrot.lane.b32.xlu0 %v3032, 12
      %v3102 = vpop.permute.xlu0 %3101
      %3103 = vrot.lane.b32.xlu0 %v3033, 12
      %v3104 = vpop.permute.xlu0 %3103
      %3105 = vrot.lane.b32.xlu0 %v3034, 12
      %v3106 = vpop.permute.xlu0 %3105
      %3107 = vrot.lane.b32.xlu0 %v3035, 12
      %v3108 = vpop.permute.xlu0 %3107
      %3109 = vrot.lane.b32.xlu0 %v3036, 12
      %v3110 = vpop.permute.xlu0 %3109
      %3111 = vrot.lane.b32.xlu0 %v3037, 12
      %v3112 = vpop.permute.xlu0 %3111
      %3113 = vrot.lane.b32.xlu0 %v3038, 12
      %v3114 = vpop.permute.xlu0 %3113
      %3115 = vrot.lane.b32.xlu0 %v3039, 12
      %v3116 = vpop.permute.xlu0 %3115
      %3117 = vrot.lane.b32.xlu0 %v3040, 12
      %v3118 = vpop.permute.xlu0 %3117
      %3119 = vrot.lane.b32.xlu0 %v3041, 12
      %v3120 = vpop.permute.xlu0 %3119
      %3121 = vrot.lane.b32.xlu0 %v3042, 12
      %v3122 = vpop.permute.xlu0 %3121
      %3123 = vrot.lane.b32.xlu0 %v3043, 12
      %v3124 = vpop.permute.xlu0 %3123
      %3125 = vrot.lane.b32.xlu0 %v3044, 12
      %v3126 = vpop.permute.xlu0 %3125
      %3127 = vrot.lane.b32.xlu0 %v3045, 12
      %v3128 = vpop.permute.xlu0 %3127
      %3129 = vrot.lane.b32.xlu0 %v3046, 12
      %v3130 = vpop.permute.xlu0 %3129
      %3131 = vrot.lane.b32.xlu0 %v3047, 12
      %v3132 = vpop.permute.xlu0 %3131
      %3133 = vrot.lane.b32.xlu0 %v3048, 12
      %v3134 = vpop.permute.xlu0 %3133
      %3135 = vrot.lane.b32.xlu0 %v3049, 12
      %v3136 = vpop.permute.xlu0 %3135
      %3137 = vrot.lane.b32.xlu0 %v3050, 12
      %v3138 = vpop.permute.xlu0 %3137
      %3139 = vrot.lane.b32.xlu0 %v3051, 12
      %v3140 = vpop.permute.xlu0 %3139
      %3141 = vrot.lane.b32.xlu0 %v3052, 12
      %v3142 = vpop.permute.xlu0 %3141
      %3143 = vrot.lane.b32.xlu0 %v3053, 12
      %v3144 = vpop.permute.xlu0 %3143
      %3145 = vrot.lane.b32.xlu0 %v3054, 12
      %v3146 = vpop.permute.xlu0 %3145
      %3147 = vrot.lane.b32.xlu0 %v3055, 12
      %v3148 = vpop.permute.xlu0 %3147
      %3149 = vrot.lane.b32.xlu0 %v3056, 12
      %v3150 = vpop.permute.xlu0 %3149
      %3151 = vrot.lane.b32.xlu0 %v3057, 12
      %v3152 = vpop.permute.xlu0 %3151
      %3153 = vrot.lane.b32.xlu0 %v3058, 12
      %v3154 = vpop.permute.xlu0 %3153
      %3187 = vst.msk [vmem:[#allocation3] sm:$0xff] %vm925, %v3092
      %3188 = vst.msk [vmem:[#allocation3 + $0x8] sm:$0xff] %vm925, %v3094
      %3189 = vst.msk [vmem:[#allocation3 + $0x10] sm:$0xff] %vm925, %v3096
      %3190 = vst.msk [vmem:[#allocation3 + $0x18] sm:$0xff] %vm925, %v3098
      %3191 = vst.msk [vmem:[#allocation3 + $0x20] sm:$0xff] %vm925, %v3100
      %3192 = vst.msk [vmem:[#allocation3 + $0x28] sm:$0xff] %vm925, %v3102
      %3193 = vst.msk [vmem:[#allocation3 + $0x30] sm:$0xff] %vm925, %v3104
      %3194 = vst.msk [vmem:[#allocation3 + $0x38] sm:$0xff] %vm925, %v3106
      %3195 = vst.msk [vmem:[#allocation3 + $0x40] sm:$0xff] %vm925, %v3108
      %3196 = vst.msk [vmem:[#allocation3 + $0x48] sm:$0xff] %vm925, %v3110
      %3197 = vst.msk [vmem:[#allocation3 + $0x50] sm:$0xff] %vm925, %v3112
      %3198 = vst.msk [vmem:[#allocation3 + $0x58] sm:$0xff] %vm925, %v3114
      %3199 = vst.msk [vmem:[#allocation3 + $0x60] sm:$0xff] %vm925, %v3116
      %3200 = vst.msk [vmem:[#allocation3 + $0x68] sm:$0xff] %vm925, %v3118
      %3201 = vst.msk [vmem:[#allocation3 + $0x70] sm:$0xff] %vm925, %v3120
      %3202 = vst.msk [vmem:[#allocation3 + $0x78] sm:$0xff] %vm925, %v3122
      %3203 = vst.msk [vmem:[#allocation3 + $0x80] sm:$0xff] %vm925, %v3124
      %3204 = vst.msk [vmem:[#allocation3 + $0x88] sm:$0xff] %vm925, %v3126
      %3205 = vst.msk [vmem:[#allocation3 + $0x90] sm:$0xff] %vm925, %v3128
      %3206 = vst.msk [vmem:[#allocation3 + $0x98] sm:$0xff] %vm925, %v3130
      %3207 = vst.msk [vmem:[#allocation3 + $0xa0] sm:$0xff] %vm925, %v3132
      %3208 = vst.msk [vmem:[#allocation3 + $0xa8] sm:$0xff] %vm925, %v3134
      %3209 = vst.msk [vmem:[#allocation3 + $0xb0] sm:$0xff] %vm925, %v3136
      %3210 = vst.msk [vmem:[#allocation3 + $0xb8] sm:$0xff] %vm925, %v3138
      %3211 = vst.msk [vmem:[#allocation3 + $0xc0] sm:$0xff] %vm925, %v3140
      %3212 = vst.msk [vmem:[#allocation3 + $0xc8] sm:$0xff] %vm925, %v3142
      %3213 = vst.msk [vmem:[#allocation3 + $0xd0] sm:$0xff] %vm925, %v3144
      %3214 = vst.msk [vmem:[#allocation3 + $0xd8] sm:$0xff] %vm925, %v3146
      %3215 = vst.msk [vmem:[#allocation3 + $0xe0] sm:$0xff] %vm925, %v3148
      %3216 = vst.msk [vmem:[#allocation3 + $0xe8] sm:$0xff] %vm925, %v3150
      %3217 = vst.msk [vmem:[#allocation3 + $0xf0] sm:$0xff] %vm925, %v3152
      %3218 = vst.msk [vmem:[#allocation3 + $0xf8] sm:$0xff] %vm925, %v3154
      %v3219 = vld [vmem:[%s203 + $0x1] sm:$0xff]
      %v3220 = vld [vmem:[%s203 + $0x9] sm:$0xff]
      %v3221 = vld [vmem:[%s203 + $0x19] sm:$0xff]
      %v3222 = vld [vmem:[%s203 + $0x21] sm:$0xff]
      %v3223 = vld [vmem:[%s203 + $0x31] sm:$0xff]
      %v3224 = vld [vmem:[%s203 + $0x39] sm:$0xff]
      %v3225 = vld [vmem:[%s203 + $0x49] sm:$0xff]
      %v3226 = vld [vmem:[%s203 + $0x51] sm:$0xff]
      %v3227 = vld [vmem:[%s203 + $0x61] sm:$0xff]
      %v3228 = vld [vmem:[%s203 + $0x69] sm:$0xff]
      %v3229 = vld [vmem:[%s203 + $0x79] sm:$0xff]
      %v3230 = vld [vmem:[%s203 + $0x81] sm:$0xff]
      %v3231 = vld [vmem:[%s203 + $0x91] sm:$0xff]
      %v3232 = vld [vmem:[%s203 + $0x99] sm:$0xff]
      %v3233 = vld [vmem:[%s203 + $0xa9] sm:$0xff]
      %v3234 = vld [vmem:[%s203 + $0xb1] sm:$0xff]
      %v3235 = vld [vmem:[%s203 + $0xc1] sm:$0xff]
      %v3236 = vld [vmem:[%s203 + $0xc9] sm:$0xff]
      %v3237 = vld [vmem:[%s203 + $0xd9] sm:$0xff]
      %v3238 = vld [vmem:[%s203 + $0xe1] sm:$0xff]
      %v3239 = vld [vmem:[%s203 + $0xf1] sm:$0xff]
      %v3240 = vld [vmem:[%s203 + $0xf9] sm:$0xff]
      %v3241 = vld [vmem:[%s203 + $0x109] sm:$0xff]
      %v3242 = vld [vmem:[%s203 + $0x111] sm:$0xff]
      %v3243 = vld [vmem:[%s203 + $0x121] sm:$0xff]
      %v3244 = vld [vmem:[%s203 + $0x129] sm:$0xff]
      %v3245 = vld [vmem:[%s203 + $0x139] sm:$0xff]
      %v3246 = vld [vmem:[%s203 + $0x141] sm:$0xff]
      %v3247 = vld [vmem:[%s203 + $0x151] sm:$0xff]
      %v3248 = vld [vmem:[%s203 + $0x159] sm:$0xff]
      %v3249 = vld [vmem:[%s203 + $0x169] sm:$0xff]
      %v3250 = vld [vmem:[%s203 + $0x171] sm:$0xff]
      %3283 = vrot.lane.b32.xlu0 %v3219, 16
      %v3284 = vpop.permute.xlu0 %3283
      %3285 = vrot.lane.b32.xlu0 %v3220, 16
      %v3286 = vpop.permute.xlu0 %3285
      %3287 = vrot.lane.b32.xlu0 %v3221, 16
      %v3288 = vpop.permute.xlu0 %3287
      %3289 = vrot.lane.b32.xlu0 %v3222, 16
      %v3290 = vpop.permute.xlu0 %3289
      %3291 = vrot.lane.b32.xlu0 %v3223, 16
      %v3292 = vpop.permute.xlu0 %3291
      %3293 = vrot.lane.b32.xlu0 %v3224, 16
      %v3294 = vpop.permute.xlu0 %3293
      %3295 = vrot.lane.b32.xlu0 %v3225, 16
      %v3296 = vpop.permute.xlu0 %3295
      %3297 = vrot.lane.b32.xlu0 %v3226, 16
      %v3298 = vpop.permute.xlu0 %3297
      %3299 = vrot.lane.b32.xlu0 %v3227, 16
      %v3300 = vpop.permute.xlu0 %3299
      %3301 = vrot.lane.b32.xlu0 %v3228, 16
      %v3302 = vpop.permute.xlu0 %3301
      %3303 = vrot.lane.b32.xlu0 %v3229, 16
      %v3304 = vpop.permute.xlu0 %3303
      %3305 = vrot.lane.b32.xlu0 %v3230, 16
      %v3306 = vpop.permute.xlu0 %3305
      %3307 = vrot.lane.b32.xlu0 %v3231, 16
      %v3308 = vpop.permute.xlu0 %3307
      %3309 = vrot.lane.b32.xlu0 %v3232, 16
      %v3310 = vpop.permute.xlu0 %3309
      %3311 = vrot.lane.b32.xlu0 %v3233, 16
      %v3312 = vpop.permute.xlu0 %3311
      %3313 = vrot.lane.b32.xlu0 %v3234, 16
      %v3314 = vpop.permute.xlu0 %3313
      %3315 = vrot.lane.b32.xlu0 %v3235, 16
      %v3316 = vpop.permute.xlu0 %3315
      %3317 = vrot.lane.b32.xlu0 %v3236, 16
      %v3318 = vpop.permute.xlu0 %3317
      %3319 = vrot.lane.b32.xlu0 %v3237, 16
      %v3320 = vpop.permute.xlu0 %3319
      %3321 = vrot.lane.b32.xlu0 %v3238, 16
      %v3322 = vpop.permute.xlu0 %3321
      %3323 = vrot.lane.b32.xlu0 %v3239, 16
      %v3324 = vpop.permute.xlu0 %3323
      %3325 = vrot.lane.b32.xlu0 %v3240, 16
      %v3326 = vpop.permute.xlu0 %3325
      %3327 = vrot.lane.b32.xlu0 %v3241, 16
      %v3328 = vpop.permute.xlu0 %3327
      %3329 = vrot.lane.b32.xlu0 %v3242, 16
      %v3330 = vpop.permute.xlu0 %3329
      %3331 = vrot.lane.b32.xlu0 %v3243, 16
      %v3332 = vpop.permute.xlu0 %3331
      %3333 = vrot.lane.b32.xlu0 %v3244, 16
      %v3334 = vpop.permute.xlu0 %3333
      %3335 = vrot.lane.b32.xlu0 %v3245, 16
      %v3336 = vpop.permute.xlu0 %3335
      %3337 = vrot.lane.b32.xlu0 %v3246, 16
      %v3338 = vpop.permute.xlu0 %3337
      %3339 = vrot.lane.b32.xlu0 %v3247, 16
      %v3340 = vpop.permute.xlu0 %3339
      %3341 = vrot.lane.b32.xlu0 %v3248, 16
      %v3342 = vpop.permute.xlu0 %3341
      %3343 = vrot.lane.b32.xlu0 %v3249, 16
      %v3344 = vpop.permute.xlu0 %3343
      %3345 = vrot.lane.b32.xlu0 %v3250, 16
      %v3346 = vpop.permute.xlu0 %3345
      %3379 = vst.msk [vmem:[#allocation3] sm:$0xff] %vm1118, %v3284
      %3380 = vst.msk [vmem:[#allocation3 + $0x8] sm:$0xff] %vm1118, %v3286
      %3381 = vst.msk [vmem:[#allocation3 + $0x10] sm:$0xff] %vm1118, %v3288
      %3382 = vst.msk [vmem:[#allocation3 + $0x18] sm:$0xff] %vm1118, %v3290
      %3383 = vst.msk [vmem:[#allocation3 + $0x20] sm:$0xff] %vm1118, %v3292
      %3384 = vst.msk [vmem:[#allocation3 + $0x28] sm:$0xff] %vm1118, %v3294
      %3385 = vst.msk [vmem:[#allocation3 + $0x30] sm:$0xff] %vm1118, %v3296
      %3386 = vst.msk [vmem:[#allocation3 + $0x38] sm:$0xff] %vm1118, %v3298
      %3387 = vst.msk [vmem:[#allocation3 + $0x40] sm:$0xff] %vm1118, %v3300
      %3388 = vst.msk [vmem:[#allocation3 + $0x48] sm:$0xff] %vm1118, %v3302
      %3389 = vst.msk [vmem:[#allocation3 + $0x50] sm:$0xff] %vm1118, %v3304
      %3390 = vst.msk [vmem:[#allocation3 + $0x58] sm:$0xff] %vm1118, %v3306
      %3391 = vst.msk [vmem:[#allocation3 + $0x60] sm:$0xff] %vm1118, %v3308
      %3392 = vst.msk [vmem:[#allocation3 + $0x68] sm:$0xff] %vm1118, %v3310
      %3393 = vst.msk [vmem:[#allocation3 + $0x70] sm:$0xff] %vm1118, %v3312
      %3394 = vst.msk [vmem:[#allocation3 + $0x78] sm:$0xff] %vm1118, %v3314
      %3395 = vst.msk [vmem:[#allocation3 + $0x80] sm:$0xff] %vm1118, %v3316
      %3396 = vst.msk [vmem:[#allocation3 + $0x88] sm:$0xff] %vm1118, %v3318
      %3397 = vst.msk [vmem:[#allocation3 + $0x90] sm:$0xff] %vm1118, %v3320
      %3398 = vst.msk [vmem:[#allocation3 + $0x98] sm:$0xff] %vm1118, %v3322
      %3399 = vst.msk [vmem:[#allocation3 + $0xa0] sm:$0xff] %vm1118, %v3324
      %3400 = vst.msk [vmem:[#allocation3 + $0xa8] sm:$0xff] %vm1118, %v3326
      %3401 = vst.msk [vmem:[#allocation3 + $0xb0] sm:$0xff] %vm1118, %v3328
      %3402 = vst.msk [vmem:[#allocation3 + $0xb8] sm:$0xff] %vm1118, %v3330
      %3403 = vst.msk [vmem:[#allocation3 + $0xc0] sm:$0xff] %vm1118, %v3332
      %3404 = vst.msk [vmem:[#allocation3 + $0xc8] sm:$0xff] %vm1118, %v3334
      %3405 = vst.msk [vmem:[#allocation3 + $0xd0] sm:$0xff] %vm1118, %v3336
      %3406 = vst.msk [vmem:[#allocation3 + $0xd8] sm:$0xff] %vm1118, %v3338
      %3407 = vst.msk [vmem:[#allocation3 + $0xe0] sm:$0xff] %vm1118, %v3340
      %3408 = vst.msk [vmem:[#allocation3 + $0xe8] sm:$0xff] %vm1118, %v3342
      %3409 = vst.msk [vmem:[#allocation3 + $0xf0] sm:$0xff] %vm1118, %v3344
      %3410 = vst.msk [vmem:[#allocation3 + $0xf8] sm:$0xff] %vm1118, %v3346
      %v3411 = vld [vmem:[%s203 + $0x2] sm:$0xff]
      %v3412 = vld [vmem:[%s203 + $0xa] sm:$0xff]
      %v3413 = vld [vmem:[%s203 + $0x1a] sm:$0xff]
      %v3414 = vld [vmem:[%s203 + $0x22] sm:$0xff]
      %v3415 = vld [vmem:[%s203 + $0x32] sm:$0xff]
      %v3416 = vld [vmem:[%s203 + $0x3a] sm:$0xff]
      %v3417 = vld [vmem:[%s203 + $0x4a] sm:$0xff]
      %v3418 = vld [vmem:[%s203 + $0x52] sm:$0xff]
      %v3419 = vld [vmem:[%s203 + $0x62] sm:$0xff]
      %v3420 = vld [vmem:[%s203 + $0x6a] sm:$0xff]
      %v3421 = vld [vmem:[%s203 + $0x7a] sm:$0xff]
      %v3422 = vld [vmem:[%s203 + $0x82] sm:$0xff]
      %v3423 = vld [vmem:[%s203 + $0x92] sm:$0xff]
      %v3424 = vld [vmem:[%s203 + $0x9a] sm:$0xff]
      %v3425 = vld [vmem:[%s203 + $0xaa] sm:$0xff]
      %v3426 = vld [vmem:[%s203 + $0xb2] sm:$0xff]
      %v3427 = vld [vmem:[%s203 + $0xc2] sm:$0xff]
      %v3428 = vld [vmem:[%s203 + $0xca] sm:$0xff]
      %v3429 = vld [vmem:[%s203 + $0xda] sm:$0xff]
      %v3430 = vld [vmem:[%s203 + $0xe2] sm:$0xff]
      %v3431 = vld [vmem:[%s203 + $0xf2] sm:$0xff]
      %v3432 = vld [vmem:[%s203 + $0xfa] sm:$0xff]
      %v3433 = vld [vmem:[%s203 + $0x10a] sm:$0xff]
      %v3434 = vld [vmem:[%s203 + $0x112] sm:$0xff]
      %v3435 = vld [vmem:[%s203 + $0x122] sm:$0xff]
      %v3436 = vld [vmem:[%s203 + $0x12a] sm:$0xff]
      %v3437 = vld [vmem:[%s203 + $0x13a] sm:$0xff]
      %v3438 = vld [vmem:[%s203 + $0x142] sm:$0xff]
      %v3439 = vld [vmem:[%s203 + $0x152] sm:$0xff]
      %v3440 = vld [vmem:[%s203 + $0x15a] sm:$0xff]
      %v3441 = vld [vmem:[%s203 + $0x16a] sm:$0xff]
      %v3442 = vld [vmem:[%s203 + $0x172] sm:$0xff]
      %3475 = vrot.lane.b32.xlu0 %v3411, 20
      %v3476 = vpop.permute.xlu0 %3475
      %3477 = vrot.lane.b32.xlu0 %v3412, 20
      %v3478 = vpop.permute.xlu0 %3477
      %3479 = vrot.lane.b32.xlu0 %v3413, 20
      %v3480 = vpop.permute.xlu0 %3479
      %3481 = vrot.lane.b32.xlu0 %v3414, 20
      %v3482 = vpop.permute.xlu0 %3481
      %3483 = vrot.lane.b32.xlu0 %v3415, 20
      %v3484 = vpop.permute.xlu0 %3483
      %3485 = vrot.lane.b32.xlu0 %v3416, 20
      %v3486 = vpop.permute.xlu0 %3485
      %3487 = vrot.lane.b32.xlu0 %v3417, 20
      %v3488 = vpop.permute.xlu0 %3487
      %3489 = vrot.lane.b32.xlu0 %v3418, 20
      %v3490 = vpop.permute.xlu0 %3489
      %3491 = vrot.lane.b32.xlu0 %v3419, 20
      %v3492 = vpop.permute.xlu0 %3491
      %3493 = vrot.lane.b32.xlu0 %v3420, 20
      %v3494 = vpop.permute.xlu0 %3493
      %3495 = vrot.lane.b32.xlu0 %v3421, 20
      %v3496 = vpop.permute.xlu0 %3495
      %3497 = vrot.lane.b32.xlu0 %v3422, 20
      %v3498 = vpop.permute.xlu0 %3497
      %3499 = vrot.lane.b32.xlu0 %v3423, 20
      %v3500 = vpop.permute.xlu0 %3499
      %3501 = vrot.lane.b32.xlu0 %v3424, 20
      %v3502 = vpop.permute.xlu0 %3501
      %3503 = vrot.lane.b32.xlu0 %v3425, 20
      %v3504 = vpop.permute.xlu0 %3503
      %3505 = vrot.lane.b32.xlu0 %v3426, 20
      %v3506 = vpop.permute.xlu0 %3505
      %3507 = vrot.lane.b32.xlu0 %v3427, 20
      %v3508 = vpop.permute.xlu0 %3507
      %3509 = vrot.lane.b32.xlu0 %v3428, 20
      %v3510 = vpop.permute.xlu0 %3509
      %3511 = vrot.lane.b32.xlu0 %v3429, 20
      %v3512 = vpop.permute.xlu0 %3511
      %3513 = vrot.lane.b32.xlu0 %v3430, 20
      %v3514 = vpop.permute.xlu0 %3513
      %3515 = vrot.lane.b32.xlu0 %v3431, 20
      %v3516 = vpop.permute.xlu0 %3515
      %3517 = vrot.lane.b32.xlu0 %v3432, 20
      %v3518 = vpop.permute.xlu0 %3517
      %3519 = vrot.lane.b32.xlu0 %v3433, 20
      %v3520 = vpop.permute.xlu0 %3519
      %3521 = vrot.lane.b32.xlu0 %v3434, 20
      %v3522 = vpop.permute.xlu0 %3521
      %3523 = vrot.lane.b32.xlu0 %v3435, 20
      %v3524 = vpop.permute.xlu0 %3523
      %3525 = vrot.lane.b32.xlu0 %v3436, 20
      %v3526 = vpop.permute.xlu0 %3525
      %3527 = vrot.lane.b32.xlu0 %v3437, 20
      %v3528 = vpop.permute.xlu0 %3527
      %3529 = vrot.lane.b32.xlu0 %v3438, 20
      %v3530 = vpop.permute.xlu0 %3529
      %3531 = vrot.lane.b32.xlu0 %v3439, 20
      %v3532 = vpop.permute.xlu0 %3531
      %3533 = vrot.lane.b32.xlu0 %v3440, 20
      %v3534 = vpop.permute.xlu0 %3533
      %3535 = vrot.lane.b32.xlu0 %v3441, 20
      %v3536 = vpop.permute.xlu0 %3535
      %3537 = vrot.lane.b32.xlu0 %v3442, 20
      %v3538 = vpop.permute.xlu0 %3537
      %3571 = vst.msk [vmem:[#allocation3] sm:$0xff] %vm1311, %v3476
      %3572 = vst.msk [vmem:[#allocation3 + $0x8] sm:$0xff] %vm1311, %v3478
      %3573 = vst.msk [vmem:[#allocation3 + $0x10] sm:$0xff] %vm1311, %v3480
      %3574 = vst.msk [vmem:[#allocation3 + $0x18] sm:$0xff] %vm1311, %v3482
      %3575 = vst.msk [vmem:[#allocation3 + $0x20] sm:$0xff] %vm1311, %v3484
      %3576 = vst.msk [vmem:[#allocation3 + $0x28] sm:$0xff] %vm1311, %v3486
      %3577 = vst.msk [vmem:[#allocation3 + $0x30] sm:$0xff] %vm1311, %v3488
      %3578 = vst.msk [vmem:[#allocation3 + $0x38] sm:$0xff] %vm1311, %v3490
      %3579 = vst.msk [vmem:[#allocation3 + $0x40] sm:$0xff] %vm1311, %v3492
      %3580 = vst.msk [vmem:[#allocation3 + $0x48] sm:$0xff] %vm1311, %v3494
      %3581 = vst.msk [vmem:[#allocation3 + $0x50] sm:$0xff] %vm1311, %v3496
      %3582 = vst.msk [vmem:[#allocation3 + $0x58] sm:$0xff] %vm1311, %v3498
      %3583 = vst.msk [vmem:[#allocation3 + $0x60] sm:$0xff] %vm1311, %v3500
      %3584 = vst.msk [vmem:[#allocation3 + $0x68] sm:$0xff] %vm1311, %v3502
      %3585 = vst.msk [vmem:[#allocation3 + $0x70] sm:$0xff] %vm1311, %v3504
      %3586 = vst.msk [vmem:[#allocation3 + $0x78] sm:$0xff] %vm1311, %v3506
      %3587 = vst.msk [vmem:[#allocation3 + $0x80] sm:$0xff] %vm1311, %v3508
      %3588 = vst.msk [vmem:[#allocation3 + $0x88] sm:$0xff] %vm1311, %v3510
      %3589 = vst.msk [vmem:[#allocation3 + $0x90] sm:$0xff] %vm1311, %v3512
      %3590 = vst.msk [vmem:[#allocation3 + $0x98] sm:$0xff] %vm1311, %v3514
      %3591 = vst.msk [vmem:[#allocation3 + $0xa0] sm:$0xff] %vm1311, %v3516
      %3592 = vst.msk [vmem:[#allocation3 + $0xa8] sm:$0xff] %vm1311, %v3518
      %3593 = vst.msk [vmem:[#allocation3 + $0xb0] sm:$0xff] %vm1311, %v3520
      %3594 = vst.msk [vmem:[#allocation3 + $0xb8] sm:$0xff] %vm1311, %v3522
      %3595 = vst.msk [vmem:[#allocation3 + $0xc0] sm:$0xff] %vm1311, %v3524
      %3596 = vst.msk [vmem:[#allocation3 + $0xc8] sm:$0xff] %vm1311, %v3526
      %3597 = vst.msk [vmem:[#allocation3 + $0xd0] sm:$0xff] %vm1311, %v3528
      %3598 = vst.msk [vmem:[#allocation3 + $0xd8] sm:$0xff] %vm1311, %v3530
      %3599 = vst.msk [vmem:[#allocation3 + $0xe0] sm:$0xff] %vm1311, %v3532
      %3600 = vst.msk [vmem:[#allocation3 + $0xe8] sm:$0xff] %vm1311, %v3534
      %3601 = vst.msk [vmem:[#allocation3 + $0xf0] sm:$0xff] %vm1311, %v3536
      %3602 = vst.msk [vmem:[#allocation3 + $0xf8] sm:$0xff] %vm1311, %v3538
      %v3603 = vld [vmem:[%s1344] sm:$0xff]
      %v3604 = vld [vmem:[%s1344 + $0x8] sm:$0xff]
      %v3605 = vld [vmem:[%s1344 + $0x18] sm:$0xff]
      %v3606 = vld [vmem:[%s1344 + $0x20] sm:$0xff]
      %v3607 = vld [vmem:[%s1344 + $0x30] sm:$0xff]
      %v3608 = vld [vmem:[%s1344 + $0x38] sm:$0xff]
      %v3609 = vld [vmem:[%s1344 + $0x48] sm:$0xff]
      %v3610 = vld [vmem:[%s1344 + $0x50] sm:$0xff]
      %v3611 = vld [vmem:[%s1344 + $0x60] sm:$0xff]
      %v3612 = vld [vmem:[%s1344 + $0x68] sm:$0xff]
      %v3613 = vld [vmem:[%s1344 + $0x78] sm:$0xff]
      %v3614 = vld [vmem:[%s1344 + $0x80] sm:$0xff]
      %v3615 = vld [vmem:[%s1344 + $0x90] sm:$0xff]
      %v3616 = vld [vmem:[%s1344 + $0x98] sm:$0xff]
      %v3617 = vld [vmem:[%s1344 + $0xa8] sm:$0xff]
      %v3618 = vld [vmem:[%s1344 + $0xb0] sm:$0xff]
      %v3619 = vld [vmem:[%s1344 + $0xc0] sm:$0xff]
      %v3620 = vld [vmem:[%s1344 + $0xc8] sm:$0xff]
      %v3621 = vld [vmem:[%s1344 + $0xd8] sm:$0xff]
      %v3622 = vld [vmem:[%s1344 + $0xe0] sm:$0xff]
      %v3623 = vld [vmem:[%s1344 + $0xf0] sm:$0xff]
      %v3624 = vld [vmem:[%s1344 + $0xf8] sm:$0xff]
      %v3625 = vld [vmem:[%s1344 + $0x108] sm:$0xff]
      %v3626 = vld [vmem:[%s1344 + $0x110] sm:$0xff]
      %v3627 = vld [vmem:[%s1344 + $0x120] sm:$0xff]
      %v3628 = vld [vmem:[%s1344 + $0x128] sm:$0xff]
      %v3629 = vld [vmem:[%s1344 + $0x138] sm:$0xff]
      %v3630 = vld [vmem:[%s1344 + $0x140] sm:$0xff]
      %v3631 = vld [vmem:[%s1344 + $0x150] sm:$0xff]
      %v3632 = vld [vmem:[%s1344 + $0x158] sm:$0xff]
      %v3633 = vld [vmem:[%s1344 + $0x168] sm:$0xff]
      %v3634 = vld [vmem:[%s1344 + $0x170] sm:$0xff]
      %3667 = vrot.lane.b32.xlu0 %v3603, 24
      %v3668 = vpop.permute.xlu0 %3667
      %3669 = vrot.lane.b32.xlu0 %v3604, 24
      %v3670 = vpop.permute.xlu0 %3669
      %3671 = vrot.lane.b32.xlu0 %v3605, 24
      %v3672 = vpop.permute.xlu0 %3671
      %3673 = vrot.lane.b32.xlu0 %v3606, 24
      %v3674 = vpop.permute.xlu0 %3673
      %3675 = vrot.lane.b32.xlu0 %v3607, 24
      %v3676 = vpop.permute.xlu0 %3675
      %3677 = vrot.lane.b32.xlu0 %v3608, 24
      %v3678 = vpop.permute.xlu0 %3677
      %3679 = vrot.lane.b32.xlu0 %v3609, 24
      %v3680 = vpop.permute.xlu0 %3679
      %3681 = vrot.lane.b32.xlu0 %v3610, 24
      %v3682 = vpop.permute.xlu0 %3681
      %3683 = vrot.lane.b32.xlu0 %v3611, 24
      %v3684 = vpop.permute.xlu0 %3683
      %3685 = vrot.lane.b32.xlu0 %v3612, 24
      %v3686 = vpop.permute.xlu0 %3685
      %3687 = vrot.lane.b32.xlu0 %v3613, 24
      %v3688 = vpop.permute.xlu0 %3687
      %3689 = vrot.lane.b32.xlu0 %v3614, 24
      %v3690 = vpop.permute.xlu0 %3689
      %3691 = vrot.lane.b32.xlu0 %v3615, 24
      %v3692 = vpop.permute.xlu0 %3691
      %3693 = vrot.lane.b32.xlu0 %v3616, 24
      %v3694 = vpop.permute.xlu0 %3693
      %3695 = vrot.lane.b32.xlu0 %v3617, 24
      %v3696 = vpop.permute.xlu0 %3695
      %3697 = vrot.lane.b32.xlu0 %v3618, 24
      %v3698 = vpop.permute.xlu0 %3697
      %3699 = vrot.lane.b32.xlu0 %v3619, 24
      %v3700 = vpop.permute.xlu0 %3699
      %3701 = vrot.lane.b32.xlu0 %v3620, 24
      %v3702 = vpop.permute.xlu0 %3701
      %3703 = vrot.lane.b32.xlu0 %v3621, 24
      %v3704 = vpop.permute.xlu0 %3703
      %3705 = vrot.lane.b32.xlu0 %v3622, 24
      %v3706 = vpop.permute.xlu0 %3705
      %3707 = vrot.lane.b32.xlu0 %v3623, 24
      %v3708 = vpop.permute.xlu0 %3707
      %3709 = vrot.lane.b32.xlu0 %v3624, 24
      %v3710 = vpop.permute.xlu0 %3709
      %3711 = vrot.lane.b32.xlu0 %v3625, 24
      %v3712 = vpop.permute.xlu0 %3711
      %3713 = vrot.lane.b32.xlu0 %v3626, 24
      %v3714 = vpop.permute.xlu0 %3713
      %3715 = vrot.lane.b32.xlu0 %v3627, 24
      %v3716 = vpop.permute.xlu0 %3715
      %3717 = vrot.lane.b32.xlu0 %v3628, 24
      %v3718 = vpop.permute.xlu0 %3717
      %3719 = vrot.lane.b32.xlu0 %v3629, 24
      %v3720 = vpop.permute.xlu0 %3719
      %3721 = vrot.lane.b32.xlu0 %v3630, 24
      %v3722 = vpop.permute.xlu0 %3721
      %3723 = vrot.lane.b32.xlu0 %v3631, 24
      %v3724 = vpop.permute.xlu0 %3723
      %3725 = vrot.lane.b32.xlu0 %v3632, 24
      %v3726 = vpop.permute.xlu0 %3725
      %3727 = vrot.lane.b32.xlu0 %v3633, 24
      %v3728 = vpop.permute.xlu0 %3727
      %3729 = vrot.lane.b32.xlu0 %v3634, 24
      %v3730 = vpop.permute.xlu0 %3729
      %3763 = vst.msk [vmem:[#allocation3] sm:$0xff] %vm1505, %v3668
      %3764 = vst.msk [vmem:[#allocation3 + $0x8] sm:$0xff] %vm1505, %v3670
      %3765 = vst.msk [vmem:[#allocation3 + $0x10] sm:$0xff] %vm1505, %v3672
      %3766 = vst.msk [vmem:[#allocation3 + $0x18] sm:$0xff] %vm1505, %v3674
      %3767 = vst.msk [vmem:[#allocation3 + $0x20] sm:$0xff] %vm1505, %v3676
      %3768 = vst.msk [vmem:[#allocation3 + $0x28] sm:$0xff] %vm1505, %v3678
      %3769 = vst.msk [vmem:[#allocation3 + $0x30] sm:$0xff] %vm1505, %v3680
      %3770 = vst.msk [vmem:[#allocation3 + $0x38] sm:$0xff] %vm1505, %v3682
      %3771 = vst.msk [vmem:[#allocation3 + $0x40] sm:$0xff] %vm1505, %v3684
      %3772 = vst.msk [vmem:[#allocation3 + $0x48] sm:$0xff] %vm1505, %v3686
      %3773 = vst.msk [vmem:[#allocation3 + $0x50] sm:$0xff] %vm1505, %v3688
      %3774 = vst.msk [vmem:[#allocation3 + $0x58] sm:$0xff] %vm1505, %v3690
      %3775 = vst.msk [vmem:[#allocation3 + $0x60] sm:$0xff] %vm1505, %v3692
      %3776 = vst.msk [vmem:[#allocation3 + $0x68] sm:$0xff] %vm1505, %v3694
      %3777 = vst.msk [vmem:[#allocation3 + $0x70] sm:$0xff] %vm1505, %v3696
      %3778 = vst.msk [vmem:[#allocation3 + $0x78] sm:$0xff] %vm1505, %v3698
      %3779 = vst.msk [vmem:[#allocation3 + $0x80] sm:$0xff] %vm1505, %v3700
      %3780 = vst.msk [vmem:[#allocation3 + $0x88] sm:$0xff] %vm1505, %v3702
      %3781 = vst.msk [vmem:[#allocation3 + $0x90] sm:$0xff] %vm1505, %v3704
      %3782 = vst.msk [vmem:[#allocation3 + $0x98] sm:$0xff] %vm1505, %v3706
      %3783 = vst.msk [vmem:[#allocation3 + $0xa0] sm:$0xff] %vm1505, %v3708
      %3784 = vst.msk [vmem:[#allocation3 + $0xa8] sm:$0xff] %vm1505, %v3710
      %3785 = vst.msk [vmem:[#allocation3 + $0xb0] sm:$0xff] %vm1505, %v3712
      %3786 = vst.msk [vmem:[#allocation3 + $0xb8] sm:$0xff] %vm1505, %v3714
      %3787 = vst.msk [vmem:[#allocation3 + $0xc0] sm:$0xff] %vm1505, %v3716
      %3788 = vst.msk [vmem:[#allocation3 + $0xc8] sm:$0xff] %vm1505, %v3718
      %3789 = vst.msk [vmem:[#allocation3 + $0xd0] sm:$0xff] %vm1505, %v3720
      %3790 = vst.msk [vmem:[#allocation3 + $0xd8] sm:$0xff] %vm1505, %v3722
      %3791 = vst.msk [vmem:[#allocation3 + $0xe0] sm:$0xff] %vm1505, %v3724
      %3792 = vst.msk [vmem:[#allocation3 + $0xe8] sm:$0xff] %vm1505, %v3726
      %3793 = vst.msk [vmem:[#allocation3 + $0xf0] sm:$0xff] %vm1505, %v3728
      %3794 = vst.msk [vmem:[#allocation3 + $0xf8] sm:$0xff] %vm1505, %v3730
      %v3795 = vld [vmem:[%s1344 + $0x1] sm:$0xff]
      %v3796 = vld [vmem:[%s1344 + $0x9] sm:$0xff]
      %v3797 = vld [vmem:[%s1344 + $0x19] sm:$0xff]
      %v3798 = vld [vmem:[%s1344 + $0x21] sm:$0xff]
      %v3799 = vld [vmem:[%s1344 + $0x31] sm:$0xff]
      %v3800 = vld [vmem:[%s1344 + $0x39] sm:$0xff]
      %v3801 = vld [vmem:[%s1344 + $0x49] sm:$0xff]
      %v3802 = vld [vmem:[%s1344 + $0x51] sm:$0xff]
      %v3803 = vld [vmem:[%s1344 + $0x61] sm:$0xff]
      %v3804 = vld [vmem:[%s1344 + $0x69] sm:$0xff]
      %v3805 = vld [vmem:[%s1344 + $0x79] sm:$0xff]
      %v3806 = vld [vmem:[%s1344 + $0x81] sm:$0xff]
      %v3807 = vld [vmem:[%s1344 + $0x91] sm:$0xff]
      %v3808 = vld [vmem:[%s1344 + $0x99] sm:$0xff]
      %v3809 = vld [vmem:[%s1344 + $0xa9] sm:$0xff]
      %v3810 = vld [vmem:[%s1344 + $0xb1] sm:$0xff]
      %v3811 = vld [vmem:[%s1344 + $0xc1] sm:$0xff]
      %v3812 = vld [vmem:[%s1344 + $0xc9] sm:$0xff]
      %v3813 = vld [vmem:[%s1344 + $0xd9] sm:$0xff]
      %v3814 = vld [vmem:[%s1344 + $0xe1] sm:$0xff]
      %v3815 = vld [vmem:[%s1344 + $0xf1] sm:$0xff]
      %v3816 = vld [vmem:[%s1344 + $0xf9] sm:$0xff]
      %v3817 = vld [vmem:[%s1344 + $0x109] sm:$0xff]
      %v3818 = vld [vmem:[%s1344 + $0x111] sm:$0xff]
      %v3819 = vld [vmem:[%s1344 + $0x121] sm:$0xff]
      %v3820 = vld [vmem:[%s1344 + $0x129] sm:$0xff]
      %v3821 = vld [vmem:[%s1344 + $0x139] sm:$0xff]
      %v3822 = vld [vmem:[%s1344 + $0x141] sm:$0xff]
      %v3823 = vld [vmem:[%s1344 + $0x151] sm:$0xff]
      %v3824 = vld [vmem:[%s1344 + $0x159] sm:$0xff]
      %v3825 = vld [vmem:[%s1344 + $0x169] sm:$0xff]
      %v3826 = vld [vmem:[%s1344 + $0x171] sm:$0xff]
      %3859 = vrot.lane.b32.xlu0 %v3795, 28
      %v3860 = vpop.permute.xlu0 %3859
      %3861 = vrot.lane.b32.xlu0 %v3796, 28
      %v3862 = vpop.permute.xlu0 %3861
      %3863 = vrot.lane.b32.xlu0 %v3797, 28
      %v3864 = vpop.permute.xlu0 %3863
      %3865 = vrot.lane.b32.xlu0 %v3798, 28
      %v3866 = vpop.permute.xlu0 %3865
      %3867 = vrot.lane.b32.xlu0 %v3799, 28
      %v3868 = vpop.permute.xlu0 %3867
      %3869 = vrot.lane.b32.xlu0 %v3800, 28
      %v3870 = vpop.permute.xlu0 %3869
      %3871 = vrot.lane.b32.xlu0 %v3801, 28
      %v3872 = vpop.permute.xlu0 %3871
      %3873 = vrot.lane.b32.xlu0 %v3802, 28
      %v3874 = vpop.permute.xlu0 %3873
      %3875 = vrot.lane.b32.xlu0 %v3803, 28
      %v3876 = vpop.permute.xlu0 %3875
      %3877 = vrot.lane.b32.xlu0 %v3804, 28
      %v3878 = vpop.permute.xlu0 %3877
      %3879 = vrot.lane.b32.xlu0 %v3805, 28
      %v3880 = vpop.permute.xlu0 %3879
      %3881 = vrot.lane.b32.xlu0 %v3806, 28
      %v3882 = vpop.permute.xlu0 %3881
      %3883 = vrot.lane.b32.xlu0 %v3807, 28
      %v3884 = vpop.permute.xlu0 %3883
      %3885 = vrot.lane.b32.xlu0 %v3808, 28
      %v3886 = vpop.permute.xlu0 %3885
      %3887 = vrot.lane.b32.xlu0 %v3809, 28
      %v3888 = vpop.permute.xlu0 %3887
      %3889 = vrot.lane.b32.xlu0 %v3810, 28
      %v3890 = vpop.permute.xlu0 %3889
      %3891 = vrot.lane.b32.xlu0 %v3811, 28
      %v3892 = vpop.permute.xlu0 %3891
      %3893 = vrot.lane.b32.xlu0 %v3812, 28
      %v3894 = vpop.permute.xlu0 %3893
      %3895 = vrot.lane.b32.xlu0 %v3813, 28
      %v3896 = vpop.permute.xlu0 %3895
      %3897 = vrot.lane.b32.xlu0 %v3814, 28
      %v3898 = vpop.permute.xlu0 %3897
      %3899 = vrot.lane.b32.xlu0 %v3815, 28
      %v3900 = vpop.permute.xlu0 %3899
      %3901 = vrot.lane.b32.xlu0 %v3816, 28
      %v3902 = vpop.permute.xlu0 %3901
      %3903 = vrot.lane.b32.xlu0 %v3817, 28
      %v3904 = vpop.permute.xlu0 %3903
      %3905 = vrot.lane.b32.xlu0 %v3818, 28
      %v3906 = vpop.permute.xlu0 %3905
      %3907 = vrot.lane.b32.xlu0 %v3819, 28
      %v3908 = vpop.permute.xlu0 %3907
      %3909 = vrot.lane.b32.xlu0 %v3820, 28
      %v3910 = vpop.permute.xlu0 %3909
      %3911 = vrot.lane.b32.xlu0 %v3821, 28
      %v3912 = vpop.permute.xlu0 %3911
      %3913 = vrot.lane.b32.xlu0 %v3822, 28
      %v3914 = vpop.permute.xlu0 %3913
      %3915 = vrot.lane.b32.xlu0 %v3823, 28
      %v3916 = vpop.permute.xlu0 %3915
      %3917 = vrot.lane.b32.xlu0 %v3824, 28
      %v3918 = vpop.permute.xlu0 %3917
      %3919 = vrot.lane.b32.xlu0 %v3825, 28
      %v3920 = vpop.permute.xlu0 %3919
      %3921 = vrot.lane.b32.xlu0 %v3826, 28
      %v3922 = vpop.permute.xlu0 %3921
      %3955 = vst.msk [vmem:[#allocation3] sm:$0xff] %vm1698, %v3860
      %3956 = vst.msk [vmem:[#allocation3 + $0x8] sm:$0xff] %vm1698, %v3862
      %3957 = vst.msk [vmem:[#allocation3 + $0x10] sm:$0xff] %vm1698, %v3864
      %3958 = vst.msk [vmem:[#allocation3 + $0x18] sm:$0xff] %vm1698, %v3866
      %3959 = vst.msk [vmem:[#allocation3 + $0x20] sm:$0xff] %vm1698, %v3868
      %3960 = vst.msk [vmem:[#allocation3 + $0x28] sm:$0xff] %vm1698, %v3870
      %3961 = vst.msk [vmem:[#allocation3 + $0x30] sm:$0xff] %vm1698, %v3872
      %3962 = vst.msk [vmem:[#allocation3 + $0x38] sm:$0xff] %vm1698, %v3874
      %3963 = vst.msk [vmem:[#allocation3 + $0x40] sm:$0xff] %vm1698, %v3876
      %3964 = vst.msk [vmem:[#allocation3 + $0x48] sm:$0xff] %vm1698, %v3878
      %3965 = vst.msk [vmem:[#allocation3 + $0x50] sm:$0xff] %vm1698, %v3880
      %3966 = vst.msk [vmem:[#allocation3 + $0x58] sm:$0xff] %vm1698, %v3882
      %3967 = vst.msk [vmem:[#allocation3 + $0x60] sm:$0xff] %vm1698, %v3884
      %3968 = vst.msk [vmem:[#allocation3 + $0x68] sm:$0xff] %vm1698, %v3886
      %3969 = vst.msk [vmem:[#allocation3 + $0x70] sm:$0xff] %vm1698, %v3888
      %3970 = vst.msk [vmem:[#allocation3 + $0x78] sm:$0xff] %vm1698, %v3890
      %3971 = vst.msk [vmem:[#allocation3 + $0x80] sm:$0xff] %vm1698, %v3892
      %3972 = vst.msk [vmem:[#allocation3 + $0x88] sm:$0xff] %vm1698, %v3894
      %3973 = vst.msk [vmem:[#allocation3 + $0x90] sm:$0xff] %vm1698, %v3896
      %3974 = vst.msk [vmem:[#allocation3 + $0x98] sm:$0xff] %vm1698, %v3898
      %3975 = vst.msk [vmem:[#allocation3 + $0xa0] sm:$0xff] %vm1698, %v3900
      %3976 = vst.msk [vmem:[#allocation3 + $0xa8] sm:$0xff] %vm1698, %v3902
      %3977 = vst.msk [vmem:[#allocation3 + $0xb0] sm:$0xff] %vm1698, %v3904
      %3978 = vst.msk [vmem:[#allocation3 + $0xb8] sm:$0xff] %vm1698, %v3906
      %3979 = vst.msk [vmem:[#allocation3 + $0xc0] sm:$0xff] %vm1698, %v3908
      %3980 = vst.msk [vmem:[#allocation3 + $0xc8] sm:$0xff] %vm1698, %v3910
      %3981 = vst.msk [vmem:[#allocation3 + $0xd0] sm:$0xff] %vm1698, %v3912
      %3982 = vst.msk [vmem:[#allocation3 + $0xd8] sm:$0xff] %vm1698, %v3914
      %3983 = vst.msk [vmem:[#allocation3 + $0xe0] sm:$0xff] %vm1698, %v3916
      %3984 = vst.msk [vmem:[#allocation3 + $0xe8] sm:$0xff] %vm1698, %v3918
      %3985 = vst.msk [vmem:[#allocation3 + $0xf0] sm:$0xff] %vm1698, %v3920
      %3986 = vst.msk [vmem:[#allocation3 + $0xf8] sm:$0xff] %vm1698, %v3922
      %v3987 = vld [vmem:[%s1344 + $0x2] sm:$0xff]
      %v3988 = vld [vmem:[%s1344 + $0xa] sm:$0xff]
      %v3989 = vld [vmem:[%s1344 + $0x1a] sm:$0xff]
      %v3990 = vld [vmem:[%s1344 + $0x22] sm:$0xff]
      %v3991 = vld [vmem:[%s1344 + $0x32] sm:$0xff]
      %v3992 = vld [vmem:[%s1344 + $0x3a] sm:$0xff]
      %v3993 = vld [vmem:[%s1344 + $0x4a] sm:$0xff]
      %v3994 = vld [vmem:[%s1344 + $0x52] sm:$0xff]
      %v3995 = vld [vmem:[%s1344 + $0x62] sm:$0xff]
      %v3996 = vld [vmem:[%s1344 + $0x6a] sm:$0xff]
      %v3997 = vld [vmem:[%s1344 + $0x7a] sm:$0xff]
      %v3998 = vld [vmem:[%s1344 + $0x82] sm:$0xff]
      %v3999 = vld [vmem:[%s1344 + $0x92] sm:$0xff]
      %v4000 = vld [vmem:[%s1344 + $0x9a] sm:$0xff]
      %v4001 = vld [vmem:[%s1344 + $0xaa] sm:$0xff]
      %v4002 = vld [vmem:[%s1344 + $0xb2] sm:$0xff]
      %v4003 = vld [vmem:[%s1344 + $0xc2] sm:$0xff]
      %v4004 = vld [vmem:[%s1344 + $0xca] sm:$0xff]
      %v4005 = vld [vmem:[%s1344 + $0xda] sm:$0xff]
      %v4006 = vld [vmem:[%s1344 + $0xe2] sm:$0xff]
      %v4007 = vld [vmem:[%s1344 + $0xf2] sm:$0xff]
      %v4008 = vld [vmem:[%s1344 + $0xfa] sm:$0xff]
      %v4009 = vld [vmem:[%s1344 + $0x10a] sm:$0xff]
      %v4010 = vld [vmem:[%s1344 + $0x112] sm:$0xff]
      %v4011 = vld [vmem:[%s1344 + $0x122] sm:$0xff]
      %v4012 = vld [vmem:[%s1344 + $0x12a] sm:$0xff]
      %v4013 = vld [vmem:[%s1344 + $0x13a] sm:$0xff]
      %v4014 = vld [vmem:[%s1344 + $0x142] sm:$0xff]
      %v4015 = vld [vmem:[%s1344 + $0x152] sm:$0xff]
      %v4016 = vld [vmem:[%s1344 + $0x15a] sm:$0xff]
      %v4017 = vld [vmem:[%s1344 + $0x16a] sm:$0xff]
      %v4018 = vld [vmem:[%s1344 + $0x172] sm:$0xff]
      %4051 = vrot.lane.b32.xlu0 %v3987, 32
      %v4052 = vpop.permute.xlu0 %4051
      %4053 = vrot.lane.b32.xlu0 %v3988, 32
      %v4054 = vpop.permute.xlu0 %4053
      %4055 = vrot.lane.b32.xlu0 %v3989, 32
      %v4056 = vpop.permute.xlu0 %4055
      %4057 = vrot.lane.b32.xlu0 %v3990, 32
      %v4058 = vpop.permute.xlu0 %4057
      %4059 = vrot.lane.b32.xlu0 %v3991, 32
      %v4060 = vpop.permute.xlu0 %4059
      %4061 = vrot.lane.b32.xlu0 %v3992, 32
      %v4062 = vpop.permute.xlu0 %4061
      %4063 = vrot.lane.b32.xlu0 %v3993, 32
      %v4064 = vpop.permute.xlu0 %4063
      %4065 = vrot.lane.b32.xlu0 %v3994, 32
      %v4066 = vpop.permute.xlu0 %4065
      %4067 = vrot.lane.b32.xlu0 %v3995, 32
      %v4068 = vpop.permute.xlu0 %4067
      %4069 = vrot.lane.b32.xlu0 %v3996, 32
      %v4070 = vpop.permute.xlu0 %4069
      %4071 = vrot.lane.b32.xlu0 %v3997, 32
      %v4072 = vpop.permute.xlu0 %4071
      %4073 = vrot.lane.b32.xlu0 %v3998, 32
      %v4074 = vpop.permute.xlu0 %4073
      %4075 = vrot.lane.b32.xlu0 %v3999, 32
      %v4076 = vpop.permute.xlu0 %4075
      %4077 = vrot.lane.b32.xlu0 %v4000, 32
      %v4078 = vpop.permute.xlu0 %4077
      %4079 = vrot.lane.b32.xlu0 %v4001, 32
      %v4080 = vpop.permute.xlu0 %4079
      %4081 = vrot.lane.b32.xlu0 %v4002, 32
      %v4082 = vpop.permute.xlu0 %4081
      %4083 = vrot.lane.b32.xlu0 %v4003, 32
      %v4084 = vpop.permute.xlu0 %4083
      %4085 = vrot.lane.b32.xlu0 %v4004, 32
      %v4086 = vpop.permute.xlu0 %4085
      %4087 = vrot.lane.b32.xlu0 %v4005, 32
      %v4088 = vpop.permute.xlu0 %4087
      %4089 = vrot.lane.b32.xlu0 %v4006, 32
      %v4090 = vpop.permute.xlu0 %4089
      %4091 = vrot.lane.b32.xlu0 %v4007, 32
      %v4092 = vpop.permute.xlu0 %4091
      %4093 = vrot.lane.b32.xlu0 %v4008, 32
      %v4094 = vpop.permute.xlu0 %4093
      %4095 = vrot.lane.b32.xlu0 %v4009, 32
      %v4096 = vpop.permute.xlu0 %4095
      %4097 = vrot.lane.b32.xlu0 %v4010, 32
      %v4098 = vpop.permute.xlu0 %4097
      %4099 = vrot.lane.b32.xlu0 %v4011, 32
      %v4100 = vpop.permute.xlu0 %4099
      %4101 = vrot.lane.b32.xlu0 %v4012, 32
      %v4102 = vpop.permute.xlu0 %4101
      %4103 = vrot.lane.b32.xlu0 %v4013, 32
      %v4104 = vpop.permute.xlu0 %4103
      %4105 = vrot.lane.b32.xlu0 %v4014, 32
      %v4106 = vpop.permute.xlu0 %4105
      %4107 = vrot.lane.b32.xlu0 %v4015, 32
      %v4108 = vpop.permute.xlu0 %4107
      %4109 = vrot.lane.b32.xlu0 %v4016, 32
      %v4110 = vpop.permute.xlu0 %4109
      %4111 = vrot.lane.b32.xlu0 %v4017, 32
      %v4112 = vpop.permute.xlu0 %4111
      %4113 = vrot.lane.b32.xlu0 %v4018, 32
      %v4114 = vpop.permute.xlu0 %4113
      %4147 = vst.msk [vmem:[#allocation3] sm:$0xff] %vm1891, %v4052
      %4148 = vst.msk [vmem:[#allocation3 + $0x8] sm:$0xff] %vm1891, %v4054
      %4149 = vst.msk [vmem:[#allocation3 + $0x10] sm:$0xff] %vm1891, %v4056
      %4150 = vst.msk [vmem:[#allocation3 + $0x18] sm:$0xff] %vm1891, %v4058
      %4151 = vst.msk [vmem:[#allocation3 + $0x20] sm:$0xff] %vm1891, %v4060
      %4152 = vst.msk [vmem:[#allocation3 + $0x28] sm:$0xff] %vm1891, %v4062
      %4153 = vst.msk [vmem:[#allocation3 + $0x30] sm:$0xff] %vm1891, %v4064
      %4154 = vst.msk [vmem:[#allocation3 + $0x38] sm:$0xff] %vm1891, %v4066
      %4155 = vst.msk [vmem:[#allocation3 + $0x40] sm:$0xff] %vm1891, %v4068
      %4156 = vst.msk [vmem:[#allocation3 + $0x48] sm:$0xff] %vm1891, %v4070
      %4157 = vst.msk [vmem:[#allocation3 + $0x50] sm:$0xff] %vm1891, %v4072
      %4158 = vst.msk [vmem:[#allocation3 + $0x58] sm:$0xff] %vm1891, %v4074
      %4159 = vst.msk [vmem:[#allocation3 + $0x60] sm:$0xff] %vm1891, %v4076
      %4160 = vst.msk [vmem:[#allocation3 + $0x68] sm:$0xff] %vm1891, %v4078
      %4161 = vst.msk [vmem:[#allocation3 + $0x70] sm:$0xff] %vm1891, %v4080
      %4162 = vst.msk [vmem:[#allocation3 + $0x78] sm:$0xff] %vm1891, %v4082
      %4163 = vst.msk [vmem:[#allocation3 + $0x80] sm:$0xff] %vm1891, %v4084
      %4164 = vst.msk [vmem:[#allocation3 + $0x88] sm:$0xff] %vm1891, %v4086
      %4165 = vst.msk [vmem:[#allocation3 + $0x90] sm:$0xff] %vm1891, %v4088
      %4166 = vst.msk [vmem:[#allocation3 + $0x98] sm:$0xff] %vm1891, %v4090
      %4167 = vst.msk [vmem:[#allocation3 + $0xa0] sm:$0xff] %vm1891, %v4092
      %4168 = vst.msk [vmem:[#allocation3 + $0xa8] sm:$0xff] %vm1891, %v4094
      %4169 = vst.msk [vmem:[#allocation3 + $0xb0] sm:$0xff] %vm1891, %v4096
      %4170 = vst.msk [vmem:[#allocation3 + $0xb8] sm:$0xff] %vm1891, %v4098
      %4171 = vst.msk [vmem:[#allocation3 + $0xc0] sm:$0xff] %vm1891, %v4100
      %4172 = vst.msk [vmem:[#allocation3 + $0xc8] sm:$0xff] %vm1891, %v4102
      %4173 = vst.msk [vmem:[#allocation3 + $0xd0] sm:$0xff] %vm1891, %v4104
      %4174 = vst.msk [vmem:[#allocation3 + $0xd8] sm:$0xff] %vm1891, %v4106
      %4175 = vst.msk [vmem:[#allocation3 + $0xe0] sm:$0xff] %vm1891, %v4108
      %4176 = vst.msk [vmem:[#allocation3 + $0xe8] sm:$0xff] %vm1891, %v4110
      %4177 = vst.msk [vmem:[#allocation3 + $0xf0] sm:$0xff] %vm1891, %v4112
      %4178 = vst.msk [vmem:[#allocation3 + $0xf8] sm:$0xff] %vm1891, %v4114
      %v4179 = vld [vmem:[#allocation3] sm:$0xff]
      %v4180 = vld [vmem:[#allocation3 + $0x8] sm:$0xff]
      %v4181 = vld [vmem:[#allocation3 + $0x10] sm:$0xff]
      %v4182 = vld [vmem:[#allocation3 + $0x18] sm:$0xff]
      %v4183 = vld [vmem:[#allocation3 + $0x20] sm:$0xff]
      %v4184 = vld [vmem:[#allocation3 + $0x28] sm:$0xff]
      %v4185 = vld [vmem:[#allocation3 + $0x30] sm:$0xff]
      %v4186 = vld [vmem:[#allocation3 + $0x38] sm:$0xff]
      %v4187 = vld [vmem:[#allocation3 + $0x40] sm:$0xff]
      %v4188 = vld [vmem:[#allocation3 + $0x48] sm:$0xff]
      %v4189 = vld [vmem:[#allocation3 + $0x50] sm:$0xff]
      %v4190 = vld [vmem:[#allocation3 + $0x58] sm:$0xff]
      %v4191 = vld [vmem:[#allocation3 + $0x60] sm:$0xff]
      %v4192 = vld [vmem:[#allocation3 + $0x68] sm:$0xff]
      %v4193 = vld [vmem:[#allocation3 + $0x70] sm:$0xff]
      %v4194 = vld [vmem:[#allocation3 + $0x78] sm:$0xff]
      %v4195 = vld [vmem:[#allocation3 + $0x80] sm:$0xff]
      %v4196 = vld [vmem:[#allocation3 + $0x88] sm:$0xff]
      %v4197 = vld [vmem:[#allocation3 + $0x90] sm:$0xff]
      %v4198 = vld [vmem:[#allocation3 + $0x98] sm:$0xff]
      %v4199 = vld [vmem:[#allocation3 + $0xa0] sm:$0xff]
      %v4200 = vld [vmem:[#allocation3 + $0xa8] sm:$0xff]
      %v4201 = vld [vmem:[#allocation3 + $0xb0] sm:$0xff]
      %v4202 = vld [vmem:[#allocation3 + $0xb8] sm:$0xff]
      %v4203 = vld [vmem:[#allocation3 + $0xc0] sm:$0xff]
      %v4204 = vld [vmem:[#allocation3 + $0xc8] sm:$0xff]
      %v4205 = vld [vmem:[#allocation3 + $0xd0] sm:$0xff]
      %v4206 = vld [vmem:[#allocation3 + $0xd8] sm:$0xff]
      %v4207 = vld [vmem:[#allocation3 + $0xe0] sm:$0xff]
      %v4208 = vld [vmem:[#allocation3 + $0xe8] sm:$0xff]
      %v4209 = vld [vmem:[#allocation3 + $0xf0] sm:$0xff]
      %v4210 = vld [vmem:[#allocation3 + $0xf8] sm:$0xff]
      %s4211 = scalar_lea.vmem %s1, 40
      %v4212 = vld [vmem:[%s4211] sm:$0xff]
      %v4213 = vld [vmem:[%s4211 + $0x8] sm:$0xff]
      %v4214 = vld [vmem:[%s4211 + $0x10] sm:$0xff]
      %v4215 = vld [vmem:[%s4211 + $0x18] sm:$0xff]
      %v4216 = vld [vmem:[%s4211 + $0x20] sm:$0xf]
      %v4218 = vsel %vm1961, %v4179, 0
      %v4221 = vsel %vm1961, %v4180, 0
      %v4224 = vsel %vm1961, %v4181, 0
      %v4227 = vsel %vm1961, %v4182, 0
      %v4230 = vsel %vm1961, %v4183, 0
      %v4233 = vsel %vm1961, %v4184, 0
      %v4236 = vsel %vm1961, %v4185, 0
      %v4239 = vsel %vm1961, %v4186, 0
      %v4242 = vsel %vm1961, %v4187, 0
      %v4245 = vsel %vm1961, %v4188, 0
      %v4248 = vsel %vm1961, %v4189, 0
      %v4251 = vsel %vm1961, %v4190, 0
      %v4254 = vsel %vm1961, %v4191, 0
      %v4257 = vsel %vm1961, %v4192, 0
      %v4260 = vsel %vm1961, %v4193, 0
      %v4263 = vsel %vm1961, %v4194, 0
      %v4266 = vsel %vm1961, %v4195, 0
      %v4269 = vsel %vm1961, %v4196, 0
      %v4272 = vsel %vm1961, %v4197, 0
      %v4275 = vsel %vm1961, %v4198, 0
      %v4278 = vsel %vm1961, %v4199, 0
      %v4281 = vsel %vm1961, %v4200, 0
      %v4284 = vsel %vm1961, %v4201, 0
      %v4287 = vsel %vm1961, %v4202, 0
      %v4290 = vsel %vm1961, %v4203, 0
      %v4293 = vsel %vm1961, %v4204, 0
      %v4296 = vsel %vm1961, %v4205, 0
      %v4299 = vsel %vm1961, %v4206, 0
      %v4302 = vsel %vm1961, %v4207, 0
      %v4305 = vsel %vm1961, %v4208, 0
      %v4308 = vsel %vm1961, %v4209, 0
      %v4311 = vsel %vm1961, %v4210, 0
      %v4314 = vsel %vm2058, %v4216, 0
      %4316 = vmatpush.msra.mxu0 0.0
      %4317 = vmatpush.msra.mxu0 0.0
      %4318 = vmatpush.msra.mxu0 0.0
      %4319 = vmatpush.msra.mxu0 0.0
      %4320 = vmatpush.msra.mxu0 0.0
      %4321 = vmatpush.msra.mxu0 0.0
      %4322 = vmatpush.msra.mxu0 0.0
      %4323 = vmatpush.msra.mxu0 0.0
      %4324 = vmatpush.msra.mxu0 0.0
      %4325 = vmatpush.msra.mxu0 0.0
      %4326 = vmatpush.msra.mxu0 0.0
      %4327 = vmatpush.msra.mxu0 %v4314
      %4328 = vmatpush.msra.mxu0 %v4215
      %4329 = vmatpush.msra.mxu0 %v4214
      %4330 = vmatpush.msra.mxu0 %v4213
      %4331 = vmatpush.msra.mxu0 %v4212
      %4332 = vmatmul.f32.gmra.mxu0 %v4218
      %v4333 = vpop.f32.mrf.mxu0
      %v4334 = vadd.f32 0.0, %v4333
      %4335 = vmatmul.f32.gmra.mxu0 %v4221
      %v4336 = vpop.f32.mrf.mxu0
      %v4337 = vadd.f32 0.0, %v4336
      %4338 = vmatmul.f32.gmra.mxu0 %v4224
      %v4339 = vpop.f32.mrf.mxu0
      %v4340 = vadd.f32 0.0, %v4339
      %4341 = vmatmul.f32.gmra.mxu0 %v4227
      %v4342 = vpop.f32.mrf.mxu0
      %v4343 = vadd.f32 0.0, %v4342
      %4344 = vmatmul.f32.gmra.mxu0 %v4230
      %v4345 = vpop.f32.mrf.mxu0
      %v4346 = vadd.f32 0.0, %v4345
      %4347 = vmatmul.f32.gmra.mxu0 %v4233
      %v4348 = vpop.f32.mrf.mxu0
      %v4349 = vadd.f32 0.0, %v4348
      %4350 = vmatmul.f32.gmra.mxu0 %v4236
      %v4351 = vpop.f32.mrf.mxu0
      %v4352 = vadd.f32 0.0, %v4351
      %4353 = vmatmul.f32.gmra.mxu0 %v4239
      %v4354 = vpop.f32.mrf.mxu0
      %v4355 = vadd.f32 0.0, %v4354
      %4356 = vmatmul.f32.gmra.mxu0 %v4242
      %v4357 = vpop.f32.mrf.mxu0
      %v4358 = vadd.f32 0.0, %v4357
      %4359 = vmatmul.f32.gmra.mxu0 %v4245
      %v4360 = vpop.f32.mrf.mxu0
      %v4361 = vadd.f32 0.0, %v4360
      %4362 = vmatmul.f32.gmra.mxu0 %v4248
      %v4363 = vpop.f32.mrf.mxu0
      %v4364 = vadd.f32 0.0, %v4363
      %4365 = vmatmul.f32.gmra.mxu0 %v4251
      %v4366 = vpop.f32.mrf.mxu0
      %v4367 = vadd.f32 0.0, %v4366
      %4368 = vmatmul.f32.gmra.mxu0 %v4254
      %v4369 = vpop.f32.mrf.mxu0
      %v4370 = vadd.f32 0.0, %v4369
      %4371 = vmatmul.f32.gmra.mxu0 %v4257
      %v4372 = vpop.f32.mrf.mxu0
      %v4373 = vadd.f32 0.0, %v4372
      %4374 = vmatmul.f32.gmra.mxu0 %v4260
      %v4375 = vpop.f32.mrf.mxu0
      %v4376 = vadd.f32 0.0, %v4375
      %4377 = vmatmul.f32.gmra.mxu0 %v4263
      %v4378 = vpop.f32.mrf.mxu0
      %v4379 = vadd.f32 0.0, %v4378
      %4380 = vmatmul.f32.gmra.mxu0 %v4266
      %v4381 = vpop.f32.mrf.mxu0
      %v4382 = vadd.f32 0.0, %v4381
      %4383 = vmatmul.f32.gmra.mxu0 %v4269
      %v4384 = vpop.f32.mrf.mxu0
      %v4385 = vadd.f32 0.0, %v4384
      %4386 = vmatmul.f32.gmra.mxu0 %v4272
      %v4387 = vpop.f32.mrf.mxu0
      %v4388 = vadd.f32 0.0, %v4387
      %4389 = vmatmul.f32.gmra.mxu0 %v4275
      %v4390 = vpop.f32.mrf.mxu0
      %v4391 = vadd.f32 0.0, %v4390
      %4392 = vmatmul.f32.gmra.mxu0 %v4278
      %v4393 = vpop.f32.mrf.mxu0
      %v4394 = vadd.f32 0.0, %v4393
      %4395 = vmatmul.f32.gmra.mxu0 %v4281
      %v4396 = vpop.f32.mrf.mxu0
      %v4397 = vadd.f32 0.0, %v4396
      %4398 = vmatmul.f32.gmra.mxu0 %v4284
      %v4399 = vpop.f32.mrf.mxu0
      %v4400 = vadd.f32 0.0, %v4399
      %4401 = vmatmul.f32.gmra.mxu0 %v4287
      %v4402 = vpop.f32.mrf.mxu0
      %v4403 = vadd.f32 0.0, %v4402
      %4404 = vmatmul.f32.gmra.mxu0 %v4290
      %v4405 = vpop.f32.mrf.mxu0
      %v4406 = vadd.f32 0.0, %v4405
      %4407 = vmatmul.f32.gmra.mxu0 %v4293
      %v4408 = vpop.f32.mrf.mxu0
      %v4409 = vadd.f32 0.0, %v4408
      %4410 = vmatmul.f32.gmra.mxu0 %v4296
      %v4411 = vpop.f32.mrf.mxu0
      %v4412 = vadd.f32 0.0, %v4411
      %4413 = vmatmul.f32.gmra.mxu0 %v4299
      %v4414 = vpop.f32.mrf.mxu0
      %v4415 = vadd.f32 0.0, %v4414
      %4416 = vmatmul.f32.gmra.mxu0 %v4302
      %v4417 = vpop.f32.mrf.mxu0
      %v4418 = vadd.f32 0.0, %v4417
      %4419 = vmatmul.f32.gmra.mxu0 %v4305
      %v4420 = vpop.f32.mrf.mxu0
      %v4421 = vadd.f32 0.0, %v4420
      %4422 = vmatmul.f32.gmra.mxu0 %v4308
      %v4423 = vpop.f32.mrf.mxu0
      %v4424 = vadd.f32 0.0, %v4423
      %4425 = vmatmul.f32.gmra.mxu0 %v4311
      %v4426 = vpop.f32.mrf.mxu0
      %v4427 = vadd.f32 0.0, %v4426
      %4428 = vdwg.mxu0
      %v4429 = vld [vmem:[%s2 + $0x2] sm:$0x1]
      %v4430 = vld [vmem:[%s2 + $0x3] sm:$0x1]
      %v4431 = vsel %vm204, %v4334, 0.0
      %v4432 = vsel %vm204, %v4337, 0.0
      %v4433 = vadd.f32 %v4431, %v4432
      %v4434 = vsel %vm204, %v4340, 0.0
      %v4435 = vadd.f32 %v4433, %v4434
      %v4436 = vsel %vm204, %v4343, 0.0
      %v4437 = vadd.f32 %v4435, %v4436
      %v4438 = vsel %vm204, %v4346, 0.0
      %v4439 = vadd.f32 %v4437, %v4438
      %v4440 = vsel %vm204, %v4349, 0.0
      %v4441 = vadd.f32 %v4439, %v4440
      %v4442 = vsel %vm204, %v4352, 0.0
      %v4443 = vadd.f32 %v4441, %v4442
      %v4444 = vsel %vm204, %v4355, 0.0
      %v4445 = vadd.f32 %v4443, %v4444
      %v4446 = vsel %vm204, %v4358, 0.0
      %v4447 = vadd.f32 %v4445, %v4446
      %v4448 = vsel %vm204, %v4361, 0.0
      %v4449 = vadd.f32 %v4447, %v4448
      %v4450 = vsel %vm204, %v4364, 0.0
      %v4451 = vadd.f32 %v4449, %v4450
      %v4452 = vsel %vm204, %v4367, 0.0
      %v4453 = vadd.f32 %v4451, %v4452
      %v4454 = vsel %vm204, %v4370, 0.0
      %v4455 = vadd.f32 %v4453, %v4454
      %v4456 = vsel %vm204, %v4373, 0.0
      %v4457 = vadd.f32 %v4455, %v4456
      %v4458 = vsel %vm204, %v4376, 0.0
      %v4459 = vadd.f32 %v4457, %v4458
      %v4460 = vsel %vm204, %v4379, 0.0
      %v4461 = vadd.f32 %v4459, %v4460
      %v4462 = vsel %vm204, %v4382, 0.0
      %v4463 = vadd.f32 %v4461, %v4462
      %v4464 = vsel %vm204, %v4385, 0.0
      %v4465 = vadd.f32 %v4463, %v4464
      %v4466 = vsel %vm204, %v4388, 0.0
      %v4467 = vadd.f32 %v4465, %v4466
      %v4468 = vsel %vm204, %v4391, 0.0
      %v4469 = vadd.f32 %v4467, %v4468
      %v4470 = vsel %vm204, %v4394, 0.0
      %v4471 = vadd.f32 %v4469, %v4470
      %v4472 = vsel %vm204, %v4397, 0.0
      %v4473 = vadd.f32 %v4471, %v4472
      %v4474 = vsel %vm204, %v4400, 0.0
      %v4475 = vadd.f32 %v4473, %v4474
      %v4476 = vsel %vm204, %v4403, 0.0
      %v4477 = vadd.f32 %v4475, %v4476
      %v4478 = vsel %vm204, %v4406, 0.0
      %v4479 = vadd.f32 %v4477, %v4478
      %v4480 = vsel %vm204, %v4409, 0.0
      %v4481 = vadd.f32 %v4479, %v4480
      %v4482 = vsel %vm204, %v4412, 0.0
      %v4483 = vadd.f32 %v4481, %v4482
      %v4484 = vsel %vm204, %v4415, 0.0
      %v4485 = vadd.f32 %v4483, %v4484
      %v4486 = vsel %vm204, %v4418, 0.0
      %v4487 = vadd.f32 %v4485, %v4486
      %v4488 = vsel %vm204, %v4421, 0.0
      %v4489 = vadd.f32 %v4487, %v4488
      %v4490 = vsel %vm204, %v4424, 0.0
      %v4491 = vadd.f32 %v4489, %v4490
      %v4492 = vsel %vm204, %v4427, 0.0
      %v4493 = vadd.f32 %v4491, %v4492
      %v4494 = vrot.slane %v4493, 4
      %v4495 = vadd.f32 %v4493, %v4494
      %v4496 = vrot.slane %v4495, 2
      %v4497 = vadd.f32 %v4495, %v4496
      %v4498 = vrot.slane %v4497, 1
      %v4499 = vadd.f32 %v4497, %v4498
      %v4500 = vmul.f32 %v4499, %v2252
      %v4501 = vmul.f32 %v4334, %v4334
      %v4502 = vmul.f32 %v4337, %v4337
      %v4503 = vmul.f32 %v4340, %v4340
      %v4504 = vmul.f32 %v4343, %v4343
      %v4505 = vmul.f32 %v4346, %v4346
      %v4506 = vmul.f32 %v4349, %v4349
      %v4507 = vmul.f32 %v4352, %v4352
      %v4508 = vmul.f32 %v4355, %v4355
      %v4509 = vmul.f32 %v4358, %v4358
      %v4510 = vmul.f32 %v4361, %v4361
      %v4511 = vmul.f32 %v4364, %v4364
      %v4512 = vmul.f32 %v4367, %v4367
      %v4513 = vmul.f32 %v4370, %v4370
      %v4514 = vmul.f32 %v4373, %v4373
      %v4515 = vmul.f32 %v4376, %v4376
      %v4516 = vmul.f32 %v4379, %v4379
      %v4517 = vmul.f32 %v4382, %v4382
      %v4518 = vmul.f32 %v4385, %v4385
      %v4519 = vmul.f32 %v4388, %v4388
      %v4520 = vmul.f32 %v4391, %v4391
      %v4521 = vmul.f32 %v4394, %v4394
      %v4522 = vmul.f32 %v4397, %v4397
      %v4523 = vmul.f32 %v4400, %v4400
      %v4524 = vmul.f32 %v4403, %v4403
      %v4525 = vmul.f32 %v4406, %v4406
      %v4526 = vmul.f32 %v4409, %v4409
      %v4527 = vmul.f32 %v4412, %v4412
      %v4528 = vmul.f32 %v4415, %v4415
      %v4529 = vmul.f32 %v4418, %v4418
      %v4530 = vmul.f32 %v4421, %v4421
      %v4531 = vmul.f32 %v4424, %v4424
      %v4532 = vmul.f32 %v4427, %v4427
      %v4533 = vsel %vm204, %v4501, 0.0
      %v4534 = vsel %vm204, %v4502, 0.0
      %v4535 = vadd.f32 %v4533, %v4534
      %v4536 = vsel %vm204, %v4503, 0.0
      %v4537 = vadd.f32 %v4535, %v4536
      %v4538 = vsel %vm204, %v4504, 0.0
      %v4539 = vadd.f32 %v4537, %v4538
      %v4540 = vsel %vm204, %v4505, 0.0
      %v4541 = vadd.f32 %v4539, %v4540
      %v4542 = vsel %vm204, %v4506, 0.0
      %v4543 = vadd.f32 %v4541, %v4542
      %v4544 = vsel %vm204, %v4507, 0.0
      %v4545 = vadd.f32 %v4543, %v4544
      %v4546 = vsel %vm204, %v4508, 0.0
      %v4547 = vadd.f32 %v4545, %v4546
      %v4548 = vsel %vm204, %v4509, 0.0
      %v4549 = vadd.f32 %v4547, %v4548
      %v4550 = vsel %vm204, %v4510, 0.0
      %v4551 = vadd.f32 %v4549, %v4550
      %v4552 = vsel %vm204, %v4511, 0.0
      %v4553 = vadd.f32 %v4551, %v4552
      %v4554 = vsel %vm204, %v4512, 0.0
      %v4555 = vadd.f32 %v4553, %v4554
      %v4556 = vsel %vm204, %v4513, 0.0
      %v4557 = vadd.f32 %v4555, %v4556
      %v4558 = vsel %vm204, %v4514, 0.0
      %v4559 = vadd.f32 %v4557, %v4558
      %v4560 = vsel %vm204, %v4515, 0.0
      %v4561 = vadd.f32 %v4559, %v4560
      %v4562 = vsel %vm204, %v4516, 0.0
      %v4563 = vadd.f32 %v4561, %v4562
      %v4564 = vsel %vm204, %v4517, 0.0
      %v4565 = vadd.f32 %v4563, %v4564
      %v4566 = vsel %vm204, %v4518, 0.0
      %v4567 = vadd.f32 %v4565, %v4566
      %v4568 = vsel %vm204, %v4519, 0.0
      %v4569 = vadd.f32 %v4567, %v4568
      %v4570 = vsel %vm204, %v4520, 0.0
      %v4571 = vadd.f32 %v4569, %v4570
      %v4572 = vsel %vm204, %v4521, 0.0
      %v4573 = vadd.f32 %v4571, %v4572
      %v4574 = vsel %vm204, %v4522, 0.0
      %v4575 = vadd.f32 %v4573, %v4574
      %v4576 = vsel %vm204, %v4523, 0.0
      %v4577 = vadd.f32 %v4575, %v4576
      %v4578 = vsel %vm204, %v4524, 0.0
      %v4579 = vadd.f32 %v4577, %v4578
      %v4580 = vsel %vm204, %v4525, 0.0
      %v4581 = vadd.f32 %v4579, %v4580
      %v4582 = vsel %vm204, %v4526, 0.0
      %v4583 = vadd.f32 %v4581, %v4582
      %v4584 = vsel %vm204, %v4527, 0.0
      %v4585 = vadd.f32 %v4583, %v4584
      %v4586 = vsel %vm204, %v4528, 0.0
      %v4587 = vadd.f32 %v4585, %v4586
      %v4588 = vsel %vm204, %v4529, 0.0
      %v4589 = vadd.f32 %v4587, %v4588
      %v4590 = vsel %vm204, %v4530, 0.0
      %v4591 = vadd.f32 %v4589, %v4590
      %v4592 = vsel %vm204, %v4531, 0.0
      %v4593 = vadd.f32 %v4591, %v4592
      %v4594 = vsel %vm204, %v4532, 0.0
      %v4595 = vadd.f32 %v4593, %v4594
      %v4596 = vrot.slane %v4595, 4
      %v4597 = vadd.f32 %v4595, %v4596
      %v4598 = vrot.slane %v4597, 2
      %v4599 = vadd.f32 %v4597, %v4598
      %v4600 = vrot.slane %v4599, 1
      %v4601 = vadd.f32 %v4599, %v4600
      %v4602 = vmul.f32 %v4601, %v2252
      %v4603 = vmul.f32 %v4500, %v4500
      %v4604 = vsub.f32 %v4602, %v4603
      %v4605 = vmax.f32 %v4604, 0.0
      %v4606 = vadd.f32 %v4605, 1e-05
      %v4607 = vrsqrt.pop %v4606
      %v4608 = vmul.f32 %v4607, %v4606
      %v4609 = vmul.f32 %v4608, %v4607
      %v4610 = vmul.f32 0.5, %v4609
      %v4611 = vsub.f32 1.5, %v4610
      %v4612 = vmul.f32 %v4607, %v4611
      %vm4613 = vweird.f32 %v4606
      %vm4614 = vweird.f32 %v4607
      %vm4615 = vmor %vm4613, %vm4614
      %v4616 = vsel %vm4615, %v4607, %v4612
      %v4617 = vmul.f32 %v4429, %v4616
      %v4618 = vmul.f32 %v4500, %v4617
      %v4619 = vsub.f32 %v4430, %v4618
      %v4620 = vperm.slane %v4617, 0
      %v4621 = vmul.f32 %v4334, %v4620
      %v4622 = vmul.f32 %v4337, %v4620
      %v4623 = vmul.f32 %v4340, %v4620
      %v4624 = vmul.f32 %v4343, %v4620
      %v4625 = vmul.f32 %v4346, %v4620
      %v4626 = vmul.f32 %v4349, %v4620
      %v4627 = vmul.f32 %v4352, %v4620
      %v4628 = vmul.f32 %v4355, %v4620
      %v4629 = vmul.f32 %v4358, %v4620
      %v4630 = vmul.f32 %v4361, %v4620
      %v4631 = vmul.f32 %v4364, %v4620
      %v4632 = vmul.f32 %v4367, %v4620
      %v4633 = vmul.f32 %v4370, %v4620
      %v4634 = vmul.f32 %v4373, %v4620
      %v4635 = vmul.f32 %v4376, %v4620
      %v4636 = vmul.f32 %v4379, %v4620
      %v4637 = vmul.f32 %v4382, %v4620
      %v4638 = vmul.f32 %v4385, %v4620
      %v4639 = vmul.f32 %v4388, %v4620
      %v4640 = vmul.f32 %v4391, %v4620
      %v4641 = vmul.f32 %v4394, %v4620
      %v4642 = vmul.f32 %v4397, %v4620
      %v4643 = vmul.f32 %v4400, %v4620
      %v4644 = vmul.f32 %v4403, %v4620
      %v4645 = vmul.f32 %v4406, %v4620
      %v4646 = vmul.f32 %v4409, %v4620
      %v4647 = vmul.f32 %v4412, %v4620
      %v4648 = vmul.f32 %v4415, %v4620
      %v4649 = vmul.f32 %v4418, %v4620
      %v4650 = vmul.f32 %v4421, %v4620
      %v4651 = vmul.f32 %v4424, %v4620
      %v4652 = vmul.f32 %v4427, %v4620
      %v4653 = vperm.slane %v4619, 0
      %v4654 = vadd.f32 %v4621, %v4653
      %v4655 = vadd.f32 %v4622, %v4653
      %v4656 = vadd.f32 %v4623, %v4653
      %v4657 = vadd.f32 %v4624, %v4653
      %v4658 = vadd.f32 %v4625, %v4653
      %v4659 = vadd.f32 %v4626, %v4653
      %v4660 = vadd.f32 %v4627, %v4653
      %v4661 = vadd.f32 %v4628, %v4653
      %v4662 = vadd.f32 %v4629, %v4653
      %v4663 = vadd.f32 %v4630, %v4653
      %v4664 = vadd.f32 %v4631, %v4653
      %v4665 = vadd.f32 %v4632, %v4653
      %v4666 = vadd.f32 %v4633, %v4653
      %v4667 = vadd.f32 %v4634, %v4653
      %v4668 = vadd.f32 %v4635, %v4653
      %v4669 = vadd.f32 %v4636, %v4653
      %v4670 = vadd.f32 %v4637, %v4653
      %v4671 = vadd.f32 %v4638, %v4653
      %v4672 = vadd.f32 %v4639, %v4653
      %v4673 = vadd.f32 %v4640, %v4653
      %v4674 = vadd.f32 %v4641, %v4653
      %v4675 = vadd.f32 %v4642, %v4653
      %v4676 = vadd.f32 %v4643, %v4653
      %v4677 = vadd.f32 %v4644, %v4653
      %v4678 = vadd.f32 %v4645, %v4653
      %v4679 = vadd.f32 %v4646, %v4653
      %v4680 = vadd.f32 %v4647, %v4653
      %v4681 = vadd.f32 %v4648, %v4653
      %v4682 = vadd.f32 %v4649, %v4653
      %v4683 = vadd.f32 %v4650, %v4653
      %v4684 = vadd.f32 %v4651, %v4653
      %v4685 = vadd.f32 %v4652, %v4653
      %v4686 = vld [vmem:[%s165] sm:$0xff]
      %v4687 = vld [vmem:[%s165 + $0x8] sm:$0xff]
      %v4688 = vld [vmem:[%s165 + $0x10] sm:$0xff]
      %v4689 = vld [vmem:[%s165 + $0x18] sm:$0xff]
      %v4690 = vld [vmem:[%s165 + $0x20] sm:$0xff]
      %v4691 = vld [vmem:[%s165 + $0x28] sm:$0xff]
      %v4692 = vld [vmem:[%s165 + $0x30] sm:$0xff]
      %v4693 = vld [vmem:[%s165 + $0x38] sm:$0xff]
      %v4694 = vld [vmem:[%s165 + $0x40] sm:$0xff]
      %v4695 = vld [vmem:[%s165 + $0x48] sm:$0xff]
      %v4696 = vld [vmem:[%s165 + $0x50] sm:$0xff]
      %v4697 = vld [vmem:[%s165 + $0x58] sm:$0xff]
      %v4698 = vld [vmem:[%s165 + $0x60] sm:$0xff]
      %v4699 = vld [vmem:[%s165 + $0x68] sm:$0xff]
      %v4700 = vld [vmem:[%s165 + $0x70] sm:$0xff]
      %v4701 = vld [vmem:[%s165 + $0x78] sm:$0xff]
      %v4702 = vld [vmem:[%s165 + $0x80] sm:$0xff]
      %v4703 = vld [vmem:[%s165 + $0x88] sm:$0xff]
      %v4704 = vld [vmem:[%s165 + $0x90] sm:$0xff]
      %v4705 = vld [vmem:[%s165 + $0x98] sm:$0xff]
      %v4706 = vld [vmem:[%s165 + $0xa0] sm:$0xff]
      %v4707 = vld [vmem:[%s165 + $0xa8] sm:$0xff]
      %v4708 = vld [vmem:[%s165 + $0xb0] sm:$0xff]
      %v4709 = vld [vmem:[%s165 + $0xb8] sm:$0xff]
      %v4710 = vld [vmem:[%s165 + $0xc0] sm:$0xff]
      %v4711 = vld [vmem:[%s165 + $0xc8] sm:$0xff]
      %v4712 = vld [vmem:[%s165 + $0xd0] sm:$0xff]
      %v4713 = vld [vmem:[%s165 + $0xd8] sm:$0xff]
      %v4714 = vld [vmem:[%s165 + $0xe0] sm:$0xff]
      %v4715 = vld [vmem:[%s165 + $0xe8] sm:$0xff]
      %v4716 = vld [vmem:[%s165 + $0xf0] sm:$0xff]
      %v4717 = vld [vmem:[%s165 + $0xf8] sm:$0xff]
      %v4718 = vadd.f32 %v4686, %v4654
      %v4719 = vadd.f32 %v4687, %v4655
      %v4720 = vadd.f32 %v4688, %v4656
      %v4721 = vadd.f32 %v4689, %v4657
      %v4722 = vadd.f32 %v4690, %v4658
      %v4723 = vadd.f32 %v4691, %v4659
      %v4724 = vadd.f32 %v4692, %v4660
      %v4725 = vadd.f32 %v4693, %v4661
      %v4726 = vadd.f32 %v4694, %v4662
      %v4727 = vadd.f32 %v4695, %v4663
      %v4728 = vadd.f32 %v4696, %v4664
      %v4729 = vadd.f32 %v4697, %v4665
      %v4730 = vadd.f32 %v4698, %v4666
      %v4731 = vadd.f32 %v4699, %v4667
      %v4732 = vadd.f32 %v4700, %v4668
      %v4733 = vadd.f32 %v4701, %v4669
      %v4734 = vadd.f32 %v4702, %v4670
      %v4735 = vadd.f32 %v4703, %v4671
      %v4736 = vadd.f32 %v4704, %v4672
      %v4737 = vadd.f32 %v4705, %v4673
      %v4738 = vadd.f32 %v4706, %v4674
      %v4739 = vadd.f32 %v4707, %v4675
      %v4740 = vadd.f32 %v4708, %v4676
      %v4741 = vadd.f32 %v4709, %v4677
      %v4742 = vadd.f32 %v4710, %v4678
      %v4743 = vadd.f32 %v4711, %v4679
      %v4744 = vadd.f32 %v4712, %v4680
      %v4745 = vadd.f32 %v4713, %v4681
      %v4746 = vadd.f32 %v4714, %v4682
      %v4747 = vadd.f32 %v4715, %v4683
      %v4748 = vadd.f32 %v4716, %v4684
      %v4749 = vadd.f32 %v4717, %v4685
      %v4750 = vmax.f32 %v4718, 0.0
      %v4751 = vmax.f32 %v4719, 0.0
      %v4752 = vmax.f32 %v4720, 0.0
      %v4753 = vmax.f32 %v4721, 0.0
      %v4754 = vmax.f32 %v4722, 0.0
      %v4755 = vmax.f32 %v4723, 0.0
      %v4756 = vmax.f32 %v4724, 0.0
      %v4757 = vmax.f32 %v4725, 0.0
      %v4758 = vmax.f32 %v4726, 0.0
      %v4759 = vmax.f32 %v4727, 0.0
      %v4760 = vmax.f32 %v4728, 0.0
      %v4761 = vmax.f32 %v4729, 0.0
      %v4762 = vmax.f32 %v4730, 0.0
      %v4763 = vmax.f32 %v4731, 0.0
      %v4764 = vmax.f32 %v4732, 0.0
      %v4765 = vmax.f32 %v4733, 0.0
      %v4766 = vmax.f32 %v4734, 0.0
      %v4767 = vmax.f32 %v4735, 0.0
      %v4768 = vmax.f32 %v4736, 0.0
      %v4769 = vmax.f32 %v4737, 0.0
      %v4770 = vmax.f32 %v4738, 0.0
      %v4771 = vmax.f32 %v4739, 0.0
      %v4772 = vmax.f32 %v4740, 0.0
      %v4773 = vmax.f32 %v4741, 0.0
      %v4774 = vmax.f32 %v4742, 0.0
      %v4775 = vmax.f32 %v4743, 0.0
      %v4776 = vmax.f32 %v4744, 0.0
      %v4777 = vmax.f32 %v4745, 0.0
      %v4778 = vmax.f32 %v4746, 0.0
      %v4779 = vmax.f32 %v4747, 0.0
      %v4780 = vmax.f32 %v4748, 0.0
      %v4781 = vmax.f32 %v4749, 0.0
      %4782 = vst.msk [vmem:[%s170] sm:$0xff] %vm204, %v4750
      %4783 = vst.msk [vmem:[%s170 + $0x8] sm:$0xff] %vm204, %v4751
      %4784 = vst.msk [vmem:[%s170 + $0x10] sm:$0xff] %vm204, %v4752
      %4785 = vst.msk [vmem:[%s170 + $0x18] sm:$0xff] %vm204, %v4753
      %4786 = vst.msk [vmem:[%s170 + $0x20] sm:$0xff] %vm204, %v4754
      %4787 = vst.msk [vmem:[%s170 + $0x28] sm:$0xff] %vm204, %v4755
      %4788 = vst.msk [vmem:[%s170 + $0x30] sm:$0xff] %vm204, %v4756
      %4789 = vst.msk [vmem:[%s170 + $0x38] sm:$0xff] %vm204, %v4757
      %4790 = vst.msk [vmem:[%s170 + $0x40] sm:$0xff] %vm204, %v4758
      %4791 = vst.msk [vmem:[%s170 + $0x48] sm:$0xff] %vm204, %v4759
      %4792 = vst.msk [vmem:[%s170 + $0x50] sm:$0xff] %vm204, %v4760
      %4793 = vst.msk [vmem:[%s170 + $0x58] sm:$0xff] %vm204, %v4761
      %4794 = vst.msk [vmem:[%s170 + $0x60] sm:$0xff] %vm204, %v4762
      %4795 = vst.msk [vmem:[%s170 + $0x68] sm:$0xff] %vm204, %v4763
      %4796 = vst.msk [vmem:[%s170 + $0x70] sm:$0xff] %vm204, %v4764
      %4797 = vst.msk [vmem:[%s170 + $0x78] sm:$0xff] %vm204, %v4765
      %4798 = vst.msk [vmem:[%s170 + $0x80] sm:$0xff] %vm204, %v4766
      %4799 = vst.msk [vmem:[%s170 + $0x88] sm:$0xff] %vm204, %v4767
      %4800 = vst.msk [vmem:[%s170 + $0x90] sm:$0xff] %vm204, %v4768
      %4801 = vst.msk [vmem:[%s170 + $0x98] sm:$0xff] %vm204, %v4769
      %4802 = vst.msk [vmem:[%s170 + $0xa0] sm:$0xff] %vm204, %v4770
      %4803 = vst.msk [vmem:[%s170 + $0xa8] sm:$0xff] %vm204, %v4771
      %4804 = vst.msk [vmem:[%s170 + $0xb0] sm:$0xff] %vm204, %v4772
      %4805 = vst.msk [vmem:[%s170 + $0xb8] sm:$0xff] %vm204, %v4773
      %4806 = vst.msk [vmem:[%s170 + $0xc0] sm:$0xff] %vm204, %v4774
      %4807 = vst.msk [vmem:[%s170 + $0xc8] sm:$0xff] %vm204, %v4775
      %4808 = vst.msk [vmem:[%s170 + $0xd0] sm:$0xff] %vm204, %v4776
      %4809 = vst.msk [vmem:[%s170 + $0xd8] sm:$0xff] %vm204, %v4777
      %4810 = vst.msk [vmem:[%s170 + $0xe0] sm:$0xff] %vm204, %v4778
      %4811 = vst.msk [vmem:[%s170 + $0xe8] sm:$0xff] %vm204, %v4779
      %4812 = vst.msk [vmem:[%s170 + $0xf0] sm:$0xff] %vm204, %v4780
      %4813 = vst.msk [vmem:[%s170 + $0xf8] sm:$0xff] %vm204, %v4781
      %p4814 = scmp.lt.s32.totalorder %s14, 1
      %s4815 = scalar_select %p4814, %s14, 1
      %s4816 = smul.addr %s4815, 32
      %s4817 = smul.addr %s4816, 8
      %s4818 = scalar_lea.vmem %s3, %s4817
      // Predicated region
      $region33: #{tpu_custom_call.1} parent=31 // pred_check
        %p4819 = pneg %p100
      $region34: #{tpu_custom_call.1} parent=31 // pred_check_branch
        %4821 = sbr.rel (%p4819) target = $region36
      $region35: #{tpu_custom_call.1} parent=31 // pred_region
        _
      $region36: #{tpu_custom_call.1} parent=31 // pred_fallthru
        _
    $region32: #{tpu_custom_call.1} parent=5 // pred_fallthru
      _
    %p4822 = scmp.le.s32.totalorder 2, %s9
    // Predicated region
    $region37: #{tpu_custom_call.1} parent=5 // pred_check
      %p4823 = pneg %p4822
    $region38: #{tpu_custom_call.1} parent=5 // pred_check_branch
      %4825 = sbr.rel (%p4823) target = $region40
    $region39: #{tpu_custom_call.1} parent=5 // pred_region
      %s4826 = ssub.s32 %s9, 2
      // Predicated region
      $region41: #{tpu_custom_call.1} parent=39 // pred_check
        %p4827 = pneg %p106
      $region42: #{tpu_custom_call.1} parent=39 // pred_check_branch
        %4829 = sbr.rel (%p4827) target = $region44
      $region43: #{tpu_custom_call.1} parent=39 // pred_region
        %p4830 = scmp.lt.s32.totalorder %s15, 1
        %s4831 = scalar_select %p4830, %s15, 1
        %s4832 = smul.addr %s4831, 32
        %s4833 = smul.addr %s4832, 8
        %s4834 = scalar_lea.vmem %s3, %s4833
      $region44: #{tpu_custom_call.1} parent=39 // pred_fallthru
        _
    $region40: #{tpu_custom_call.1} parent=5 // pred_fallthru
      _
  $region6: #{tpu_custom_call.1} parent=0 // loop_footer
    %s13 = sadd.s32 1, %s9
  $region7: #{tpu_custom_call.1} parent=0 // loop_footer_branch
    %8 = sbr.rel target = $region3
  $region8: #{tpu_custom_call.1} parent=0 // loop_exit
    _

</llo_original>
